<compile_context>
chip_gen: v6e
topology: v6e:2x2x1
jax: 0.10.0
libtpu: 0.0.40
codegen_flags: <defaults>
</compile_context>

<pallas_src>
from functools import partial

import jax
import jax.numpy as jnp
from jax import lax
from jax.experimental import pallas as pl
from jax.experimental.pallas import tpu as pltpu


def _conv3x3_band_kernel(x_ref, top_ref, bot_ref, w_ref, o_ref, acc_ref, *,
                         TH, W, Cin, Cout):
    """3x3 'same' conv of one TH-row band of one image (NHWC, channels on lanes)."""
    i = pl.program_id(1)
    n_bands = pl.num_programs(1)
    dt = x_ref.dtype

    # (TH, W, Cin) -> (TH*W, Cin); layout-preserving because W % 8 == 0.
    x_main = x_ref[0, :, :, :].reshape(TH * W, Cin)

    # Single-row halos just above / below the band.  The index_map clamps at the image
    # border, so mask them to zero there: that IS the conv's zero padding along H.
    top = jnp.where(i > 0, top_ref[0, 0, :, :], jnp.zeros((W, Cin), dt))
    bot = jnp.where(i < n_bands - 1, bot_ref[0, 0, :, :], jnp.zeros((W, Cin), dt))

    # Row-haloed band, flattened, with 8 zero rows on each end so the +/-1 column shifts
    # below never run out of range.  All pieces are 8-row aligned -> cheap concat.
    zpad = jnp.zeros((8, Cin), dt)
    xh = jnp.concatenate([zpad, top, x_main, bot, zpad], axis=0)

    HW2 = (TH + 2) * W
    # Column index of every row of the (TH+2, W) haloed band (zero padding along W).
    wcol = lax.broadcasted_iota(jnp.int32, (TH + 2, W, 1), 1).reshape(HW2, 1)

    zero = jnp.zeros((), dt)
    # dx-shifted views of the haloed band: shifting by one column == shifting by one row of
    # the flattened slab; border columns are zeroed (conv zero padding along W).
    base = (
        jnp.where(wcol > 0, xh[7:7 + HW2], zero),      # x[h, w-1]
        xh[8:8 + HW2],                                 # x[h, w  ]
        jnp.where(wcol < W - 1, xh[9:9 + HW2], zero),  # x[h, w+1]
    )

    # 9 taps == 9 (TH*W, Cin) x (Cin, Cout) MXU matmuls, f32 accumulation in VMEM scratch.
    first = True
    for dy in range(3):
        for dx in range(3):
            slab = base[dx][dy * W:(dy + TH) * W]      # aligned row slice, no copy
            contrib = jnp.dot(slab, w_ref[dy, dx],
                              preferred_element_type=jnp.float32)
            if first:
                acc_ref[...] = contrib
                first = False
            else:
                acc_ref[...] += contrib

    # TODO(synk): interleaving the 2x2 PixelUnshuffle inside the kernel (for a 4*Cout-wide
    # lane-dense store) needs a sublane de-interleave; it is left to the single fused
    # transpose in the wrapper instead.
    o_ref[0] = acc_ref[...].reshape(TH, W, Cout).astype(o_ref.dtype)


def _vmem_capacity_bytes():
    try:
        return int(pltpu.get_tpu_info().vmem_capacity_bytes)
    except Exception:
        return 64 * 1024 * 1024  # v7x per-core VMEM: most conservative assumption


def _round_lanes(c):
    return ((c + 127) // 128) * 128


def _pick_band_rows(H, W, Cin, Cout, in_itemsize, out_itemsize, budget_bytes):
    """Largest TH (multiple of 8, dividing H) whose working set fits the VMEM budget."""
    cin_b = _round_lanes(Cin) * in_itemsize
    cout_b = _round_lanes(Cout) * out_itemsize
    acc_b = _round_lanes(Cout) * 4
    best = 8
    th = 8
    while th <= H:
        if H % th == 0:
            need = (2 * th * W * cin_b            # main input band, double buffered
                    + 4 * W * cin_b               # two 1-row halo blocks, double buffered
                    + 2 * th * W * cout_b         # output band, double buffered
                    + 4 * (th + 2) * W * cin_b    # haloed slab + shifted/masked copies
                    + th * W * acc_b)             # f32 accumulator scratch
            if need <= budget_bytes:
                best = th
        th += 8
    return best


def downsample(x_nchw, w_oihw, *, compute_dtype=None, block_rows=None):
    """Conv2d(Cin -> Cin//2, 3x3, s=1, p=1, no bias) + PixelUnshuffle(2); NCHW in/out."""
    B, Cin, H, W = x_nchw.shape
    Cout, Cin_w, KH, KW = w_oihw.shape
    assert (Cin_w, KH, KW) == (Cin, 3, 3)
    assert H % 8 == 0 and W % 8 == 0, "kernel assumes H and W are multiples of 8"

    out_dtype = x_nchw.dtype
    if compute_dtype is not None:            # bf16 on v6e/v7x halves HBM traffic
        x_nchw = x_nchw.astype(compute_dtype)
        w_oihw = w_oihw.astype(compute_dtype)

    x_nhwc = jnp.transpose(x_nchw, (0, 2, 3, 1))   # channels -> lanes
    w_hwio = jnp.transpose(w_oihw, (2, 3, 1, 0))   # (3, 3, Cin, Cout)

    cap = _vmem_capacity_bytes()
    if block_rows is None:
        block_rows = _pick_band_rows(H, W, Cin, Cout,
                                     jnp.dtype(x_nhwc.dtype).itemsize,
                                     jnp.dtype(out_dtype).itemsize,
                                     budget_bytes=cap // 5)
    TH = block_rows
    assert H % TH == 0 and TH % 8 == 0
    n_bands = H // TH

    y = pl.pallas_call(
        partial(_conv3x3_band_kernel, TH=TH, W=W, Cin=Cin, Cout=Cout),
        out_shape=jax.ShapeDtypeStruct((B, H, W, Cout), out_dtype),
        grid=(B, n_bands),
        in_specs=[
            # TH-row band of the image.
            pl.BlockSpec((1, TH, W, Cin), lambda b, i: (b, i, 0, 0)),
            # Single image row just above the band (clamped at the top border).
            pl.BlockSpec((1, 1, W, Cin),
                         lambda b, i: (b, jnp.maximum(i * TH - 1, 0), 0, 0)),
            # Single image row just below the band (clamped at the bottom border).
            pl.BlockSpec((1, 1, W, Cin),
                         lambda b, i: (b, jnp.minimum((i + 1) * TH, H - 1), 0, 0)),
            # Full 3x3 weight stack, resident in VMEM (index map constant -> fetched once).
            pl.BlockSpec((3, 3, Cin, Cout), lambda b, i: (0, 0, 0, 0)),
        ],
        out_specs=pl.BlockSpec((1, TH, W, Cout), lambda b, i: (b, i, 0, 0)),
        scratch_shapes=[pltpu.VMEM((TH * W, Cout), jnp.float32)],
        compiler_params=pltpu.CompilerParams(
            dimension_semantics=("parallel", "parallel"),  # shards grid over v7x's 2 cores
            vmem_limit_bytes=min(cap // 2, 64 * 1024 * 1024)),
    )(x_nhwc, x_nhwc, x_nhwc, w_hwio)

    # PixelUnshuffle(2) + NHWC -> NCHW as a single transpose pass:
    #   out[b, c*4 + di*2 + dj, h2, w2] = y[b, 2*h2 + di, 2*w2 + dj, c]
    y = y.reshape(B, H // 2, 2, W // 2, 2, Cout)
    y = jnp.transpose(y, (0, 5, 2, 4, 1, 3))
    return y.reshape(B, 4 * Cout, H // 2, W // 2)


def _pixel_unshuffle_nchw(x, r=2):
    B, C, H, W = x.shape
    x = x.reshape(B, C, H // r, r, W // r, r)
    x = x.transpose(0, 1, 3, 5, 2, 4)
    return x.reshape(B, C * r * r, H // r, W // r)


if __name__ == "__main__":
    key = jax.random.PRNGKey(0)
    B, n_feat, H, W = 2, 4, 16, 16
    kx, kw = jax.random.split(key)

    x = jax.random.normal(kx, (B, n_feat, H, W), dtype=jnp.float32)
    # Deterministic synthetic Conv2d weight: (out_ch=n_feat//2, in_ch=n_feat, 3, 3), no bias.
    w = 0.1 * jax.random.normal(kw, (n_feat // 2, n_feat, 3, 3), dtype=jnp.float32)

    # Reference: XLA conv + the same unshuffle.
    ref = lax.conv_general_dilated(
        x, w, window_strides=(1, 1), padding=((1, 1), (1, 1)),
        dimension_numbers=("NCHW", "OIHW", "NCHW"))
    ref = _pixel_unshuffle_nchw(ref, r=2)

    # f32 path, auto-picked band size (single band at this toy size).
    out = jax.block_until_ready(downsample(x, w))
    assert out.shape == (B, 2 * n_feat, H // 2, W // 2), out.shape
    assert jnp.allclose(out, ref, atol=1e-4, rtol=1e-4), float(jnp.max(jnp.abs(out - ref)))

    # Forced 8-row bands: exercises the halo / multi-band path (grid = (B, 2)).
    out_tiled = jax.block_until_ready(downsample(x, w, block_rows=8))
    assert jnp.allclose(out_tiled, ref, atol=1e-4, rtol=1e-4), \
        float(jnp.max(jnp.abs(out_tiled - ref)))

    # bf16 compute path (v6e/v7x): halves HBM bytes, keeps f32 accumulation.
    out_bf16 = jax.block_until_ready(downsample(x, w, compute_dtype=jnp.bfloat16))
    assert out_bf16.shape == ref.shape
    assert jnp.allclose(out_bf16, ref, atol=1e-1, rtol=1e-1), \
        float(jnp.max(jnp.abs(out_bf16 - ref)))

    print("KERNEL_OK")
</pallas_src>

<mosaic_0001>
module attributes {stable_mosaic.version = 11 : i64} {
  func.func @_conv3x3_band_kernel(%arg0: i32, %arg1: i32, %arg2: memref<1x16x16x4xf32, #tpu.memory_space<vmem>>, %arg3: memref<1x1x16x4xf32, #tpu.memory_space<vmem>>, %arg4: memref<1x1x16x4xf32, #tpu.memory_space<vmem>>, %arg5: memref<3x3x4x2xf32, #tpu.memory_space<vmem>>, %arg6: memref<1x16x16x2xf32, #tpu.memory_space<vmem>>, %arg7: memref<256x2xf32, #tpu.memory_space<vmem>>) attributes {dimension_semantics = [#tpu.dimension_semantics<parallel>, #tpu.dimension_semantics<parallel>], iteration_bounds = array<i64: 2, 1>, scalar_prefetch = 0 : i64, scratch_operands = 1 : i64, tpu.core_type = #tpu.core_type<tc>, window_params = [{transform_indices = @transform_0, window_bounds = array<i64: 1, 16, 16, 4>}, {transform_indices = @transform_1, window_bounds = array<i64: 1, 1, 16, 4>}, {transform_indices = @transform_2, window_bounds = array<i64: 1, 1, 16, 4>}, {pipeline_mode = #tpu.pipeline_mode<synchronous>, transform_indices = @transform_3, window_bounds = array<i64: 3, 3, 4, 2>}, {transform_indices = @transform_4, window_bounds = array<i64: 1, 16, 16, 2>}]} {
    %c0 = arith.constant 0 : index
    %c0_0 = arith.constant 0 : index
    %c0_1 = arith.constant 0 : index
    %c0_2 = arith.constant 0 : index
    %0 = vector.load %arg2[%c0, %c0_0, %c0_1, %c0_2] : memref<1x16x16x4xf32, #tpu.memory_space<vmem>>, vector<1x16x16x4xf32>
    %1 = vector.shape_cast %0 : vector<1x16x16x4xf32> to vector<16x16x4xf32>
    %2 = vector.shape_cast %1 : vector<16x16x4xf32> to vector<256x4xf32>
    %c0_i32 = arith.constant 0 : i32
    %3 = arith.cmpi sgt, %arg1, %c0_i32 : i32
    %c0_3 = arith.constant 0 : index
    %c0_4 = arith.constant 0 : index
    %c0_5 = arith.constant 0 : index
    %c0_6 = arith.constant 0 : index
    %4 = vector.load %arg3[%c0_3, %c0_4, %c0_5, %c0_6] : memref<1x1x16x4xf32, #tpu.memory_space<vmem>>, vector<1x1x16x4xf32>
    %5 = vector.shape_cast %4 : vector<1x1x16x4xf32> to vector<16x4xf32>
    %cst = arith.constant 0.000000e+00 : f32
    %6 = vector.broadcast %cst : f32 to vector<16x4xf32>
    %7 = arith.select %3, %5, %6 : vector<16x4xf32>
    %c0_i32_7 = arith.constant 0 : i32
    %8 = arith.cmpi slt, %arg1, %c0_i32_7 : i32
    %c0_8 = arith.constant 0 : index
    %c0_9 = arith.constant 0 : index
    %c0_10 = arith.constant 0 : index
    %c0_11 = arith.constant 0 : index
    %9 = vector.load %arg4[%c0_8, %c0_9, %c0_10, %c0_11] : memref<1x1x16x4xf32, #tpu.memory_space<vmem>>, vector<1x1x16x4xf32>
    %10 = vector.shape_cast %9 : vector<1x1x16x4xf32> to vector<16x4xf32>
    %cst_12 = arith.constant 0.000000e+00 : f32
    %11 = vector.broadcast %cst_12 : f32 to vector<16x4xf32>
    %12 = arith.select %8, %10, %11 : vector<16x4xf32>
    %cst_13 = arith.constant 0.000000e+00 : f32
    %13 = vector.broadcast %cst_13 : f32 to vector<8x4xf32>
    %14 = tpu.concatenate %13, %7, %2, %12, %13 in 0 : vector<8x4xf32>, vector<16x4xf32>, vector<256x4xf32>, vector<16x4xf32>, vector<8x4xf32> -> vector<304x4xf32>
    %15 = tpu.iota {dimensions = array<i32: 1>} : vector<18x16x1xi32>
    %16 = vector.shape_cast %15 : vector<18x16x1xi32> to vector<288x1xi32>
    %c0_i32_14 = arith.constant 0 : i32
    %17 = vector.broadcast %c0_i32_14 : i32 to vector<288x1xi32>
    %18 = arith.cmpi sgt, %16, %17 : vector<288x1xi32>
    %19 = vector.extract_strided_slice %14 {offsets = [7, 0], sizes = [288, 4], strides = [1, 1]} : vector<304x4xf32> to vector<288x4xf32>
    %cst_15 = arith.constant 0.000000e+00 : f32
    %20 = vector.shape_cast %18 : vector<288x1xi1> to vector<288x1xi1>
    %21 = vector.broadcast %20 : vector<288x1xi1> to vector<288x4xi1>
    %22 = vector.broadcast %cst_15 : f32 to vector<288x4xf32>
    %23 = arith.select %21, %19, %22 : vector<288x4xi1>, vector<288x4xf32>
    %24 = vector.extract_strided_slice %14 {offsets = [8, 0], sizes = [288, 4], strides = [1, 1]} : vector<304x4xf32> to vector<288x4xf32>
    %c15_i32 = arith.constant 15 : i32
    %25 = vector.broadcast %c15_i32 : i32 to vector<288x1xi32>
    %26 = arith.cmpi slt, %16, %25 : vector<288x1xi32>
    %27 = vector.extract_strided_slice %14 {offsets = [9, 0], sizes = [288, 4], strides = [1, 1]} : vector<304x4xf32> to vector<288x4xf32>
    %cst_16 = arith.constant 0.000000e+00 : f32
    %28 = vector.shape_cast %26 : vector<288x1xi1> to vector<288x1xi1>
    %29 = vector.broadcast %28 : vector<288x1xi1> to vector<288x4xi1>
    %30 = vector.broadcast %cst_16 : f32 to vector<288x4xf32>
    %31 = arith.select %29, %27, %30 : vector<288x4xi1>, vector<288x4xf32>
    %32 = vector.extract_strided_slice %23 {offsets = [0, 0], sizes = [256, 4], strides = [1, 1]} : vector<288x4xf32> to vector<256x4xf32>
    %c0_17 = arith.constant 0 : index
    %c0_18 = arith.constant 0 : index
    %c0_19 = arith.constant 0 : index
    %c0_20 = arith.constant 0 : index
    %33 = vector.load %arg5[%c0_17, %c0_18, %c0_19, %c0_20] : memref<3x3x4x2xf32, #tpu.memory_space<vmem>>, vector<1x1x4x2xf32>
    %34 = vector.shape_cast %33 : vector<1x1x4x2xf32> to vector<4x2xf32>
    %cst_21 = arith.constant dense<0.000000e+00> : vector<256x2xf32>
    %35 = tpu.matmul %32, %34, %cst_21 {dimension_numbers = #tpu.dot_dimension_numbers<[1], [0], [0], [1], [0, 0, 1, 1], [], []>} : vector<256x4xf32>, vector<4x2xf32>, vector<256x2xf32> -> vector<256x2xf32>
    %c0_22 = arith.constant 0 : index
    %c0_23 = arith.constant 0 : index
    %36 = vector.load %arg7[%c0_22, %c0_23] : memref<256x2xf32, #tpu.memory_space<vmem>>, vector<256x2xf32>
    tpu.vector_store %arg7[%c0_22, %c0_23], %35 {strides = array<i32>} : memref<256x2xf32, #tpu.memory_space<vmem>>, vector<256x2xf32>,
    %37 = vector.extract_strided_slice %24 {offsets = [0, 0], sizes = [256, 4], strides = [1, 1]} : vector<288x4xf32> to vector<256x4xf32>
    %c0_24 = arith.constant 0 : index
    %c1 = arith.constant 1 : index
    %c0_25 = arith.constant 0 : index
    %c0_26 = arith.constant 0 : index
    %38 = vector.load %arg5[%c0_24, %c1, %c0_25, %c0_26] : memref<3x3x4x2xf32, #tpu.memory_space<vmem>>, vector<1x1x4x2xf32>
    %39 = vector.shape_cast %38 : vector<1x1x4x2xf32> to vector<4x2xf32>
    %cst_27 = arith.constant dense<0.000000e+00> : vector<256x2xf32>
    %40 = tpu.matmul %37, %39, %cst_27 {dimension_numbers = #tpu.dot_dimension_numbers<[1], [0], [0], [1], [0, 0, 1, 1], [], []>} : vector<256x4xf32>, vector<4x2xf32>, vector<256x2xf32> -> vector<256x2xf32>
    %c0_28 = arith.constant 0 : index
    %c0_29 = arith.constant 0 : index
    %41 = vector.load %arg7[%c0_28, %c0_29] : memref<256x2xf32, #tpu.memory_space<vmem>>, vector<256x2xf32>
    %42 = arith.addf %41, %40 : vector<256x2xf32>
    %c0_30 = arith.constant 0 : index
    %c0_31 = arith.constant 0 : index
    %43 = vector.load %arg7[%c0_30, %c0_31] : memref<256x2xf32, #tpu.memory_space<vmem>>, vector<256x2xf32>
    tpu.vector_store %arg7[%c0_30, %c0_31], %42 {strides = array<i32>} : memref<256x2xf32, #tpu.memory_space<vmem>>, vector<256x2xf32>,
    %44 = vector.extract_strided_slice %31 {offsets = [0, 0], sizes = [256, 4], strides = [1, 1]} : vector<288x4xf32> to vector<256x4xf32>
    %c0_32 = arith.constant 0 : index
    %c2 = arith.constant 2 : index
    %c0_33 = arith.constant 0 : index
    %c0_34 = arith.constant 0 : index
    %45 = vector.load %arg5[%c0_32, %c2, %c0_33, %c0_34] : memref<3x3x4x2xf32, #tpu.memory_space<vmem>>, vector<1x1x4x2xf32>
    %46 = vector.shape_cast %45 : vector<1x1x4x2xf32> to vector<4x2xf32>
    %cst_35 = arith.constant dense<0.000000e+00> : vector<256x2xf32>
    %47 = tpu.matmul %44, %46, %cst_35 {dimension_numbers = #tpu.dot_dimension_numbers<[1], [0], [0], [1], [0, 0, 1, 1], [], []>} : vector<256x4xf32>, vector<4x2xf32>, vector<256x2xf32> -> vector<256x2xf32>
    %c0_36 = arith.constant 0 : index
    %c0_37 = arith.constant 0 : index
    %48 = vector.load %arg7[%c0_36, %c0_37] : memref<256x2xf32, #tpu.memory_space<vmem>>, vector<256x2xf32>
    %49 = arith.addf %48, %47 : vector<256x2xf32>
    %c0_38 = arith.constant 0 : index
    %c0_39 = arith.constant 0 : index
    %50 = vector.load %arg7[%c0_38, %c0_39] : memref<256x2xf32, #tpu.memory_space<vmem>>, vector<256x2xf32>
    tpu.vector_store %arg7[%c0_38, %c0_39], %49 {strides = array<i32>} : memref<256x2xf32, #tpu.memory_space<vmem>>, vector<256x2xf32>,
    %51 = vector.extract_strided_slice %23 {offsets = [16, 0], sizes = [256, 4], strides = [1, 1]} : vector<288x4xf32> to vector<256x4xf32>
    %c1_40 = arith.constant 1 : index
    %c0_41 = arith.constant 0 : index
    %c0_42 = arith.constant 0 : index
    %c0_43 = arith.constant 0 : index
    %52 = vector.load %arg5[%c1_40, %c0_41, %c0_42, %c0_43] : memref<3x3x4x2xf32, #tpu.memory_space<vmem>>, vector<1x1x4x2xf32>
    %53 = vector.shape_cast %52 : vector<1x1x4x2xf32> to vector<4x2xf32>
    %cst_44 = arith.constant dense<0.000000e+00> : vector<256x2xf32>
    %54 = tpu.matmul %51, %53, %cst_44 {dimension_numbers = #tpu.dot_dimension_numbers<[1], [0], [0], [1], [0, 0, 1, 1], [], []>} : vector<256x4xf32>, vector<4x2xf32>, vector<256x2xf32> -> vector<256x2xf32>
    %c0_45 = arith.constant 0 : index
    %c0_46 = arith.constant 0 : index
    %55 = vector.load %arg7[%c0_45, %c0_46] : memref<256x2xf32, #tpu.memory_space<vmem>>, vector<256x2xf32>
    %56 = arith.addf %55, %54 : vector<256x2xf32>
    %c0_47 = arith.constant 0 : index
    %c0_48 = arith.constant 0 : index
    %57 = vector.load %arg7[%c0_47, %c0_48] : memref<256x2xf32, #tpu.memory_space<vmem>>, vector<256x2xf32>
    tpu.vector_store %arg7[%c0_47, %c0_48], %56 {strides = array<i32>} : memref<256x2xf32, #tpu.memory_space<vmem>>, vector<256x2xf32>,
    %58 = vector.extract_strided_slice %24 {offsets = [16, 0], sizes = [256, 4], strides = [1, 1]} : vector<288x4xf32> to vector<256x4xf32>
    %c1_49 = arith.constant 1 : index
    %c1_50 = arith.constant 1 : index
    %c0_51 = arith.constant 0 : index
    %c0_52 = arith.constant 0 : index
    %59 = vector.load %arg5[%c1_49, %c1_50, %c0_51, %c0_52] : memref<3x3x4x2xf32, #tpu.memory_space<vmem>>, vector<1x1x4x2xf32>
    %60 = vector.shape_cast %59 : vector<1x1x4x2xf32> to vector<4x2xf32>
    %cst_53 = arith.constant dense<0.000000e+00> : vector<256x2xf32>
    %61 = tpu.matmul %58, %60, %cst_53 {dimension_numbers = #tpu.dot_dimension_numbers<[1], [0], [0], [1], [0, 0, 1, 1], [], []>} : vector<256x4xf32>, vector<4x2xf32>, vector<256x2xf32> -> vector<256x2xf32>
    %c0_54 = arith.constant 0 : index
    %c0_55 = arith.constant 0 : index
    %62 = vector.load %arg7[%c0_54, %c0_55] : memref<256x2xf32, #tpu.memory_space<vmem>>, vector<256x2xf32>
    %63 = arith.addf %62, %61 : vector<256x2xf32>
    %c0_56 = arith.constant 0 : index
    %c0_57 = arith.constant 0 : index
    %64 = vector.load %arg7[%c0_56, %c0_57] : memref<256x2xf32, #tpu.memory_space<vmem>>, vector<256x2xf32>
    tpu.vector_store %arg7[%c0_56, %c0_57], %63 {strides = array<i32>} : memref<256x2xf32, #tpu.memory_space<vmem>>, vector<256x2xf32>,
    %65 = vector.extract_strided_slice %31 {offsets = [16, 0], sizes = [256, 4], strides = [1, 1]} : vector<288x4xf32> to vector<256x4xf32>
    %c1_58 = arith.constant 1 : index
    %c2_59 = arith.constant 2 : index
    %c0_60 = arith.constant 0 : index
    %c0_61 = arith.constant 0 : index
    %66 = vector.load %arg5[%c1_58, %c2_59, %c0_60, %c0_61] : memref<3x3x4x2xf32, #tpu.memory_space<vmem>>, vector<1x1x4x2xf32>
    %67 = vector.shape_cast %66 : vector<1x1x4x2xf32> to vector<4x2xf32>
    %cst_62 = arith.constant dense<0.000000e+00> : vector<256x2xf32>
    %68 = tpu.matmul %65, %67, %cst_62 {dimension_numbers = #tpu.dot_dimension_numbers<[1], [0], [0], [1], [0, 0, 1, 1], [], []>} : vector<256x4xf32>, vector<4x2xf32>, vector<256x2xf32> -> vector<256x2xf32>
    %c0_63 = arith.constant 0 : index
    %c0_64 = arith.constant 0 : index
    %69 = vector.load %arg7[%c0_63, %c0_64] : memref<256x2xf32, #tpu.memory_space<vmem>>, vector<256x2xf32>
    %70 = arith.addf %69, %68 : vector<256x2xf32>
    %c0_65 = arith.constant 0 : index
    %c0_66 = arith.constant 0 : index
    %71 = vector.load %arg7[%c0_65, %c0_66] : memref<256x2xf32, #tpu.memory_space<vmem>>, vector<256x2xf32>
    tpu.vector_store %arg7[%c0_65, %c0_66], %70 {strides = array<i32>} : memref<256x2xf32, #tpu.memory_space<vmem>>, vector<256x2xf32>,
    %72 = vector.extract_strided_slice %23 {offsets = [32, 0], sizes = [256, 4], strides = [1, 1]} : vector<288x4xf32> to vector<256x4xf32>
    %c2_67 = arith.constant 2 : index
    %c0_68 = arith.constant 0 : index
    %c0_69 = arith.constant 0 : index
    %c0_70 = arith.constant 0 : index
    %73 = vector.load %arg5[%c2_67, %c0_68, %c0_69, %c0_70] : memref<3x3x4x2xf32, #tpu.memory_space<vmem>>, vector<1x1x4x2xf32>
    %74 = vector.shape_cast %73 : vector<1x1x4x2xf32> to vector<4x2xf32>
    %cst_71 = arith.constant dense<0.000000e+00> : vector<256x2xf32>
    %75 = tpu.matmul %72, %74, %cst_71 {dimension_numbers = #tpu.dot_dimension_numbers<[1], [0], [0], [1], [0, 0, 1, 1], [], []>} : vector<256x4xf32>, vector<4x2xf32>, vector<256x2xf32> -> vector<256x2xf32>
    %c0_72 = arith.constant 0 : index
    %c0_73 = arith.constant 0 : index
    %76 = vector.load %arg7[%c0_72, %c0_73] : memref<256x2xf32, #tpu.memory_space<vmem>>, vector<256x2xf32>
    %77 = arith.addf %76, %75 : vector<256x2xf32>
    %c0_74 = arith.constant 0 : index
    %c0_75 = arith.constant 0 : index
    %78 = vector.load %arg7[%c0_74, %c0_75] : memref<256x2xf32, #tpu.memory_space<vmem>>, vector<256x2xf32>
    tpu.vector_store %arg7[%c0_74, %c0_75], %77 {strides = array<i32>} : memref<256x2xf32, #tpu.memory_space<vmem>>, vector<256x2xf32>,
    %79 = vector.extract_strided_slice %24 {offsets = [32, 0], sizes = [256, 4], strides = [1, 1]} : vector<288x4xf32> to vector<256x4xf32>
    %c2_76 = arith.constant 2 : index
    %c1_77 = arith.constant 1 : index
    %c0_78 = arith.constant 0 : index
    %c0_79 = arith.constant 0 : index
    %80 = vector.load %arg5[%c2_76, %c1_77, %c0_78, %c0_79] : memref<3x3x4x2xf32, #tpu.memory_space<vmem>>, vector<1x1x4x2xf32>
    %81 = vector.shape_cast %80 : vector<1x1x4x2xf32> to vector<4x2xf32>
    %cst_80 = arith.constant dense<0.000000e+00> : vector<256x2xf32>
    %82 = tpu.matmul %79, %81, %cst_80 {dimension_numbers = #tpu.dot_dimension_numbers<[1], [0], [0], [1], [0, 0, 1, 1], [], []>} : vector<256x4xf32>, vector<4x2xf32>, vector<256x2xf32> -> vector<256x2xf32>
    %c0_81 = arith.constant 0 : index
    %c0_82 = arith.constant 0 : index
    %83 = vector.load %arg7[%c0_81, %c0_82] : memref<256x2xf32, #tpu.memory_space<vmem>>, vector<256x2xf32>
    %84 = arith.addf %83, %82 : vector<256x2xf32>
    %c0_83 = arith.constant 0 : index
    %c0_84 = arith.constant 0 : index
    %85 = vector.load %arg7[%c0_83, %c0_84] : memref<256x2xf32, #tpu.memory_space<vmem>>, vector<256x2xf32>
    tpu.vector_store %arg7[%c0_83, %c0_84], %84 {strides = array<i32>} : memref<256x2xf32, #tpu.memory_space<vmem>>, vector<256x2xf32>,
    %86 = vector.extract_strided_slice %31 {offsets = [32, 0], sizes = [256, 4], strides = [1, 1]} : vector<288x4xf32> to vector<256x4xf32>
    %c2_85 = arith.constant 2 : index
    %c2_86 = arith.constant 2 : index
    %c0_87 = arith.constant 0 : index
    %c0_88 = arith.constant 0 : index
    %87 = vector.load %arg5[%c2_85, %c2_86, %c0_87, %c0_88] : memref<3x3x4x2xf32, #tpu.memory_space<vmem>>, vector<1x1x4x2xf32>
    %88 = vector.shape_cast %87 : vector<1x1x4x2xf32> to vector<4x2xf32>
    %cst_89 = arith.constant dense<0.000000e+00> : vector<256x2xf32>
    %89 = tpu.matmul %86, %88, %cst_89 {dimension_numbers = #tpu.dot_dimension_numbers<[1], [0], [0], [1], [0, 0, 1, 1], [], []>} : vector<256x4xf32>, vector<4x2xf32>, vector<256x2xf32> -> vector<256x2xf32>
    %c0_90 = arith.constant 0 : index
    %c0_91 = arith.constant 0 : index
    %90 = vector.load %arg7[%c0_90, %c0_91] : memref<256x2xf32, #tpu.memory_space<vmem>>, vector<256x2xf32>
    %91 = arith.addf %90, %89 : vector<256x2xf32>
    %c0_92 = arith.constant 0 : index
    %c0_93 = arith.constant 0 : index
    %92 = vector.load %arg7[%c0_92, %c0_93] : memref<256x2xf32, #tpu.memory_space<vmem>>, vector<256x2xf32>
    tpu.vector_store %arg7[%c0_92, %c0_93], %91 {strides = array<i32>} : memref<256x2xf32, #tpu.memory_space<vmem>>, vector<256x2xf32>,
    %c0_94 = arith.constant 0 : index
    %c0_95 = arith.constant 0 : index
    %93 = vector.load %arg7[%c0_94, %c0_95] : memref<256x2xf32, #tpu.memory_space<vmem>>, vector<256x2xf32>
    %94 = vector.shape_cast %93 : vector<256x2xf32> to vector<16x16x2xf32>
    %c0_96 = arith.constant 0 : index
    %c0_97 = arith.constant 0 : index
    %c0_98 = arith.constant 0 : index
    %c0_99 = arith.constant 0 : index
    %95 = vector.load %arg6[%c0_96, %c0_97, %c0_98, %c0_99] : memref<1x16x16x2xf32, #tpu.memory_space<vmem>>, vector<1x16x16x2xf32>
    %96 = vector.shape_cast %95 : vector<1x16x16x2xf32> to vector<16x16x2xf32>
    %97 = vector.shape_cast %94 : vector<16x16x2xf32> to vector<1x16x16x2xf32>
    tpu.vector_store %arg6[%c0_96, %c0_97, %c0_98, %c0_99], %97 {strides = array<i32>} : memref<1x16x16x2xf32, #tpu.memory_space<vmem>>, vector<1x16x16x2xf32>,
    return
  }
  func.func @transform_0(%arg0: i32, %arg1: i32) -> (i32, i32, i32, i32) {
    %c0_i32 = arith.constant 0 : i32
    %c0_i32_0 = arith.constant 0 : i32
    %c0_i32_1 = arith.constant 0 : i32
    return %arg0, %arg1, %c0_i32, %c0_i32_0 : i32, i32, i32, i32
  }
  func.func @transform_1(%arg0: i32, %arg1: i32) -> (i32, i32, i32, i32) {
    %c16_i32 = arith.constant 16 : i32
    %0 = arith.muli %arg1, %c16_i32 : i32
    %c1_i32 = arith.constant 1 : i32
    %1 = arith.subi %0, %c1_i32 : i32
    %c0_i32 = arith.constant 0 : i32
    %2 = arith.maxsi %1, %c0_i32 : i32
    %c0_i32_0 = arith.constant 0 : i32
    %c0_i32_1 = arith.constant 0 : i32
    %c0_i32_2 = arith.constant 0 : i32
    return %arg0, %2, %c0_i32_0, %c0_i32_1 : i32, i32, i32, i32
  }
  func.func @transform_2(%arg0: i32, %arg1: i32) -> (i32, i32, i32, i32) {
    %c1_i32 = arith.constant 1 : i32
    %0 = arith.addi %arg1, %c1_i32 : i32
    %c16_i32 = arith.constant 16 : i32
    %1 = arith.muli %0, %c16_i32 : i32
    %c15_i32 = arith.constant 15 : i32
    %2 = arith.minsi %1, %c15_i32 : i32
    %c0_i32 = arith.constant 0 : i32
    %c0_i32_0 = arith.constant 0 : i32
    %c0_i32_1 = arith.constant 0 : i32
    return %arg0, %2, %c0_i32, %c0_i32_0 : i32, i32, i32, i32
  }
  func.func @transform_3(%arg0: i32, %arg1: i32) -> (i32, i32, i32, i32) {
    %c0_i32 = arith.constant 0 : i32
    %c0_i32_0 = arith.constant 0 : i32
    %c0_i32_1 = arith.constant 0 : i32
    %c0_i32_2 = arith.constant 0 : i32
    %c0_i32_3 = arith.constant 0 : i32
    return %c0_i32, %c0_i32_0, %c0_i32_1, %c0_i32_2 : i32, i32, i32, i32
  }
  func.func @transform_4(%arg0: i32, %arg1: i32) -> (i32, i32, i32, i32) {
    %c0_i32 = arith.constant 0 : i32
    %c0_i32_0 = arith.constant 0 : i32
    %c0_i32_1 = arith.constant 0 : i32
    return %arg0, %arg1, %c0_i32, %c0_i32_0 : i32, i32, i32, i32
  }
}

</mosaic_0001>

<llo_original>
// kernel: tpu_custom_call.1
$region0: #{tpu_custom_call.1}
  #allocation0 [shape = 'u32[]', space=smem, size = 0x4, offset = 0x4, fixed_abs, tag = 'smem constant byte address 0x4 - core index']
  #allocation1 [shape = 'u32[144,128]{1,0:T(1,128)}', space=vmem, size = 0x12000, scoped, tag = 'internal scratch']
  #allocation2 [shape = 'f32[256,2]{1,0:T(8,128)}', space=vmem, size = 0x20000, scoped, tag = 'scratch operand']
  %s0 = inlined_call_operand.vmem [shape: f32[2,16,16,4], index: 0, kind: input, shape index: {}]
  %s1 = inlined_call_operand.vmem [shape: f32[2,16,16,4], index: 1, kind: input, shape index: {}]
  %s2 = inlined_call_operand.vmem [shape: f32[2,16,16,4], index: 2, kind: input, shape index: {}]
  %s3 = inlined_call_operand.vmem [shape: f32[3,3,4,2], index: 3, kind: input, shape index: {}]
  %s4 = inlined_call_operand.vmem [shape: f32[2,16,16,2], index: 4, kind: output, shape index: {}]
  %s5 = sld [smem:[#allocation0]]
  $region49: #{tpu_custom_call.1} parent=0
    _
  %s7 = ssub.s32 1, %s5
  %s8 = scalar_select 0, %s7, %s5
  loop: start=0, step=1, limit=4
  $region2: #{tpu_custom_call.1} parent=0 // loop_pre_header
    _
  $region3: #{tpu_custom_call.1} parent=0 // loop_header
    %s10 = sphi 0, %s14
    %p11 = scmp.ge.s32.totalorder %s10, 4
    %s17 = sphi 0, %s29
    %s18 = sphi 0, %s25
    %s19 = sphi 0, %s17
    %s20 = sphi 0, %s18
    %s21 = sphi 0, %s19
    %s22 = sphi 0, %s20
    %s34 = sphi 0, %s36
    %s37 = sphi 0, %s34
    %s38 = sphi 0, %s37
    %s54 = sphi 0, %s38
    %s70 = sphi 0, %s72
    %s73 = sphi 0, %s70
    %s74 = sphi 0, %s73
    %s90 = sphi 0, %s74
    %s106 = sphi 0, %s108
    %s109 = sphi 0, %s106
    %s110 = sphi 0, %s109
    %s126 = sphi 0, %s110
    %s130 = sphi 0, %s130
    %s132 = sphi 0, %s130
    %s133 = sphi 0, %s132
    %s147 = sphi 0, %s133
    %s155 = sphi 0, %s157
    %s158 = sphi 0, %s155
    %s159 = sphi 0, %s158
    %s175 = sphi 0, %s159
  $region4: #{tpu_custom_call.1} parent=0 // loop_header_branch
    %13 = sbr.rel (%p11) target = $region8
  $region5: #{tpu_custom_call.1} parent=0 // loop_body
    %s15 = ssub.s32 %s10, 1
    %s16 = ssub.s32 %s10, 2
    %s23 = sadd.s32 1, %s18
    %p24 = scmp.ge.s32.totalorder %s23, 1
    %s25 = scalar_select %p24, 0, %s23
    %s26 = sadd.s32 1, %s17
    %s27 = scalar_select %p24, %s26, %s17
    %p28 = scmp.ge.s32.totalorder %s27, 2
    %s29 = scalar_select %p28, 0, %s27
    %s30 = ssub.s32 %s17, %s29
    %s31 = ssub.s32 %s18, %s25
    %s32 = sor.u32 %s30, %s31
    %p33 = scmp.eq.s32.totalorder %s32, 0
    %s35 = sadd.s32 %s34, 1
    %s36 = scalar_select %p33, %s34, %s35
    %p39 = pneg %p33
    %p40 = scmp.eq.s32.totalorder %s10, 1
    %p41 = por %p39, %p40
    %p42 = scmp.ne.s32.totalorder %s34, %s37
    %p43 = scmp.eq.s32.totalorder %s10, 0
    %p44 = por %p42, %p43
    %p45 = scmp.ne.s32.totalorder %s34, %s37
    %p46 = scmp.eq.s32.totalorder %s15, 1
    %p47 = por %p45, %p46
    %p48 = scmp.ne.s32.totalorder %s37, %s38
    %p49 = scmp.eq.s32.totalorder %s15, 0
    %p50 = por %p48, %p49
    %p51 = scmp.ne.s32.totalorder %s37, %s38
    %p52 = scmp.eq.s32.totalorder %s16, 1
    %p53 = por %p51, %p52
    %p55 = scmp.ne.s32.totalorder %s38, %s54
    %p56 = scmp.eq.s32.totalorder %s16, 0
    %p57 = por %p55, %p56
    %s58 = smul.u32 %s18, 16
    %s59 = ssub.s32 %s58, 1
    %p60 = scmp.gt.s32.totalorder %s59, 0
    %s61 = scalar_select %p60, %s59, 0
    %s62 = smul.u32 %s25, 16
    %s63 = ssub.s32 %s62, 1
    %p64 = scmp.gt.s32.totalorder %s63, 0
    %s65 = scalar_select %p64, %s63, 0
    %s66 = ssub.s32 %s17, %s29
    %s67 = ssub.s32 %s61, %s65
    %s68 = sor.u32 %s66, %s67
    %p69 = scmp.eq.s32.totalorder %s68, 0
    %s71 = sadd.s32 %s70, 1
    %s72 = scalar_select %p69, %s70, %s71
    %p75 = pneg %p69
    %p76 = scmp.eq.s32.totalorder %s10, 1
    %p77 = por %p75, %p76
    %p78 = scmp.ne.s32.totalorder %s70, %s73
    %p79 = scmp.eq.s32.totalorder %s10, 0
    %p80 = por %p78, %p79
    %p81 = scmp.ne.s32.totalorder %s70, %s73
    %p82 = scmp.eq.s32.totalorder %s15, 1
    %p83 = por %p81, %p82
    %p84 = scmp.ne.s32.totalorder %s73, %s74
    %p85 = scmp.eq.s32.totalorder %s15, 0
    %p86 = por %p84, %p85
    %p87 = scmp.ne.s32.totalorder %s73, %s74
    %p88 = scmp.eq.s32.totalorder %s16, 1
    %p89 = por %p87, %p88
    %p91 = scmp.ne.s32.totalorder %s74, %s90
    %p92 = scmp.eq.s32.totalorder %s16, 0
    %p93 = por %p91, %p92
    %s94 = sadd.s32 %s18, 1
    %s95 = smul.u32 %s94, 16
    %p96 = scmp.lt.s32.totalorder %s95, 15
    %s97 = scalar_select %p96, %s95, 15
    %s98 = sadd.s32 %s25, 1
    %s99 = smul.u32 %s98, 16
    %p100 = scmp.lt.s32.totalorder %s99, 15
    %s101 = scalar_select %p100, %s99, 15
    %s102 = ssub.s32 %s17, %s29
    %s103 = ssub.s32 %s97, %s101
    %s104 = sor.u32 %s102, %s103
    %p105 = scmp.eq.s32.totalorder %s104, 0
    %s107 = sadd.s32 %s106, 1
    %s108 = scalar_select %p105, %s106, %s107
    %p111 = pneg %p105
    %p112 = scmp.eq.s32.totalorder %s10, 1
    %p113 = por %p111, %p112
    %p114 = scmp.ne.s32.totalorder %s106, %s109
    %p115 = scmp.eq.s32.totalorder %s10, 0
    %p116 = por %p114, %p115
    %p117 = scmp.ne.s32.totalorder %s106, %s109
    %p118 = scmp.eq.s32.totalorder %s15, 1
    %p119 = por %p117, %p118
    %p120 = scmp.ne.s32.totalorder %s109, %s110
    %p121 = scmp.eq.s32.totalorder %s15, 0
    %p122 = por %p120, %p121
    %p123 = scmp.ne.s32.totalorder %s109, %s110
    %p124 = scmp.eq.s32.totalorder %s16, 1
    %p125 = por %p123, %p124
    %p127 = scmp.ne.s32.totalorder %s110, %s126
    %p128 = scmp.eq.s32.totalorder %s16, 0
    %p129 = por %p127, %p128
    %s131 = sadd.s32 %s130, 1
    %p134 = scmp.eq.s32.totalorder %s10, 1
    %p135 = scmp.ne.s32.totalorder %s130, %s132
    %p136 = scmp.eq.s32.totalorder %s10, 0
    %p137 = por %p135, %p136
    %p138 = scmp.ne.s32.totalorder %s130, %s132
    %p139 = scmp.eq.s32.totalorder %s15, 1
    %p140 = por %p138, %p139
    %p141 = scmp.ne.s32.totalorder %s132, %s133
    %p142 = scmp.eq.s32.totalorder %s15, 0
    %p143 = por %p141, %p142
    %p144 = scmp.ne.s32.totalorder %s132, %s133
    %p145 = scmp.eq.s32.totalorder %s16, 1
    %p146 = por %p144, %p145
    %p148 = scmp.ne.s32.totalorder %s133, %s147
    %p149 = scmp.eq.s32.totalorder %s16, 0
    %p150 = por %p148, %p149
    %s151 = ssub.s32 %s17, %s29
    %s152 = ssub.s32 %s18, %s25
    %s153 = sor.u32 %s151, %s152
    %p154 = scmp.eq.s32.totalorder %s153, 0
    %s156 = sadd.s32 %s155, 1
    %s157 = scalar_select %p154, %s155, %s156
    %p160 = pneg %p154
    %p161 = scmp.eq.s32.totalorder %s10, 1
    %p162 = por %p160, %p161
    %p163 = scmp.ne.s32.totalorder %s155, %s158
    %p164 = scmp.eq.s32.totalorder %s10, 0
    %p165 = por %p163, %p164
    %p166 = scmp.ne.s32.totalorder %s155, %s158
    %p167 = scmp.eq.s32.totalorder %s15, 1
    %p168 = por %p166, %p167
    %p169 = scmp.ne.s32.totalorder %s158, %s159
    %p170 = scmp.eq.s32.totalorder %s15, 0
    %p171 = por %p169, %p170
    %p172 = scmp.ne.s32.totalorder %s158, %s159
    %p173 = scmp.eq.s32.totalorder %s16, 1
    %p174 = por %p172, %p173
    %p176 = scmp.ne.s32.totalorder %s159, %s175
    %p177 = scmp.eq.s32.totalorder %s16, 0
    %p178 = por %p176, %p177
    %p179 = scmp.le.s32.totalorder 1, %s10
    %p180 = scmp.lt.s32.totalorder %s10, 3
    %p181 = pnand %p179, %p180
    %p182 = pneg %p181
    // Predicated region
    $region9: #{tpu_custom_call.1} parent=5 // pred_check
      _
    $region10: #{tpu_custom_call.1} parent=5 // pred_check_branch
      %184 = sbr.rel (%p181) target = $region12
    $region11: #{tpu_custom_call.1} parent=5 // pred_region
      %s185 = ssub.s32 %s10, 1
      // Predicated region
      $region13: #{tpu_custom_call.1} parent=11 // pred_check
        %p186 = pneg %p143
      $region14: #{tpu_custom_call.1} parent=11 // pred_check_branch
        %188 = sbr.rel (%p186) target = $region16
      $region15: #{tpu_custom_call.1} parent=11 // pred_region
        _
      $region16: #{tpu_custom_call.1} parent=11 // pred_fallthru
        _
    $region12: #{tpu_custom_call.1} parent=5 // pred_fallthru
      _
    %p189 = scmp.lt.s32.totalorder %s10, 2
    // Predicated region
    $region17: #{tpu_custom_call.1} parent=5 // pred_check
      %p190 = pneg %p189
    $region18: #{tpu_custom_call.1} parent=5 // pred_check_branch
      %192 = sbr.rel (%p190) target = $region20
    $region19: #{tpu_custom_call.1} parent=5 // pred_region
      // Predicated region
      $region21: #{tpu_custom_call.1} parent=19 // pred_check
        %p193 = pneg %p44
      $region22: #{tpu_custom_call.1} parent=19 // pred_check_branch
        %195 = sbr.rel (%p193) target = $region24
      $region23: #{tpu_custom_call.1} parent=19 // pred_region
        %s196 = smul.u32 16, %s18
        %p197 = scmp.lt.s32.totalorder %s17, 1
        %s198 = scalar_select %p197, %s17, 1
        %p199 = scmp.lt.s32.totalorder %s196, 15
        %s200 = scalar_select %p199, %s196, 15
        %s201 = smul.addr %s200, 2
        %s202 = smul.addr %s198, 32
        %s203 = sadd.s32 %s201, %s202
        %s204 = smul.addr %s203, 8
        %s205 = scalar_lea.vmem %s0, %s204
        %s206 = smul.u32 16, %s18
      $region24: #{tpu_custom_call.1} parent=19 // pred_fallthru
        _
      // Predicated region
      $region25: #{tpu_custom_call.1} parent=19 // pred_check
        %p207 = pneg %p80
      $region26: #{tpu_custom_call.1} parent=19 // pred_check_branch
        %209 = sbr.rel (%p207) target = $region28
      $region27: #{tpu_custom_call.1} parent=19 // pred_region
        %s210 = smul.u32 %s18, 16
        %s211 = ssub.s32 %s210, 1
        %p212 = scmp.gt.s32.totalorder %s211, 0
        %s213 = scalar_select %p212, %s211, 0
        %p214 = scmp.lt.s32.totalorder %s17, 1
        %s215 = scalar_select %p214, %s17, 1
        %p216 = scmp.lt.s32.totalorder %s213, 15
        %s217 = scalar_select %p216, %s213, 15
        %s218 = smul.addr %s217, 2
        %s219 = smul.addr %s215, 32
        %s220 = sadd.s32 %s218, %s219
        %s221 = smul.addr %s220, 8
        %s222 = scalar_lea.vmem %s1, %s221
        %s223 = smul.u32 %s18, 16
        %s224 = ssub.s32 %s223, 1
        %p225 = scmp.gt.s32.totalorder %s224, 0
        %s226 = scalar_select %p225, %s224, 0
      $region28: #{tpu_custom_call.1} parent=19 // pred_fallthru
        _
      // Predicated region
      $region29: #{tpu_custom_call.1} parent=19 // pred_check
        %p227 = pneg %p116
      $region30: #{tpu_custom_call.1} parent=19 // pred_check_branch
        %229 = sbr.rel (%p227) target = $region32
      $region31: #{tpu_custom_call.1} parent=19 // pred_region
        %s230 = sadd.s32 %s18, 1
        %s231 = smul.u32 %s230, 16
        %p232 = scmp.lt.s32.totalorder %s231, 15
        %s233 = scalar_select %p232, %s231, 15
        %p234 = scmp.lt.s32.totalorder %s17, 1
        %s235 = scalar_select %p234, %s17, 1
        %p236 = scmp.lt.s32.totalorder %s233, 15
        %s237 = scalar_select %p236, %s233, 15
        %s238 = smul.addr %s237, 2
        %s239 = smul.addr %s235, 32
        %s240 = sadd.s32 %s238, %s239
        %s241 = smul.addr %s240, 8
        %s242 = scalar_lea.vmem %s2, %s241
        %s243 = sadd.s32 %s18, 1
        %s244 = smul.u32 %s243, 16
        %p245 = scmp.lt.s32.totalorder %s244, 15
        %s246 = scalar_select %p245, %s244, 15
      $region32: #{tpu_custom_call.1} parent=19 // pred_fallthru
        _
    $region20: #{tpu_custom_call.1} parent=5 // pred_fallthru
      _
    %p247 = scmp.le.s32.totalorder 1, %s10
    %p248 = scmp.lt.s32.totalorder %s10, 3
    %p249 = pnand %p247, %p248
    %p250 = pneg %p249
    // Predicated region
    $region33: #{tpu_custom_call.1} parent=5 // pred_check
      _
    $region34: #{tpu_custom_call.1} parent=5 // pred_check_branch
      %252 = sbr.rel (%p249) target = $region36
    $region35: #{tpu_custom_call.1} parent=5 // pred_region
      %s253 = ssub.s32 %s10, 1
      %s254 = smul.u32 16, %s20
      %p255 = scmp.lt.s32.totalorder %s19, 1
      %s256 = scalar_select %p255, %s19, 1
      %p257 = scmp.lt.s32.totalorder %s254, 15
      %s258 = scalar_select %p257, %s254, 15
      %s259 = smul.addr %s258, 2
      %s260 = smul.addr %s256, 32
      %s261 = sadd.s32 %s259, %s260
      %s262 = smul.addr %s261, 8
      %s263 = scalar_lea.vmem %s0, %s262
      %p264 = pneg %p50
      %p265 = pneg %p47
      %s266 = smul.u32 %s20, 16
      %s267 = ssub.s32 %s266, 1
      %p268 = scmp.gt.s32.totalorder %s267, 0
      %s269 = scalar_select %p268, %s267, 0
      %p270 = scmp.lt.s32.totalorder %s19, 1
      %s271 = scalar_select %p270, %s19, 1
      %p272 = scmp.lt.s32.totalorder %s269, 15
      %s273 = scalar_select %p272, %s269, 15
      %s274 = smul.addr %s273, 2
      %s275 = smul.addr %s271, 32
      %s276 = sadd.s32 %s274, %s275
      %s277 = smul.addr %s276, 8
      %s278 = scalar_lea.vmem %s1, %s277
      %p279 = pneg %p86
      %p280 = pneg %p83
      %s281 = sadd.s32 %s20, 1
      %s282 = smul.u32 %s281, 16
      %p283 = scmp.lt.s32.totalorder %s282, 15
      %s284 = scalar_select %p283, %s282, 15
      %p285 = scmp.lt.s32.totalorder %s19, 1
      %s286 = scalar_select %p285, %s19, 1
      %p287 = scmp.lt.s32.totalorder %s284, 15
      %s288 = scalar_select %p287, %s284, 15
      %s289 = smul.addr %s288, 2
      %s290 = smul.addr %s286, 32
      %s291 = sadd.s32 %s289, %s290
      %s292 = smul.addr %s291, 8
      %s293 = scalar_lea.vmem %s2, %s292
      %p294 = pneg %p122
      %p295 = pneg %p119
      %p296 = pneg %p143
      %p297 = pneg %p140
      %p298 = pneg %p171
      %p299 = pneg %p168
      %s300 = smul.u32 16, %s20
      %p301 = scmp.lt.s32.totalorder %s19, 1
      %s302 = scalar_select %p301, %s19, 1
      %p303 = scmp.lt.s32.totalorder %s300, 15
      %s304 = scalar_select %p303, %s300, 15
      %s305 = smul.addr %s304, 2
      %s306 = smul.addr %s302, 32
      %s307 = sadd.s32 %s305, %s306
      %s308 = smul.addr %s307, 8
      %s309 = scalar_lea.vmem %s4, %s308
      %s310 = smul.u32 16, %s20
      %p311 = scmp.lt.s32.totalorder %s19, 1
      %s312 = scalar_select %p311, %s19, 1
      %p313 = scmp.lt.s32.totalorder %s310, 15
      %s314 = scalar_select %p313, %s310, 15
      %s315 = smul.addr %s314, 2
      %s316 = smul.addr %s312, 32
      %s317 = sadd.s32 %s315, %s316
      %s318 = smul.addr %s317, 8
      %s319 = scalar_lea.vmem %s0, %s318
      %s320 = smul.u32 16, %s20
      %s321 = smul.u32 %s20, 16
      %s322 = ssub.s32 %s321, 1
      %p323 = scmp.gt.s32.totalorder %s322, 0
      %s324 = scalar_select %p323, %s322, 0
      %p325 = scmp.lt.s32.totalorder %s19, 1
      %s326 = scalar_select %p325, %s19, 1
      %p327 = scmp.lt.s32.totalorder %s324, 15
      %s328 = scalar_select %p327, %s324, 15
      %s329 = smul.addr %s328, 2
      %s330 = smul.addr %s326, 32
      %s331 = sadd.s32 %s329, %s330
      %s332 = smul.addr %s331, 8
      %s333 = scalar_lea.vmem %s1, %s332
      %s334 = smul.u32 %s20, 16
      %s335 = ssub.s32 %s334, 1
      %p336 = scmp.gt.s32.totalorder %s335, 0
      %s337 = scalar_select %p336, %s335, 0
      %s338 = sadd.s32 %s20, 1
      %s339 = smul.u32 %s338, 16
      %p340 = scmp.lt.s32.totalorder %s339, 15
      %s341 = scalar_select %p340, %s339, 15
      %p342 = scmp.lt.s32.totalorder %s19, 1
      %s343 = scalar_select %p342, %s19, 1
      %p344 = scmp.lt.s32.totalorder %s341, 15
      %s345 = scalar_select %p344, %s341, 15
      %s346 = smul.addr %s345, 2
      %s347 = smul.addr %s343, 32
      %s348 = sadd.s32 %s346, %s347
      %s349 = smul.addr %s348, 8
      %s350 = scalar_lea.vmem %s2, %s349
      %s351 = sadd.s32 %s20, 1
      %s352 = smul.u32 %s351, 16
      %p353 = scmp.lt.s32.totalorder %s352, 15
      %s354 = scalar_select %p353, %s352, 15
      %s355 = smul.u32 16, %s20
      %p356 = scmp.lt.s32.totalorder %s19, 1
      %s357 = scalar_select %p356, %s19, 1
      %p358 = scmp.lt.s32.totalorder %s355, 15
      %s359 = scalar_select %p358, %s355, 15
      %s360 = smul.addr %s359, 2
      %s361 = smul.addr %s357, 32
      %s362 = sadd.s32 %s360, %s361
      %s363 = smul.addr %s362, 8
      %s364 = scalar_lea.vmem %s4, %s363
      %s365 = smul.u32 16, %s20
      %v366 = vld [vmem:[%s319] sm:$0xff]
      %v367 = vld [vmem:[%s319 + $0x8] sm:$0xff]
      %v368 = vld [vmem:[%s319 + $0x10] sm:$0xff]
      %v369 = vld [vmem:[%s319 + $0x18] sm:$0xff]
      %v370 = vld [vmem:[%s319 + $0x20] sm:$0xff]
      %v371 = vld [vmem:[%s319 + $0x28] sm:$0xff]
      %v372 = vld [vmem:[%s319 + $0x30] sm:$0xff]
      %v373 = vld [vmem:[%s319 + $0x38] sm:$0xff]
      %v374 = vld [vmem:[%s319 + $0x40] sm:$0xff]
      %v375 = vld [vmem:[%s319 + $0x48] sm:$0xff]
      %v376 = vld [vmem:[%s319 + $0x50] sm:$0xff]
      %v377 = vld [vmem:[%s319 + $0x58] sm:$0xff]
      %v378 = vld [vmem:[%s319 + $0x60] sm:$0xff]
      %v379 = vld [vmem:[%s319 + $0x68] sm:$0xff]
      %v380 = vld [vmem:[%s319 + $0x70] sm:$0xff]
      %v381 = vld [vmem:[%s319 + $0x78] sm:$0xff]
      %v382 = vld [vmem:[%s319 + $0x80] sm:$0xff]
      %v383 = vld [vmem:[%s319 + $0x88] sm:$0xff]
      %v384 = vld [vmem:[%s319 + $0x90] sm:$0xff]
      %v385 = vld [vmem:[%s319 + $0x98] sm:$0xff]
      %v386 = vld [vmem:[%s319 + $0xa0] sm:$0xff]
      %v387 = vld [vmem:[%s319 + $0xa8] sm:$0xff]
      %v388 = vld [vmem:[%s319 + $0xb0] sm:$0xff]
      %v389 = vld [vmem:[%s319 + $0xb8] sm:$0xff]
      %v390 = vld [vmem:[%s319 + $0xc0] sm:$0xff]
      %v391 = vld [vmem:[%s319 + $0xc8] sm:$0xff]
      %v392 = vld [vmem:[%s319 + $0xd0] sm:$0xff]
      %v393 = vld [vmem:[%s319 + $0xd8] sm:$0xff]
      %v394 = vld [vmem:[%s319 + $0xe0] sm:$0xff]
      %v395 = vld [vmem:[%s319 + $0xe8] sm:$0xff]
      %v396 = vld [vmem:[%s319 + $0xf0] sm:$0xff]
      %v397 = vld [vmem:[%s319 + $0xf8] sm:$0xff]
      %p398 = scmp.gt.s32.totalorder %s20, 0
      %v399 = vld [vmem:[%s333] sm:$0xff]
      %v400 = vld [vmem:[%s333 + $0x8] sm:$0xff]
      %s401 = scalar_select %p398, 1, 0
      %v402 = vstv %s401
      %vm403 = vcmp.eq.s32.totalorder %v402, 1
      %v404 = vsel %vm403, %v399, 0.0
      %v405 = vsel %vm403, %v400, 0.0
      %p406 = scmp.lt.s32.totalorder %s20, 0
      %v407 = vld [vmem:[%s350] sm:$0xff]
      %v408 = vld [vmem:[%s350 + $0x8] sm:$0xff]
      %s409 = scalar_select %p406, 1, 0
      %v410 = vstv %s409
      %vm411 = vcmp.eq.s32.totalorder %v410, 1
      %v412 = vsel %vm411, %v407, 0.0
      %v413 = vsel %vm411, %v408, 0.0
      %v414 = vlaneseq
      %v415 = vshrl.u32 %v414, 7
      %v416 = vadd.s32 %v415, 8
      %vm417 = vcmp.gt.s32.totalorder %v415, 0
      %vm418 = vcmp.gt.s32.totalorder %v416, 0
      %v419 = vsel %vm417, 1, 0
      %v420 = vsel %vm418, 1, 0
      %vm421 = vcmp.eq.s32.totalorder %v419, 1
      %vm422 = vcmp.eq.s32.totalorder %v420, 1
      %vm460 = vcmask 1040384
      %v461 = vrot.slane 0.0, 7
      %v462 = vrot.slane %v404, 7
      %v463 = vsel %vm460, %v461, %v462
      %v464 = vrot.slane %v405, 7
      %v465 = vsel %vm460, %v462, %v464
      %v466 = vrot.slane %v366, 7
      %v467 = vsel %vm460, %v464, %v466
      %v468 = vrot.slane %v367, 7
      %v469 = vsel %vm460, %v466, %v468
      %v470 = vrot.slane %v368, 7
      %v471 = vsel %vm460, %v468, %v470
      %v472 = vrot.slane %v369, 7
      %v473 = vsel %vm460, %v470, %v472
      %v474 = vrot.slane %v370, 7
      %v475 = vsel %vm460, %v472, %v474
      %v476 = vrot.slane %v371, 7
      %v477 = vsel %vm460, %v474, %v476
      %v478 = vrot.slane %v372, 7
      %v479 = vsel %vm460, %v476, %v478
      %v480 = vrot.slane %v373, 7
      %v481 = vsel %vm460, %v478, %v480
      %v482 = vrot.slane %v374, 7
      %v483 = vsel %vm460, %v480, %v482
      %v484 = vrot.slane %v375, 7
      %v485 = vsel %vm460, %v482, %v484
      %v486 = vrot.slane %v376, 7
      %v487 = vsel %vm460, %v484, %v486
      %v488 = vrot.slane %v377, 7
      %v489 = vsel %vm460, %v486, %v488
      %v490 = vrot.slane %v378, 7
      %v491 = vsel %vm460, %v488, %v490
      %v492 = vrot.slane %v379, 7
      %v493 = vsel %vm460, %v490, %v492
      %v494 = vrot.slane %v380, 7
      %v495 = vsel %vm460, %v492, %v494
      %v496 = vrot.slane %v381, 7
      %v497 = vsel %vm460, %v494, %v496
      %v498 = vrot.slane %v382, 7
      %v499 = vsel %vm460, %v496, %v498
      %v500 = vrot.slane %v383, 7
      %v501 = vsel %vm460, %v498, %v500
      %v502 = vrot.slane %v384, 7
      %v503 = vsel %vm460, %v500, %v502
      %v504 = vrot.slane %v385, 7
      %v505 = vsel %vm460, %v502, %v504
      %v506 = vrot.slane %v386, 7
      %v507 = vsel %vm460, %v504, %v506
      %v508 = vrot.slane %v387, 7
      %v509 = vsel %vm460, %v506, %v508
      %v510 = vrot.slane %v388, 7
      %v511 = vsel %vm460, %v508, %v510
      %v512 = vrot.slane %v389, 7
      %v513 = vsel %vm460, %v510, %v512
      %v514 = vrot.slane %v390, 7
      %v515 = vsel %vm460, %v512, %v514
      %v516 = vrot.slane %v391, 7
      %v517 = vsel %vm460, %v514, %v516
      %v518 = vrot.slane %v392, 7
      %v519 = vsel %vm460, %v516, %v518
      %v520 = vrot.slane %v393, 7
      %v521 = vsel %vm460, %v518, %v520
      %v522 = vrot.slane %v394, 7
      %v523 = vsel %vm460, %v520, %v522
      %v524 = vrot.slane %v395, 7
      %v525 = vsel %vm460, %v522, %v524
      %v526 = vrot.slane %v396, 7
      %v527 = vsel %vm460, %v524, %v526
      %v528 = vrot.slane %v397, 7
      %v529 = vsel %vm460, %v526, %v528
      %v530 = vrot.slane %v412, 7
      %v531 = vsel %vm460, %v528, %v530
      %v532 = vrot.slane %v413, 7
      %v533 = vsel %vm460, %v530, %v532
      %v570 = vsel %vm421, %v463, 0.0
      %v571 = vsel %vm422, %v465, 0.0
      %v572 = vsel %vm421, %v467, 0.0
      %v573 = vsel %vm422, %v469, 0.0
      %v574 = vsel %vm421, %v471, 0.0
      %v575 = vsel %vm422, %v473, 0.0
      %v576 = vsel %vm421, %v475, 0.0
      %v577 = vsel %vm422, %v477, 0.0
      %v578 = vsel %vm421, %v479, 0.0
      %v579 = vsel %vm422, %v481, 0.0
      %v580 = vsel %vm421, %v483, 0.0
      %v581 = vsel %vm422, %v485, 0.0
      %v582 = vsel %vm421, %v487, 0.0
      %v583 = vsel %vm422, %v489, 0.0
      %v584 = vsel %vm421, %v491, 0.0
      %v585 = vsel %vm422, %v493, 0.0
      %v586 = vsel %vm421, %v495, 0.0
      %v587 = vsel %vm422, %v497, 0.0
      %v588 = vsel %vm421, %v499, 0.0
      %v589 = vsel %vm422, %v501, 0.0
      %v590 = vsel %vm421, %v503, 0.0
      %v591 = vsel %vm422, %v505, 0.0
      %v592 = vsel %vm421, %v507, 0.0
      %v593 = vsel %vm422, %v509, 0.0
      %v594 = vsel %vm421, %v511, 0.0
      %v595 = vsel %vm422, %v513, 0.0
      %v596 = vsel %vm421, %v515, 0.0
      %v597 = vsel %vm422, %v517, 0.0
      %v598 = vsel %vm421, %v519, 0.0
      %v599 = vsel %vm422, %v521, 0.0
      %v600 = vsel %vm421, %v523, 0.0
      %v601 = vsel %vm422, %v525, 0.0
      %v602 = vsel %vm421, %v527, 0.0
      %v603 = vsel %vm422, %v529, 0.0
      %v604 = vsel %vm421, %v531, 0.0
      %v605 = vsel %vm422, %v533, 0.0
      %vm606 = vcmp.lt.s32.totalorder %v415, 15
      %vm607 = vcmp.lt.s32.totalorder %v416, 15
      %v608 = vsel %vm606, 1, 0
      %v609 = vsel %vm607, 1, 0
      %vm610 = vcmp.eq.s32.totalorder %v608, 1
      %vm611 = vcmp.eq.s32.totalorder %v609, 1
      %vm612 = vcmask 1046528
      %v613 = vrot.slane %v404, 1
      %v614 = vrot.slane %v405, 1
      %v615 = vsel %vm612, %v613, %v614
      %v616 = vrot.slane %v366, 1
      %v617 = vsel %vm612, %v614, %v616
      %v618 = vrot.slane %v367, 1
      %v619 = vsel %vm612, %v616, %v618
      %v620 = vrot.slane %v368, 1
      %v621 = vsel %vm612, %v618, %v620
      %v622 = vrot.slane %v369, 1
      %v623 = vsel %vm612, %v620, %v622
      %v624 = vrot.slane %v370, 1
      %v625 = vsel %vm612, %v622, %v624
      %v626 = vrot.slane %v371, 1
      %v627 = vsel %vm612, %v624, %v626
      %v628 = vrot.slane %v372, 1
      %v629 = vsel %vm612, %v626, %v628
      %v630 = vrot.slane %v373, 1
      %v631 = vsel %vm612, %v628, %v630
      %v632 = vrot.slane %v374, 1
      %v633 = vsel %vm612, %v630, %v632
      %v634 = vrot.slane %v375, 1
      %v635 = vsel %vm612, %v632, %v634
      %v636 = vrot.slane %v376, 1
      %v637 = vsel %vm612, %v634, %v636
      %v638 = vrot.slane %v377, 1
      %v639 = vsel %vm612, %v636, %v638
      %v640 = vrot.slane %v378, 1
      %v641 = vsel %vm612, %v638, %v640
      %v642 = vrot.slane %v379, 1
      %v643 = vsel %vm612, %v640, %v642
      %v644 = vrot.slane %v380, 1
      %v645 = vsel %vm612, %v642, %v644
      %v646 = vrot.slane %v381, 1
      %v647 = vsel %vm612, %v644, %v646
      %v648 = vrot.slane %v382, 1
      %v649 = vsel %vm612, %v646, %v648
      %v650 = vrot.slane %v383, 1
      %v651 = vsel %vm612, %v648, %v650
      %v652 = vrot.slane %v384, 1
      %v653 = vsel %vm612, %v650, %v652
      %v654 = vrot.slane %v385, 1
      %v655 = vsel %vm612, %v652, %v654
      %v656 = vrot.slane %v386, 1
      %v657 = vsel %vm612, %v654, %v656
      %v658 = vrot.slane %v387, 1
      %v659 = vsel %vm612, %v656, %v658
      %v660 = vrot.slane %v388, 1
      %v661 = vsel %vm612, %v658, %v660
      %v662 = vrot.slane %v389, 1
      %v663 = vsel %vm612, %v660, %v662
      %v664 = vrot.slane %v390, 1
      %v665 = vsel %vm612, %v662, %v664
      %v666 = vrot.slane %v391, 1
      %v667 = vsel %vm612, %v664, %v666
      %v668 = vrot.slane %v392, 1
      %v669 = vsel %vm612, %v666, %v668
      %v670 = vrot.slane %v393, 1
      %v671 = vsel %vm612, %v668, %v670
      %v672 = vrot.slane %v394, 1
      %v673 = vsel %vm612, %v670, %v672
      %v674 = vrot.slane %v395, 1
      %v675 = vsel %vm612, %v672, %v674
      %v676 = vrot.slane %v396, 1
      %v677 = vsel %vm612, %v674, %v676
      %v678 = vrot.slane %v397, 1
      %v679 = vsel %vm612, %v676, %v678
      %v680 = vrot.slane %v412, 1
      %v681 = vsel %vm612, %v678, %v680
      %v682 = vrot.slane %v413, 1
      %v683 = vsel %vm612, %v680, %v682
      %v684 = vrot.slane 0.0, 1
      %v685 = vsel %vm612, %v682, %v684
      %v722 = vsel %vm610, %v615, 0.0
      %v723 = vsel %vm611, %v617, 0.0
      %v724 = vsel %vm610, %v619, 0.0
      %v725 = vsel %vm611, %v621, 0.0
      %v726 = vsel %vm610, %v623, 0.0
      %v727 = vsel %vm611, %v625, 0.0
      %v728 = vsel %vm610, %v627, 0.0
      %v729 = vsel %vm611, %v629, 0.0
      %v730 = vsel %vm610, %v631, 0.0
      %v731 = vsel %vm611, %v633, 0.0
      %v732 = vsel %vm610, %v635, 0.0
      %v733 = vsel %vm611, %v637, 0.0
      %v734 = vsel %vm610, %v639, 0.0
      %v735 = vsel %vm611, %v641, 0.0
      %v736 = vsel %vm610, %v643, 0.0
      %v737 = vsel %vm611, %v645, 0.0
      %v738 = vsel %vm610, %v647, 0.0
      %v739 = vsel %vm611, %v649, 0.0
      %v740 = vsel %vm610, %v651, 0.0
      %v741 = vsel %vm611, %v653, 0.0
      %v742 = vsel %vm610, %v655, 0.0
      %v743 = vsel %vm611, %v657, 0.0
      %v744 = vsel %vm610, %v659, 0.0
      %v745 = vsel %vm611, %v661, 0.0
      %v746 = vsel %vm610, %v663, 0.0
      %v747 = vsel %vm611, %v665, 0.0
      %v748 = vsel %vm610, %v667, 0.0
      %v749 = vsel %vm611, %v669, 0.0
      %v750 = vsel %vm610, %v671, 0.0
      %v751 = vsel %vm611, %v673, 0.0
      %v752 = vsel %vm610, %v675, 0.0
      %v753 = vsel %vm611, %v677, 0.0
      %v754 = vsel %vm610, %v679, 0.0
      %v755 = vsel %vm611, %v681, 0.0
      %v756 = vsel %vm610, %v683, 0.0
      %v757 = vsel %vm611, %v685, 0.0
      %v758 = vld [vmem:[%s3] sm:$0xf]
      %vm759 = vcmask 31744
      %v761 = vsel %vm759, %v570, 0
      %v764 = vsel %vm759, %v571, 0
      %v767 = vsel %vm759, %v572, 0
      %v770 = vsel %vm759, %v573, 0
      %v773 = vsel %vm759, %v574, 0
      %v776 = vsel %vm759, %v575, 0
      %v779 = vsel %vm759, %v576, 0
      %v782 = vsel %vm759, %v577, 0
      %v785 = vsel %vm759, %v578, 0
      %v788 = vsel %vm759, %v579, 0
      %v791 = vsel %vm759, %v580, 0
      %v794 = vsel %vm759, %v581, 0
      %v797 = vsel %vm759, %v582, 0
      %v800 = vsel %vm759, %v583, 0
      %v803 = vsel %vm759, %v584, 0
      %v806 = vsel %vm759, %v585, 0
      %v809 = vsel %vm759, %v586, 0
      %v812 = vsel %vm759, %v587, 0
      %v815 = vsel %vm759, %v588, 0
      %v818 = vsel %vm759, %v589, 0
      %v821 = vsel %vm759, %v590, 0
      %v824 = vsel %vm759, %v591, 0
      %v827 = vsel %vm759, %v592, 0
      %v830 = vsel %vm759, %v593, 0
      %v833 = vsel %vm759, %v594, 0
      %v836 = vsel %vm759, %v595, 0
      %v839 = vsel %vm759, %v596, 0
      %v842 = vsel %vm759, %v597, 0
      %v845 = vsel %vm759, %v598, 0
      %v848 = vsel %vm759, %v599, 0
      %v851 = vsel %vm759, %v600, 0
      %v854 = vsel %vm759, %v601, 0
      %vm856 = vcmask 1043456
      %v858 = vsel %vm856, %v758, 0
      %860 = vmatprep.subr.mxu0 0.0
      %861 = vmatpush1.msra.mxu0 0.0
      %862 = vmatprep.subr.mxu0 0.0
      %863 = vmatpush1.msra.mxu0 0.0
      %864 = vmatprep.subr.mxu0 0.0
      %865 = vmatpush1.msra.mxu0 0.0
      %866 = vmatprep.subr.mxu0 0.0
      %867 = vmatpush1.msra.mxu0 0.0
      %868 = vmatprep.subr.mxu0 0.0
      %869 = vmatpush1.msra.mxu0 0.0
      %870 = vmatprep.subr.mxu0 0.0
      %871 = vmatpush1.msra.mxu0 0.0
      %872 = vmatprep.subr.mxu0 0.0
      %873 = vmatpush1.msra.mxu0 0.0
      %874 = vmatprep.subr.mxu0 0.0
      %875 = vmatpush1.msra.mxu0 0.0
      %876 = vmatprep.subr.mxu0 0.0
      %877 = vmatpush1.msra.mxu0 0.0
      %878 = vmatprep.subr.mxu0 0.0
      %879 = vmatpush1.msra.mxu0 0.0
      %880 = vmatprep.subr.mxu0 0.0
      %881 = vmatpush1.msra.mxu0 0.0
      %882 = vmatprep.subr.mxu0 0.0
      %883 = vmatpush1.msra.mxu0 0.0
      %884 = vmatprep.subr.mxu0 0.0
      %885 = vmatpush1.msra.mxu0 0.0
      %886 = vmatprep.subr.mxu0 0.0
      %887 = vmatpush1.msra.mxu0 0.0
      %888 = vmatprep.subr.mxu0 0.0
      %889 = vmatpush1.msra.mxu0 0.0
      %890 = vmatprep.subr.mxu0 0.0
      %891 = vmatpush1.msra.mxu0 %v858
      %892 = vmatprep.subr.mxu0 0.0
      %893 = vmatpush2.msra.mxu0 0.0
      %894 = vmatprep.subr.mxu0 0.0
      %895 = vmatpush2.msra.mxu0 0.0
      %896 = vmatprep.subr.mxu0 0.0
      %897 = vmatpush2.msra.mxu0 0.0
      %898 = vmatprep.subr.mxu0 0.0
      %899 = vmatpush2.msra.mxu0 0.0
      %900 = vmatprep.subr.mxu0 0.0
      %901 = vmatpush2.msra.mxu0 0.0
      %902 = vmatprep.subr.mxu0 0.0
      %903 = vmatpush2.msra.mxu0 0.0
      %904 = vmatprep.subr.mxu0 0.0
      %905 = vmatpush2.msra.mxu0 0.0
      %906 = vmatprep.subr.mxu0 0.0
      %907 = vmatpush2.msra.mxu0 0.0
      %908 = vmatprep.subr.mxu0 0.0
      %909 = vmatpush2.msra.mxu0 0.0
      %910 = vmatprep.subr.mxu0 0.0
      %911 = vmatpush2.msra.mxu0 0.0
      %912 = vmatprep.subr.mxu0 0.0
      %913 = vmatpush2.msra.mxu0 0.0
      %914 = vmatprep.subr.mxu0 0.0
      %915 = vmatpush2.msra.mxu0 0.0
      %916 = vmatprep.subr.mxu0 0.0
      %917 = vmatpush2.msra.mxu0 0.0
      %918 = vmatprep.subr.mxu0 0.0
      %919 = vmatpush2.msra.mxu0 0.0
      %920 = vmatprep.subr.mxu0 0.0
      %921 = vmatpush2.msra.mxu0 0.0
      %922 = vmatprep.subr.mxu0 0.0
      %923 = vmatpush2.msra.mxu0 0.0
      %924 = vmatprep.mubr.f32.mxu0 0.0
      %925 = vmatmul.mubr.f32.gmra.mxu0 %v761
      %v926 = vpop.f32.mrf.mxu0
      %v927 = vadd.f32 0.0, %v926
      %v928 = vpop.f32.mrf.mxu0
      %929 = vmatprep.mubr.f32.mxu0 0.0
      %930 = vmatmul.mubr.f32.gmra.mxu0 %v764
      %v931 = vpop.f32.mrf.mxu0
      %v932 = vadd.f32 0.0, %v931
      %v933 = vpop.f32.mrf.mxu0
      %934 = vmatprep.mubr.f32.mxu0 0.0
      %935 = vmatmul.mubr.f32.gmra.mxu0 %v767
      %v936 = vpop.f32.mrf.mxu0
      %v937 = vadd.f32 0.0, %v936
      %v938 = vpop.f32.mrf.mxu0
      %939 = vmatprep.mubr.f32.mxu0 0.0
      %940 = vmatmul.mubr.f32.gmra.mxu0 %v770
      %v941 = vpop.f32.mrf.mxu0
      %v942 = vadd.f32 0.0, %v941
      %v943 = vpop.f32.mrf.mxu0
      %944 = vmatprep.mubr.f32.mxu0 0.0
      %945 = vmatmul.mubr.f32.gmra.mxu0 %v773
      %v946 = vpop.f32.mrf.mxu0
      %v947 = vadd.f32 0.0, %v946
      %v948 = vpop.f32.mrf.mxu0
      %949 = vmatprep.mubr.f32.mxu0 0.0
      %950 = vmatmul.mubr.f32.gmra.mxu0 %v776
      %v951 = vpop.f32.mrf.mxu0
      %v952 = vadd.f32 0.0, %v951
      %v953 = vpop.f32.mrf.mxu0
      %954 = vmatprep.mubr.f32.mxu0 0.0
      %955 = vmatmul.mubr.f32.gmra.mxu0 %v779
      %v956 = vpop.f32.mrf.mxu0
      %v957 = vadd.f32 0.0, %v956
      %v958 = vpop.f32.mrf.mxu0
      %959 = vmatprep.mubr.f32.mxu0 0.0
      %960 = vmatmul.mubr.f32.gmra.mxu0 %v782
      %v961 = vpop.f32.mrf.mxu0
      %v962 = vadd.f32 0.0, %v961
      %v963 = vpop.f32.mrf.mxu0
      %964 = vmatprep.mubr.f32.mxu0 0.0
      %965 = vmatmul.mubr.f32.gmra.mxu0 %v785
      %v966 = vpop.f32.mrf.mxu0
      %v967 = vadd.f32 0.0, %v966
      %v968 = vpop.f32.mrf.mxu0
      %969 = vmatprep.mubr.f32.mxu0 0.0
      %970 = vmatmul.mubr.f32.gmra.mxu0 %v788
      %v971 = vpop.f32.mrf.mxu0
      %v972 = vadd.f32 0.0, %v971
      %v973 = vpop.f32.mrf.mxu0
      %974 = vmatprep.mubr.f32.mxu0 0.0
      %975 = vmatmul.mubr.f32.gmra.mxu0 %v791
      %v976 = vpop.f32.mrf.mxu0
      %v977 = vadd.f32 0.0, %v976
      %v978 = vpop.f32.mrf.mxu0
      %979 = vmatprep.mubr.f32.mxu0 0.0
      %980 = vmatmul.mubr.f32.gmra.mxu0 %v794
      %v981 = vpop.f32.mrf.mxu0
      %v982 = vadd.f32 0.0, %v981
      %v983 = vpop.f32.mrf.mxu0
      %984 = vmatprep.mubr.f32.mxu0 0.0
      %985 = vmatmul.mubr.f32.gmra.mxu0 %v797
      %v986 = vpop.f32.mrf.mxu0
      %v987 = vadd.f32 0.0, %v986
      %v988 = vpop.f32.mrf.mxu0
      %989 = vmatprep.mubr.f32.mxu0 0.0
      %990 = vmatmul.mubr.f32.gmra.mxu0 %v800
      %v991 = vpop.f32.mrf.mxu0
      %v992 = vadd.f32 0.0, %v991
      %v993 = vpop.f32.mrf.mxu0
      %994 = vmatprep.mubr.f32.mxu0 0.0
      %995 = vmatmul.mubr.f32.gmra.mxu0 %v803
      %v996 = vpop.f32.mrf.mxu0
      %v997 = vadd.f32 0.0, %v996
      %v998 = vpop.f32.mrf.mxu0
      %999 = vmatprep.mubr.f32.mxu0 0.0
      %1000 = vmatmul.mubr.f32.gmra.mxu0 %v806
      %v1001 = vpop.f32.mrf.mxu0
      %v1002 = vadd.f32 0.0, %v1001
      %v1003 = vpop.f32.mrf.mxu0
      %1004 = vmatprep.mubr.f32.mxu0 0.0
      %1005 = vmatmul.mubr.f32.gmra.mxu0 %v809
      %v1006 = vpop.f32.mrf.mxu0
      %v1007 = vadd.f32 0.0, %v1006
      %v1008 = vpop.f32.mrf.mxu0
      %1009 = vmatprep.mubr.f32.mxu0 0.0
      %1010 = vmatmul.mubr.f32.gmra.mxu0 %v812
      %v1011 = vpop.f32.mrf.mxu0
      %v1012 = vadd.f32 0.0, %v1011
      %v1013 = vpop.f32.mrf.mxu0
      %1014 = vmatprep.mubr.f32.mxu0 0.0
      %1015 = vmatmul.mubr.f32.gmra.mxu0 %v815
      %v1016 = vpop.f32.mrf.mxu0
      %v1017 = vadd.f32 0.0, %v1016
      %v1018 = vpop.f32.mrf.mxu0
      %1019 = vmatprep.mubr.f32.mxu0 0.0
      %1020 = vmatmul.mubr.f32.gmra.mxu0 %v818
      %v1021 = vpop.f32.mrf.mxu0
      %v1022 = vadd.f32 0.0, %v1021
      %v1023 = vpop.f32.mrf.mxu0
      %1024 = vmatprep.mubr.f32.mxu0 0.0
      %1025 = vmatmul.mubr.f32.gmra.mxu0 %v821
      %v1026 = vpop.f32.mrf.mxu0
      %v1027 = vadd.f32 0.0, %v1026
      %v1028 = vpop.f32.mrf.mxu0
      %1029 = vmatprep.mubr.f32.mxu0 0.0
      %1030 = vmatmul.mubr.f32.gmra.mxu0 %v824
      %v1031 = vpop.f32.mrf.mxu0
      %v1032 = vadd.f32 0.0, %v1031
      %v1033 = vpop.f32.mrf.mxu0
      %1034 = vmatprep.mubr.f32.mxu0 0.0
      %1035 = vmatmul.mubr.f32.gmra.mxu0 %v827
      %v1036 = vpop.f32.mrf.mxu0
      %v1037 = vadd.f32 0.0, %v1036
      %v1038 = vpop.f32.mrf.mxu0
      %1039 = vmatprep.mubr.f32.mxu0 0.0
      %1040 = vmatmul.mubr.f32.gmra.mxu0 %v830
      %v1041 = vpop.f32.mrf.mxu0
      %v1042 = vadd.f32 0.0, %v1041
      %v1043 = vpop.f32.mrf.mxu0
      %1044 = vmatprep.mubr.f32.mxu0 0.0
      %1045 = vmatmul.mubr.f32.gmra.mxu0 %v833
      %v1046 = vpop.f32.mrf.mxu0
      %v1047 = vadd.f32 0.0, %v1046
      %v1048 = vpop.f32.mrf.mxu0
      %1049 = vmatprep.mubr.f32.mxu0 0.0
      %1050 = vmatmul.mubr.f32.gmra.mxu0 %v836
      %v1051 = vpop.f32.mrf.mxu0
      %v1052 = vadd.f32 0.0, %v1051
      %v1053 = vpop.f32.mrf.mxu0
      %1054 = vmatprep.mubr.f32.mxu0 0.0
      %1055 = vmatmul.mubr.f32.gmra.mxu0 %v839
      %v1056 = vpop.f32.mrf.mxu0
      %v1057 = vadd.f32 0.0, %v1056
      %v1058 = vpop.f32.mrf.mxu0
      %1059 = vmatprep.mubr.f32.mxu0 0.0
      %1060 = vmatmul.mubr.f32.gmra.mxu0 %v842
      %v1061 = vpop.f32.mrf.mxu0
      %v1062 = vadd.f32 0.0, %v1061
      %v1063 = vpop.f32.mrf.mxu0
      %1064 = vmatprep.mubr.f32.mxu0 0.0
      %1065 = vmatmul.mubr.f32.gmra.mxu0 %v845
      %v1066 = vpop.f32.mrf.mxu0
      %v1067 = vadd.f32 0.0, %v1066
      %v1068 = vpop.f32.mrf.mxu0
      %1069 = vmatprep.mubr.f32.mxu0 0.0
      %1070 = vmatmul.mubr.f32.gmra.mxu0 %v848
      %v1071 = vpop.f32.mrf.mxu0
      %v1072 = vadd.f32 0.0, %v1071
      %v1073 = vpop.f32.mrf.mxu0
      %1074 = vmatprep.mubr.f32.mxu0 0.0
      %1075 = vmatmul.mubr.f32.gmra.mxu0 %v851
      %v1076 = vpop.f32.mrf.mxu0
      %v1077 = vadd.f32 0.0, %v1076
      %v1078 = vpop.f32.mrf.mxu0
      %1079 = vmatprep.mubr.f32.mxu0 0.0
      %1080 = vmatmul.mubr.f32.gmra.mxu0 %v854
      %v1081 = vpop.f32.mrf.mxu0
      %v1082 = vadd.f32 0.0, %v1081
      %v1083 = vpop.f32.mrf.mxu0
      %1084 = vdwg.mxu0
      %vm1085 = vcmask 15360
      %1086 = vst.msk [vmem:[#allocation2] sm:$0xff] %vm1085, %v927
      %1087 = vst.msk [vmem:[#allocation2 + $0x8] sm:$0xff] %vm1085, %v932
      %1088 = vst.msk [vmem:[#allocation2 + $0x10] sm:$0xff] %vm1085, %v937
      %1089 = vst.msk [vmem:[#allocation2 + $0x18] sm:$0xff] %vm1085, %v942
      %1090 = vst.msk [vmem:[#allocation2 + $0x20] sm:$0xff] %vm1085, %v947
      %1091 = vst.msk [vmem:[#allocation2 + $0x28] sm:$0xff] %vm1085, %v952
      %1092 = vst.msk [vmem:[#allocation2 + $0x30] sm:$0xff] %vm1085, %v957
      %1093 = vst.msk [vmem:[#allocation2 + $0x38] sm:$0xff] %vm1085, %v962
      %1094 = vst.msk [vmem:[#allocation2 + $0x40] sm:$0xff] %vm1085, %v967
      %1095 = vst.msk [vmem:[#allocation2 + $0x48] sm:$0xff] %vm1085, %v972
      %1096 = vst.msk [vmem:[#allocation2 + $0x50] sm:$0xff] %vm1085, %v977
      %1097 = vst.msk [vmem:[#allocation2 + $0x58] sm:$0xff] %vm1085, %v982
      %1098 = vst.msk [vmem:[#allocation2 + $0x60] sm:$0xff] %vm1085, %v987
      %1099 = vst.msk [vmem:[#allocation2 + $0x68] sm:$0xff] %vm1085, %v992
      %1100 = vst.msk [vmem:[#allocation2 + $0x70] sm:$0xff] %vm1085, %v997
      %1101 = vst.msk [vmem:[#allocation2 + $0x78] sm:$0xff] %vm1085, %v1002
      %1102 = vst.msk [vmem:[#allocation2 + $0x80] sm:$0xff] %vm1085, %v1007
      %1103 = vst.msk [vmem:[#allocation2 + $0x88] sm:$0xff] %vm1085, %v1012
      %1104 = vst.msk [vmem:[#allocation2 + $0x90] sm:$0xff] %vm1085, %v1017
      %1105 = vst.msk [vmem:[#allocation2 + $0x98] sm:$0xff] %vm1085, %v1022
      %1106 = vst.msk [vmem:[#allocation2 + $0xa0] sm:$0xff] %vm1085, %v1027
      %1107 = vst.msk [vmem:[#allocation2 + $0xa8] sm:$0xff] %vm1085, %v1032
      %1108 = vst.msk [vmem:[#allocation2 + $0xb0] sm:$0xff] %vm1085, %v1037
      %1109 = vst.msk [vmem:[#allocation2 + $0xb8] sm:$0xff] %vm1085, %v1042
      %1110 = vst.msk [vmem:[#allocation2 + $0xc0] sm:$0xff] %vm1085, %v1047
      %1111 = vst.msk [vmem:[#allocation2 + $0xc8] sm:$0xff] %vm1085, %v1052
      %1112 = vst.msk [vmem:[#allocation2 + $0xd0] sm:$0xff] %vm1085, %v1057
      %1113 = vst.msk [vmem:[#allocation2 + $0xd8] sm:$0xff] %vm1085, %v1062
      %1114 = vst.msk [vmem:[#allocation2 + $0xe0] sm:$0xff] %vm1085, %v1067
      %1115 = vst.msk [vmem:[#allocation2 + $0xe8] sm:$0xff] %vm1085, %v1072
      %1116 = vst.msk [vmem:[#allocation2 + $0xf0] sm:$0xff] %vm1085, %v1077
      %1117 = vst.msk [vmem:[#allocation2 + $0xf8] sm:$0xff] %vm1085, %v1082
      %s1118 = scalar_lea.vmem %s3, 4
      %v1119 = vld [vmem:[%s1118] sm:$0xf]
      %v1120 = vsel %vm759, %v404, 0
      %v1122 = vsel %vm759, %v405, 0
      %v1124 = vsel %vm759, %v366, 0
      %v1126 = vsel %vm759, %v367, 0
      %v1128 = vsel %vm759, %v368, 0
      %v1130 = vsel %vm759, %v369, 0
      %v1132 = vsel %vm759, %v370, 0
      %v1134 = vsel %vm759, %v371, 0
      %v1136 = vsel %vm759, %v372, 0
      %v1138 = vsel %vm759, %v373, 0
      %v1140 = vsel %vm759, %v374, 0
      %v1142 = vsel %vm759, %v375, 0
      %v1144 = vsel %vm759, %v376, 0
      %v1146 = vsel %vm759, %v377, 0
      %v1148 = vsel %vm759, %v378, 0
      %v1150 = vsel %vm759, %v379, 0
      %v1152 = vsel %vm759, %v380, 0
      %v1154 = vsel %vm759, %v381, 0
      %v1156 = vsel %vm759, %v382, 0
      %v1158 = vsel %vm759, %v383, 0
      %v1160 = vsel %vm759, %v384, 0
      %v1162 = vsel %vm759, %v385, 0
      %v1164 = vsel %vm759, %v386, 0
      %v1166 = vsel %vm759, %v387, 0
      %v1168 = vsel %vm759, %v388, 0
      %v1170 = vsel %vm759, %v389, 0
      %v1172 = vsel %vm759, %v390, 0
      %v1174 = vsel %vm759, %v391, 0
      %v1176 = vsel %vm759, %v392, 0
      %v1178 = vsel %vm759, %v393, 0
      %v1180 = vsel %vm759, %v394, 0
      %v1182 = vsel %vm759, %v395, 0
      %v1185 = vsel %vm856, %v1119, 0
      %1187 = vmatprep.subr.mxu0 0.0
      %1188 = vmatpush1.msra.mxu0 0.0
      %1189 = vmatprep.subr.mxu0 0.0
      %1190 = vmatpush1.msra.mxu0 0.0
      %1191 = vmatprep.subr.mxu0 0.0
      %1192 = vmatpush1.msra.mxu0 0.0
      %1193 = vmatprep.subr.mxu0 0.0
      %1194 = vmatpush1.msra.mxu0 0.0
      %1195 = vmatprep.subr.mxu0 0.0
      %1196 = vmatpush1.msra.mxu0 0.0
      %1197 = vmatprep.subr.mxu0 0.0
      %1198 = vmatpush1.msra.mxu0 0.0
      %1199 = vmatprep.subr.mxu0 0.0
      %1200 = vmatpush1.msra.mxu0 0.0
      %1201 = vmatprep.subr.mxu0 0.0
      %1202 = vmatpush1.msra.mxu0 0.0
      %1203 = vmatprep.subr.mxu0 0.0
      %1204 = vmatpush1.msra.mxu0 0.0
      %1205 = vmatprep.subr.mxu0 0.0
      %1206 = vmatpush1.msra.mxu0 0.0
      %1207 = vmatprep.subr.mxu0 0.0
      %1208 = vmatpush1.msra.mxu0 0.0
      %1209 = vmatprep.subr.mxu0 0.0
      %1210 = vmatpush1.msra.mxu0 0.0
      %1211 = vmatprep.subr.mxu0 0.0
      %1212 = vmatpush1.msra.mxu0 0.0
      %1213 = vmatprep.subr.mxu0 0.0
      %1214 = vmatpush1.msra.mxu0 0.0
      %1215 = vmatprep.subr.mxu0 0.0
      %1216 = vmatpush1.msra.mxu0 0.0
      %1217 = vmatprep.subr.mxu0 0.0
      %1218 = vmatpush1.msra.mxu0 %v1185
      %1219 = vmatprep.subr.mxu0 0.0
      %1220 = vmatpush2.msra.mxu0 0.0
      %1221 = vmatprep.subr.mxu0 0.0
      %1222 = vmatpush2.msra.mxu0 0.0
      %1223 = vmatprep.subr.mxu0 0.0
      %1224 = vmatpush2.msra.mxu0 0.0
      %1225 = vmatprep.subr.mxu0 0.0
      %1226 = vmatpush2.msra.mxu0 0.0
      %1227 = vmatprep.subr.mxu0 0.0
      %1228 = vmatpush2.msra.mxu0 0.0
      %1229 = vmatprep.subr.mxu0 0.0
      %1230 = vmatpush2.msra.mxu0 0.0
      %1231 = vmatprep.subr.mxu0 0.0
      %1232 = vmatpush2.msra.mxu0 0.0
      %1233 = vmatprep.subr.mxu0 0.0
      %1234 = vmatpush2.msra.mxu0 0.0
      %1235 = vmatprep.subr.mxu0 0.0
      %1236 = vmatpush2.msra.mxu0 0.0
      %1237 = vmatprep.subr.mxu0 0.0
      %1238 = vmatpush2.msra.mxu0 0.0
      %1239 = vmatprep.subr.mxu0 0.0
      %1240 = vmatpush2.msra.mxu0 0.0
      %1241 = vmatprep.subr.mxu0 0.0
      %1242 = vmatpush2.msra.mxu0 0.0
      %1243 = vmatprep.subr.mxu0 0.0
      %1244 = vmatpush2.msra.mxu0 0.0
      %1245 = vmatprep.subr.mxu0 0.0
      %1246 = vmatpush2.msra.mxu0 0.0
      %1247 = vmatprep.subr.mxu0 0.0
      %1248 = vmatpush2.msra.mxu0 0.0
      %1249 = vmatprep.subr.mxu0 0.0
      %1250 = vmatpush2.msra.mxu0 0.0
      %1251 = vmatprep.mubr.f32.mxu0 0.0
      %1252 = vmatmul.mubr.f32.gmra.mxu0 %v1120
      %v1253 = vpop.f32.mrf.mxu0
      %v1254 = vadd.f32 0.0, %v1253
      %v1255 = vpop.f32.mrf.mxu0
      %1256 = vmatprep.mubr.f32.mxu0 0.0
      %1257 = vmatmul.mubr.f32.gmra.mxu0 %v1122
      %v1258 = vpop.f32.mrf.mxu0
      %v1259 = vadd.f32 0.0, %v1258
      %v1260 = vpop.f32.mrf.mxu0
      %1261 = vmatprep.mubr.f32.mxu0 0.0
      %1262 = vmatmul.mubr.f32.gmra.mxu0 %v1124
      %v1263 = vpop.f32.mrf.mxu0
      %v1264 = vadd.f32 0.0, %v1263
      %v1265 = vpop.f32.mrf.mxu0
      %1266 = vmatprep.mubr.f32.mxu0 0.0
      %1267 = vmatmul.mubr.f32.gmra.mxu0 %v1126
      %v1268 = vpop.f32.mrf.mxu0
      %v1269 = vadd.f32 0.0, %v1268
      %v1270 = vpop.f32.mrf.mxu0
      %1271 = vmatprep.mubr.f32.mxu0 0.0
      %1272 = vmatmul.mubr.f32.gmra.mxu0 %v1128
      %v1273 = vpop.f32.mrf.mxu0
      %v1274 = vadd.f32 0.0, %v1273
      %v1275 = vpop.f32.mrf.mxu0
      %1276 = vmatprep.mubr.f32.mxu0 0.0
      %1277 = vmatmul.mubr.f32.gmra.mxu0 %v1130
      %v1278 = vpop.f32.mrf.mxu0
      %v1279 = vadd.f32 0.0, %v1278
      %v1280 = vpop.f32.mrf.mxu0
      %1281 = vmatprep.mubr.f32.mxu0 0.0
      %1282 = vmatmul.mubr.f32.gmra.mxu0 %v1132
      %v1283 = vpop.f32.mrf.mxu0
      %v1284 = vadd.f32 0.0, %v1283
      %v1285 = vpop.f32.mrf.mxu0
      %1286 = vmatprep.mubr.f32.mxu0 0.0
      %1287 = vmatmul.mubr.f32.gmra.mxu0 %v1134
      %v1288 = vpop.f32.mrf.mxu0
      %v1289 = vadd.f32 0.0, %v1288
      %v1290 = vpop.f32.mrf.mxu0
      %1291 = vmatprep.mubr.f32.mxu0 0.0
      %1292 = vmatmul.mubr.f32.gmra.mxu0 %v1136
      %v1293 = vpop.f32.mrf.mxu0
      %v1294 = vadd.f32 0.0, %v1293
      %v1295 = vpop.f32.mrf.mxu0
      %1296 = vmatprep.mubr.f32.mxu0 0.0
      %1297 = vmatmul.mubr.f32.gmra.mxu0 %v1138
      %v1298 = vpop.f32.mrf.mxu0
      %v1299 = vadd.f32 0.0, %v1298
      %v1300 = vpop.f32.mrf.mxu0
      %1301 = vmatprep.mubr.f32.mxu0 0.0
      %1302 = vmatmul.mubr.f32.gmra.mxu0 %v1140
      %v1303 = vpop.f32.mrf.mxu0
      %v1304 = vadd.f32 0.0, %v1303
      %v1305 = vpop.f32.mrf.mxu0
      %1306 = vmatprep.mubr.f32.mxu0 0.0
      %1307 = vmatmul.mubr.f32.gmra.mxu0 %v1142
      %v1308 = vpop.f32.mrf.mxu0
      %v1309 = vadd.f32 0.0, %v1308
      %v1310 = vpop.f32.mrf.mxu0
      %1311 = vmatprep.mubr.f32.mxu0 0.0
      %1312 = vmatmul.mubr.f32.gmra.mxu0 %v1144
      %v1313 = vpop.f32.mrf.mxu0
      %v1314 = vadd.f32 0.0, %v1313
      %v1315 = vpop.f32.mrf.mxu0
      %1316 = vmatprep.mubr.f32.mxu0 0.0
      %1317 = vmatmul.mubr.f32.gmra.mxu0 %v1146
      %v1318 = vpop.f32.mrf.mxu0
      %v1319 = vadd.f32 0.0, %v1318
      %v1320 = vpop.f32.mrf.mxu0
      %1321 = vmatprep.mubr.f32.mxu0 0.0
      %1322 = vmatmul.mubr.f32.gmra.mxu0 %v1148
      %v1323 = vpop.f32.mrf.mxu0
      %v1324 = vadd.f32 0.0, %v1323
      %v1325 = vpop.f32.mrf.mxu0
      %1326 = vmatprep.mubr.f32.mxu0 0.0
      %1327 = vmatmul.mubr.f32.gmra.mxu0 %v1150
      %v1328 = vpop.f32.mrf.mxu0
      %v1329 = vadd.f32 0.0, %v1328
      %v1330 = vpop.f32.mrf.mxu0
      %1331 = vmatprep.mubr.f32.mxu0 0.0
      %1332 = vmatmul.mubr.f32.gmra.mxu0 %v1152
      %v1333 = vpop.f32.mrf.mxu0
      %v1334 = vadd.f32 0.0, %v1333
      %v1335 = vpop.f32.mrf.mxu0
      %1336 = vmatprep.mubr.f32.mxu0 0.0
      %1337 = vmatmul.mubr.f32.gmra.mxu0 %v1154
      %v1338 = vpop.f32.mrf.mxu0
      %v1339 = vadd.f32 0.0, %v1338
      %v1340 = vpop.f32.mrf.mxu0
      %1341 = vmatprep.mubr.f32.mxu0 0.0
      %1342 = vmatmul.mubr.f32.gmra.mxu0 %v1156
      %v1343 = vpop.f32.mrf.mxu0
      %v1344 = vadd.f32 0.0, %v1343
      %v1345 = vpop.f32.mrf.mxu0
      %1346 = vmatprep.mubr.f32.mxu0 0.0
      %1347 = vmatmul.mubr.f32.gmra.mxu0 %v1158
      %v1348 = vpop.f32.mrf.mxu0
      %v1349 = vadd.f32 0.0, %v1348
      %v1350 = vpop.f32.mrf.mxu0
      %1351 = vmatprep.mubr.f32.mxu0 0.0
      %1352 = vmatmul.mubr.f32.gmra.mxu0 %v1160
      %v1353 = vpop.f32.mrf.mxu0
      %v1354 = vadd.f32 0.0, %v1353
      %v1355 = vpop.f32.mrf.mxu0
      %1356 = vmatprep.mubr.f32.mxu0 0.0
      %1357 = vmatmul.mubr.f32.gmra.mxu0 %v1162
      %v1358 = vpop.f32.mrf.mxu0
      %v1359 = vadd.f32 0.0, %v1358
      %v1360 = vpop.f32.mrf.mxu0
      %1361 = vmatprep.mubr.f32.mxu0 0.0
      %1362 = vmatmul.mubr.f32.gmra.mxu0 %v1164
      %v1363 = vpop.f32.mrf.mxu0
      %v1364 = vadd.f32 0.0, %v1363
      %v1365 = vpop.f32.mrf.mxu0
      %1366 = vmatprep.mubr.f32.mxu0 0.0
      %1367 = vmatmul.mubr.f32.gmra.mxu0 %v1166
      %v1368 = vpop.f32.mrf.mxu0
      %v1369 = vadd.f32 0.0, %v1368
      %v1370 = vpop.f32.mrf.mxu0
      %1371 = vmatprep.mubr.f32.mxu0 0.0
      %1372 = vmatmul.mubr.f32.gmra.mxu0 %v1168
      %v1373 = vpop.f32.mrf.mxu0
      %v1374 = vadd.f32 0.0, %v1373
      %v1375 = vpop.f32.mrf.mxu0
      %1376 = vmatprep.mubr.f32.mxu0 0.0
      %1377 = vmatmul.mubr.f32.gmra.mxu0 %v1170
      %v1378 = vpop.f32.mrf.mxu0
      %v1379 = vadd.f32 0.0, %v1378
      %v1380 = vpop.f32.mrf.mxu0
      %1381 = vmatprep.mubr.f32.mxu0 0.0
      %1382 = vmatmul.mubr.f32.gmra.mxu0 %v1172
      %v1383 = vpop.f32.mrf.mxu0
      %v1384 = vadd.f32 0.0, %v1383
      %v1385 = vpop.f32.mrf.mxu0
      %1386 = vmatprep.mubr.f32.mxu0 0.0
      %1387 = vmatmul.mubr.f32.gmra.mxu0 %v1174
      %v1388 = vpop.f32.mrf.mxu0
      %v1389 = vadd.f32 0.0, %v1388
      %v1390 = vpop.f32.mrf.mxu0
      %1391 = vmatprep.mubr.f32.mxu0 0.0
      %1392 = vmatmul.mubr.f32.gmra.mxu0 %v1176
      %v1393 = vpop.f32.mrf.mxu0
      %v1394 = vadd.f32 0.0, %v1393
      %v1395 = vpop.f32.mrf.mxu0
      %1396 = vmatprep.mubr.f32.mxu0 0.0
      %1397 = vmatmul.mubr.f32.gmra.mxu0 %v1178
      %v1398 = vpop.f32.mrf.mxu0
      %v1399 = vadd.f32 0.0, %v1398
      %v1400 = vpop.f32.mrf.mxu0
      %1401 = vmatprep.mubr.f32.mxu0 0.0
      %1402 = vmatmul.mubr.f32.gmra.mxu0 %v1180
      %v1403 = vpop.f32.mrf.mxu0
      %v1404 = vadd.f32 0.0, %v1403
      %v1405 = vpop.f32.mrf.mxu0
      %1406 = vmatprep.mubr.f32.mxu0 0.0
      %1407 = vmatmul.mubr.f32.gmra.mxu0 %v1182
      %v1408 = vpop.f32.mrf.mxu0
      %v1409 = vadd.f32 0.0, %v1408
      %v1410 = vpop.f32.mrf.mxu0
      %1411 = vdwg.mxu0
      %v1412 = vld [vmem:[#allocation2] sm:$0xff]
      %v1413 = vld [vmem:[#allocation2 + $0x8] sm:$0xff]
      %v1414 = vld [vmem:[#allocation2 + $0x10] sm:$0xff]
      %v1415 = vld [vmem:[#allocation2 + $0x18] sm:$0xff]
      %v1416 = vld [vmem:[#allocation2 + $0x20] sm:$0xff]
      %v1417 = vld [vmem:[#allocation2 + $0x28] sm:$0xff]
      %v1418 = vld [vmem:[#allocation2 + $0x30] sm:$0xff]
      %v1419 = vld [vmem:[#allocation2 + $0x38] sm:$0xff]
      %v1420 = vld [vmem:[#allocation2 + $0x40] sm:$0xff]
      %v1421 = vld [vmem:[#allocation2 + $0x48] sm:$0xff]
      %v1422 = vld [vmem:[#allocation2 + $0x50] sm:$0xff]
      %v1423 = vld [vmem:[#allocation2 + $0x58] sm:$0xff]
      %v1424 = vld [vmem:[#allocation2 + $0x60] sm:$0xff]
      %v1425 = vld [vmem:[#allocation2 + $0x68] sm:$0xff]
      %v1426 = vld [vmem:[#allocation2 + $0x70] sm:$0xff]
      %v1427 = vld [vmem:[#allocation2 + $0x78] sm:$0xff]
      %v1428 = vld [vmem:[#allocation2 + $0x80] sm:$0xff]
      %v1429 = vld [vmem:[#allocation2 + $0x88] sm:$0xff]
      %v1430 = vld [vmem:[#allocation2 + $0x90] sm:$0xff]
      %v1431 = vld [vmem:[#allocation2 + $0x98] sm:$0xff]
      %v1432 = vld [vmem:[#allocation2 + $0xa0] sm:$0xff]
      %v1433 = vld [vmem:[#allocation2 + $0xa8] sm:$0xff]
      %v1434 = vld [vmem:[#allocation2 + $0xb0] sm:$0xff]
      %v1435 = vld [vmem:[#allocation2 + $0xb8] sm:$0xff]
      %v1436 = vld [vmem:[#allocation2 + $0xc0] sm:$0xff]
      %v1437 = vld [vmem:[#allocation2 + $0xc8] sm:$0xff]
      %v1438 = vld [vmem:[#allocation2 + $0xd0] sm:$0xff]
      %v1439 = vld [vmem:[#allocation2 + $0xd8] sm:$0xff]
      %v1440 = vld [vmem:[#allocation2 + $0xe0] sm:$0xff]
      %v1441 = vld [vmem:[#allocation2 + $0xe8] sm:$0xff]
      %v1442 = vld [vmem:[#allocation2 + $0xf0] sm:$0xff]
      %v1443 = vld [vmem:[#allocation2 + $0xf8] sm:$0xff]
      %v1444 = vadd.f32 %v1412, %v1254
      %v1445 = vadd.f32 %v1413, %v1259
      %v1446 = vadd.f32 %v1414, %v1264
      %v1447 = vadd.f32 %v1415, %v1269
      %v1448 = vadd.f32 %v1416, %v1274
      %v1449 = vadd.f32 %v1417, %v1279
      %v1450 = vadd.f32 %v1418, %v1284
      %v1451 = vadd.f32 %v1419, %v1289
      %v1452 = vadd.f32 %v1420, %v1294
      %v1453 = vadd.f32 %v1421, %v1299
      %v1454 = vadd.f32 %v1422, %v1304
      %v1455 = vadd.f32 %v1423, %v1309
      %v1456 = vadd.f32 %v1424, %v1314
      %v1457 = vadd.f32 %v1425, %v1319
      %v1458 = vadd.f32 %v1426, %v1324
      %v1459 = vadd.f32 %v1427, %v1329
      %v1460 = vadd.f32 %v1428, %v1334
      %v1461 = vadd.f32 %v1429, %v1339
      %v1462 = vadd.f32 %v1430, %v1344
      %v1463 = vadd.f32 %v1431, %v1349
      %v1464 = vadd.f32 %v1432, %v1354
      %v1465 = vadd.f32 %v1433, %v1359
      %v1466 = vadd.f32 %v1434, %v1364
      %v1467 = vadd.f32 %v1435, %v1369
      %v1468 = vadd.f32 %v1436, %v1374
      %v1469 = vadd.f32 %v1437, %v1379
      %v1470 = vadd.f32 %v1438, %v1384
      %v1471 = vadd.f32 %v1439, %v1389
      %v1472 = vadd.f32 %v1440, %v1394
      %v1473 = vadd.f32 %v1441, %v1399
      %v1474 = vadd.f32 %v1442, %v1404
      %v1475 = vadd.f32 %v1443, %v1409
      %1476 = vst.msk [vmem:[#allocation2] sm:$0xff] %vm1085, %v1444
      %1477 = vst.msk [vmem:[#allocation2 + $0x8] sm:$0xff] %vm1085, %v1445
      %1478 = vst.msk [vmem:[#allocation2 + $0x10] sm:$0xff] %vm1085, %v1446
      %1479 = vst.msk [vmem:[#allocation2 + $0x18] sm:$0xff] %vm1085, %v1447
      %1480 = vst.msk [vmem:[#allocation2 + $0x20] sm:$0xff] %vm1085, %v1448
      %1481 = vst.msk [vmem:[#allocation2 + $0x28] sm:$0xff] %vm1085, %v1449
      %1482 = vst.msk [vmem:[#allocation2 + $0x30] sm:$0xff] %vm1085, %v1450
      %1483 = vst.msk [vmem:[#allocation2 + $0x38] sm:$0xff] %vm1085, %v1451
      %1484 = vst.msk [vmem:[#allocation2 + $0x40] sm:$0xff] %vm1085, %v1452
      %1485 = vst.msk [vmem:[#allocation2 + $0x48] sm:$0xff] %vm1085, %v1453
      %1486 = vst.msk [vmem:[#allocation2 + $0x50] sm:$0xff] %vm1085, %v1454
      %1487 = vst.msk [vmem:[#allocation2 + $0x58] sm:$0xff] %vm1085, %v1455
      %1488 = vst.msk [vmem:[#allocation2 + $0x60] sm:$0xff] %vm1085, %v1456
      %1489 = vst.msk [vmem:[#allocation2 + $0x68] sm:$0xff] %vm1085, %v1457
      %1490 = vst.msk [vmem:[#allocation2 + $0x70] sm:$0xff] %vm1085, %v1458
      %1491 = vst.msk [vmem:[#allocation2 + $0x78] sm:$0xff] %vm1085, %v1459
      %1492 = vst.msk [vmem:[#allocation2 + $0x80] sm:$0xff] %vm1085, %v1460
      %1493 = vst.msk [vmem:[#allocation2 + $0x88] sm:$0xff] %vm1085, %v1461
      %1494 = vst.msk [vmem:[#allocation2 + $0x90] sm:$0xff] %vm1085, %v1462
      %1495 = vst.msk [vmem:[#allocation2 + $0x98] sm:$0xff] %vm1085, %v1463
      %1496 = vst.msk [vmem:[#allocation2 + $0xa0] sm:$0xff] %vm1085, %v1464
      %1497 = vst.msk [vmem:[#allocation2 + $0xa8] sm:$0xff] %vm1085, %v1465
      %1498 = vst.msk [vmem:[#allocation2 + $0xb0] sm:$0xff] %vm1085, %v1466
      %1499 = vst.msk [vmem:[#allocation2 + $0xb8] sm:$0xff] %vm1085, %v1467
      %1500 = vst.msk [vmem:[#allocation2 + $0xc0] sm:$0xff] %vm1085, %v1468
      %1501 = vst.msk [vmem:[#allocation2 + $0xc8] sm:$0xff] %vm1085, %v1469
      %1502 = vst.msk [vmem:[#allocation2 + $0xd0] sm:$0xff] %vm1085, %v1470
      %1503 = vst.msk [vmem:[#allocation2 + $0xd8] sm:$0xff] %vm1085, %v1471
      %1504 = vst.msk [vmem:[#allocation2 + $0xe0] sm:$0xff] %vm1085, %v1472
      %1505 = vst.msk [vmem:[#allocation2 + $0xe8] sm:$0xff] %vm1085, %v1473
      %1506 = vst.msk [vmem:[#allocation2 + $0xf0] sm:$0xff] %vm1085, %v1474
      %1507 = vst.msk [vmem:[#allocation2 + $0xf8] sm:$0xff] %vm1085, %v1475
      %s1508 = scalar_lea.vmem %s3, 8
      %v1509 = vld [vmem:[%s1508] sm:$0xf]
      %v1511 = vsel %vm759, %v722, 0
      %v1514 = vsel %vm759, %v723, 0
      %v1517 = vsel %vm759, %v724, 0
      %v1520 = vsel %vm759, %v725, 0
      %v1523 = vsel %vm759, %v726, 0
      %v1526 = vsel %vm759, %v727, 0
      %v1529 = vsel %vm759, %v728, 0
      %v1532 = vsel %vm759, %v729, 0
      %v1535 = vsel %vm759, %v730, 0
      %v1538 = vsel %vm759, %v731, 0
      %v1541 = vsel %vm759, %v732, 0
      %v1544 = vsel %vm759, %v733, 0
      %v1547 = vsel %vm759, %v734, 0
      %v1550 = vsel %vm759, %v735, 0
      %v1553 = vsel %vm759, %v736, 0
      %v1556 = vsel %vm759, %v737, 0
      %v1559 = vsel %vm759, %v738, 0
      %v1562 = vsel %vm759, %v739, 0
      %v1565 = vsel %vm759, %v740, 0
      %v1568 = vsel %vm759, %v741, 0
      %v1571 = vsel %vm759, %v742, 0
      %v1574 = vsel %vm759, %v743, 0
      %v1577 = vsel %vm759, %v744, 0
      %v1580 = vsel %vm759, %v745, 0
      %v1583 = vsel %vm759, %v746, 0
      %v1586 = vsel %vm759, %v747, 0
      %v1589 = vsel %vm759, %v748, 0
      %v1592 = vsel %vm759, %v749, 0
      %v1595 = vsel %vm759, %v750, 0
      %v1598 = vsel %vm759, %v751, 0
      %v1601 = vsel %vm759, %v752, 0
      %v1604 = vsel %vm759, %v753, 0
      %v1607 = vsel %vm856, %v1509, 0
      %1609 = vmatprep.subr.mxu0 0.0
      %1610 = vmatpush1.msra.mxu0 0.0
      %1611 = vmatprep.subr.mxu0 0.0
      %1612 = vmatpush1.msra.mxu0 0.0
      %1613 = vmatprep.subr.mxu0 0.0
      %1614 = vmatpush1.msra.mxu0 0.0
      %1615 = vmatprep.subr.mxu0 0.0
      %1616 = vmatpush1.msra.mxu0 0.0
      %1617 = vmatprep.subr.mxu0 0.0
      %1618 = vmatpush1.msra.mxu0 0.0
      %1619 = vmatprep.subr.mxu0 0.0
      %1620 = vmatpush1.msra.mxu0 0.0
      %1621 = vmatprep.subr.mxu0 0.0
      %1622 = vmatpush1.msra.mxu0 0.0
      %1623 = vmatprep.subr.mxu0 0.0
      %1624 = vmatpush1.msra.mxu0 0.0
      %1625 = vmatprep.subr.mxu0 0.0
      %1626 = vmatpush1.msra.mxu0 0.0
      %1627 = vmatprep.subr.mxu0 0.0
      %1628 = vmatpush1.msra.mxu0 0.0
      %1629 = vmatprep.subr.mxu0 0.0
      %1630 = vmatpush1.msra.mxu0 0.0
      %1631 = vmatprep.subr.mxu0 0.0
      %1632 = vmatpush1.msra.mxu0 0.0
      %1633 = vmatprep.subr.mxu0 0.0
      %1634 = vmatpush1.msra.mxu0 0.0
      %1635 = vmatprep.subr.mxu0 0.0
      %1636 = vmatpush1.msra.mxu0 0.0
      %1637 = vmatprep.subr.mxu0 0.0
      %1638 = vmatpush1.msra.mxu0 0.0
      %1639 = vmatprep.subr.mxu0 0.0
      %1640 = vmatpush1.msra.mxu0 %v1607
      %1641 = vmatprep.subr.mxu0 0.0
      %1642 = vmatpush2.msra.mxu0 0.0
      %1643 = vmatprep.subr.mxu0 0.0
      %1644 = vmatpush2.msra.mxu0 0.0
      %1645 = vmatprep.subr.mxu0 0.0
      %1646 = vmatpush2.msra.mxu0 0.0
      %1647 = vmatprep.subr.mxu0 0.0
      %1648 = vmatpush2.msra.mxu0 0.0
      %1649 = vmatprep.subr.mxu0 0.0
      %1650 = vmatpush2.msra.mxu0 0.0
      %1651 = vmatprep.subr.mxu0 0.0
      %1652 = vmatpush2.msra.mxu0 0.0
      %1653 = vmatprep.subr.mxu0 0.0
      %1654 = vmatpush2.msra.mxu0 0.0
      %1655 = vmatprep.subr.mxu0 0.0
      %1656 = vmatpush2.msra.mxu0 0.0
      %1657 = vmatprep.subr.mxu0 0.0
      %1658 = vmatpush2.msra.mxu0 0.0
      %1659 = vmatprep.subr.mxu0 0.0
      %1660 = vmatpush2.msra.mxu0 0.0
      %1661 = vmatprep.subr.mxu0 0.0
      %1662 = vmatpush2.msra.mxu0 0.0
      %1663 = vmatprep.subr.mxu0 0.0
      %1664 = vmatpush2.msra.mxu0 0.0
      %1665 = vmatprep.subr.mxu0 0.0
      %1666 = vmatpush2.msra.mxu0 0.0
      %1667 = vmatprep.subr.mxu0 0.0
      %1668 = vmatpush2.msra.mxu0 0.0
      %1669 = vmatprep.subr.mxu0 0.0
      %1670 = vmatpush2.msra.mxu0 0.0
      %1671 = vmatprep.subr.mxu0 0.0
      %1672 = vmatpush2.msra.mxu0 0.0
      %1673 = vmatprep.mubr.f32.mxu0 0.0
      %1674 = vmatmul.mubr.f32.gmra.mxu0 %v1511
      %v1675 = vpop.f32.mrf.mxu0
      %v1676 = vadd.f32 0.0, %v1675
      %v1677 = vpop.f32.mrf.mxu0
      %1678 = vmatprep.mubr.f32.mxu0 0.0
      %1679 = vmatmul.mubr.f32.gmra.mxu0 %v1514
      %v1680 = vpop.f32.mrf.mxu0
      %v1681 = vadd.f32 0.0, %v1680
      %v1682 = vpop.f32.mrf.mxu0
      %1683 = vmatprep.mubr.f32.mxu0 0.0
      %1684 = vmatmul.mubr.f32.gmra.mxu0 %v1517
      %v1685 = vpop.f32.mrf.mxu0
      %v1686 = vadd.f32 0.0, %v1685
      %v1687 = vpop.f32.mrf.mxu0
      %1688 = vmatprep.mubr.f32.mxu0 0.0
      %1689 = vmatmul.mubr.f32.gmra.mxu0 %v1520
      %v1690 = vpop.f32.mrf.mxu0
      %v1691 = vadd.f32 0.0, %v1690
      %v1692 = vpop.f32.mrf.mxu0
      %1693 = vmatprep.mubr.f32.mxu0 0.0
      %1694 = vmatmul.mubr.f32.gmra.mxu0 %v1523
      %v1695 = vpop.f32.mrf.mxu0
      %v1696 = vadd.f32 0.0, %v1695
      %v1697 = vpop.f32.mrf.mxu0
      %1698 = vmatprep.mubr.f32.mxu0 0.0
      %1699 = vmatmul.mubr.f32.gmra.mxu0 %v1526
      %v1700 = vpop.f32.mrf.mxu0
      %v1701 = vadd.f32 0.0, %v1700
      %v1702 = vpop.f32.mrf.mxu0
      %1703 = vmatprep.mubr.f32.mxu0 0.0
      %1704 = vmatmul.mubr.f32.gmra.mxu0 %v1529
      %v1705 = vpop.f32.mrf.mxu0
      %v1706 = vadd.f32 0.0, %v1705
      %v1707 = vpop.f32.mrf.mxu0
      %1708 = vmatprep.mubr.f32.mxu0 0.0
      %1709 = vmatmul.mubr.f32.gmra.mxu0 %v1532
      %v1710 = vpop.f32.mrf.mxu0
      %v1711 = vadd.f32 0.0, %v1710
      %v1712 = vpop.f32.mrf.mxu0
      %1713 = vmatprep.mubr.f32.mxu0 0.0
      %1714 = vmatmul.mubr.f32.gmra.mxu0 %v1535
      %v1715 = vpop.f32.mrf.mxu0
      %v1716 = vadd.f32 0.0, %v1715
      %v1717 = vpop.f32.mrf.mxu0
      %1718 = vmatprep.mubr.f32.mxu0 0.0
      %1719 = vmatmul.mubr.f32.gmra.mxu0 %v1538
      %v1720 = vpop.f32.mrf.mxu0
      %v1721 = vadd.f32 0.0, %v1720
      %v1722 = vpop.f32.mrf.mxu0
      %1723 = vmatprep.mubr.f32.mxu0 0.0
      %1724 = vmatmul.mubr.f32.gmra.mxu0 %v1541
      %v1725 = vpop.f32.mrf.mxu0
      %v1726 = vadd.f32 0.0, %v1725
      %v1727 = vpop.f32.mrf.mxu0
      %1728 = vmatprep.mubr.f32.mxu0 0.0
      %1729 = vmatmul.mubr.f32.gmra.mxu0 %v1544
      %v1730 = vpop.f32.mrf.mxu0
      %v1731 = vadd.f32 0.0, %v1730
      %v1732 = vpop.f32.mrf.mxu0
      %1733 = vmatprep.mubr.f32.mxu0 0.0
      %1734 = vmatmul.mubr.f32.gmra.mxu0 %v1547
      %v1735 = vpop.f32.mrf.mxu0
      %v1736 = vadd.f32 0.0, %v1735
      %v1737 = vpop.f32.mrf.mxu0
      %1738 = vmatprep.mubr.f32.mxu0 0.0
      %1739 = vmatmul.mubr.f32.gmra.mxu0 %v1550
      %v1740 = vpop.f32.mrf.mxu0
      %v1741 = vadd.f32 0.0, %v1740
      %v1742 = vpop.f32.mrf.mxu0
      %1743 = vmatprep.mubr.f32.mxu0 0.0
      %1744 = vmatmul.mubr.f32.gmra.mxu0 %v1553
      %v1745 = vpop.f32.mrf.mxu0
      %v1746 = vadd.f32 0.0, %v1745
      %v1747 = vpop.f32.mrf.mxu0
      %1748 = vmatprep.mubr.f32.mxu0 0.0
      %1749 = vmatmul.mubr.f32.gmra.mxu0 %v1556
      %v1750 = vpop.f32.mrf.mxu0
      %v1751 = vadd.f32 0.0, %v1750
      %v1752 = vpop.f32.mrf.mxu0
      %1753 = vmatprep.mubr.f32.mxu0 0.0
      %1754 = vmatmul.mubr.f32.gmra.mxu0 %v1559
      %v1755 = vpop.f32.mrf.mxu0
      %v1756 = vadd.f32 0.0, %v1755
      %v1757 = vpop.f32.mrf.mxu0
      %1758 = vmatprep.mubr.f32.mxu0 0.0
      %1759 = vmatmul.mubr.f32.gmra.mxu0 %v1562
      %v1760 = vpop.f32.mrf.mxu0
      %v1761 = vadd.f32 0.0, %v1760
      %v1762 = vpop.f32.mrf.mxu0
      %1763 = vmatprep.mubr.f32.mxu0 0.0
      %1764 = vmatmul.mubr.f32.gmra.mxu0 %v1565
      %v1765 = vpop.f32.mrf.mxu0
      %v1766 = vadd.f32 0.0, %v1765
      %v1767 = vpop.f32.mrf.mxu0
      %1768 = vmatprep.mubr.f32.mxu0 0.0
      %1769 = vmatmul.mubr.f32.gmra.mxu0 %v1568
      %v1770 = vpop.f32.mrf.mxu0
      %v1771 = vadd.f32 0.0, %v1770
      %v1772 = vpop.f32.mrf.mxu0
      %1773 = vmatprep.mubr.f32.mxu0 0.0
      %1774 = vmatmul.mubr.f32.gmra.mxu0 %v1571
      %v1775 = vpop.f32.mrf.mxu0
      %v1776 = vadd.f32 0.0, %v1775
      %v1777 = vpop.f32.mrf.mxu0
      %1778 = vmatprep.mubr.f32.mxu0 0.0
      %1779 = vmatmul.mubr.f32.gmra.mxu0 %v1574
      %v1780 = vpop.f32.mrf.mxu0
      %v1781 = vadd.f32 0.0, %v1780
      %v1782 = vpop.f32.mrf.mxu0
      %1783 = vmatprep.mubr.f32.mxu0 0.0
      %1784 = vmatmul.mubr.f32.gmra.mxu0 %v1577
      %v1785 = vpop.f32.mrf.mxu0
      %v1786 = vadd.f32 0.0, %v1785
      %v1787 = vpop.f32.mrf.mxu0
      %1788 = vmatprep.mubr.f32.mxu0 0.0
      %1789 = vmatmul.mubr.f32.gmra.mxu0 %v1580
      %v1790 = vpop.f32.mrf.mxu0
      %v1791 = vadd.f32 0.0, %v1790
      %v1792 = vpop.f32.mrf.mxu0
      %1793 = vmatprep.mubr.f32.mxu0 0.0
      %1794 = vmatmul.mubr.f32.gmra.mxu0 %v1583
      %v1795 = vpop.f32.mrf.mxu0
      %v1796 = vadd.f32 0.0, %v1795
      %v1797 = vpop.f32.mrf.mxu0
      %1798 = vmatprep.mubr.f32.mxu0 0.0
      %1799 = vmatmul.mubr.f32.gmra.mxu0 %v1586
      %v1800 = vpop.f32.mrf.mxu0
      %v1801 = vadd.f32 0.0, %v1800
      %v1802 = vpop.f32.mrf.mxu0
      %1803 = vmatprep.mubr.f32.mxu0 0.0
      %1804 = vmatmul.mubr.f32.gmra.mxu0 %v1589
      %v1805 = vpop.f32.mrf.mxu0
      %v1806 = vadd.f32 0.0, %v1805
      %v1807 = vpop.f32.mrf.mxu0
      %1808 = vmatprep.mubr.f32.mxu0 0.0
      %1809 = vmatmul.mubr.f32.gmra.mxu0 %v1592
      %v1810 = vpop.f32.mrf.mxu0
      %v1811 = vadd.f32 0.0, %v1810
      %v1812 = vpop.f32.mrf.mxu0
      %1813 = vmatprep.mubr.f32.mxu0 0.0
      %1814 = vmatmul.mubr.f32.gmra.mxu0 %v1595
      %v1815 = vpop.f32.mrf.mxu0
      %v1816 = vadd.f32 0.0, %v1815
      %v1817 = vpop.f32.mrf.mxu0
      %1818 = vmatprep.mubr.f32.mxu0 0.0
      %1819 = vmatmul.mubr.f32.gmra.mxu0 %v1598
      %v1820 = vpop.f32.mrf.mxu0
      %v1821 = vadd.f32 0.0, %v1820
      %v1822 = vpop.f32.mrf.mxu0
      %1823 = vmatprep.mubr.f32.mxu0 0.0
      %1824 = vmatmul.mubr.f32.gmra.mxu0 %v1601
      %v1825 = vpop.f32.mrf.mxu0
      %v1826 = vadd.f32 0.0, %v1825
      %v1827 = vpop.f32.mrf.mxu0
      %1828 = vmatprep.mubr.f32.mxu0 0.0
      %1829 = vmatmul.mubr.f32.gmra.mxu0 %v1604
      %v1830 = vpop.f32.mrf.mxu0
      %v1831 = vadd.f32 0.0, %v1830
      %v1832 = vpop.f32.mrf.mxu0
      %1833 = vdwg.mxu0
      %v1834 = vld [vmem:[#allocation2] sm:$0xff]
      %v1835 = vld [vmem:[#allocation2 + $0x8] sm:$0xff]
      %v1836 = vld [vmem:[#allocation2 + $0x10] sm:$0xff]
      %v1837 = vld [vmem:[#allocation2 + $0x18] sm:$0xff]
      %v1838 = vld [vmem:[#allocation2 + $0x20] sm:$0xff]
      %v1839 = vld [vmem:[#allocation2 + $0x28] sm:$0xff]
      %v1840 = vld [vmem:[#allocation2 + $0x30] sm:$0xff]
      %v1841 = vld [vmem:[#allocation2 + $0x38] sm:$0xff]
      %v1842 = vld [vmem:[#allocation2 + $0x40] sm:$0xff]
      %v1843 = vld [vmem:[#allocation2 + $0x48] sm:$0xff]
      %v1844 = vld [vmem:[#allocation2 + $0x50] sm:$0xff]
      %v1845 = vld [vmem:[#allocation2 + $0x58] sm:$0xff]
      %v1846 = vld [vmem:[#allocation2 + $0x60] sm:$0xff]
      %v1847 = vld [vmem:[#allocation2 + $0x68] sm:$0xff]
      %v1848 = vld [vmem:[#allocation2 + $0x70] sm:$0xff]
      %v1849 = vld [vmem:[#allocation2 + $0x78] sm:$0xff]
      %v1850 = vld [vmem:[#allocation2 + $0x80] sm:$0xff]
      %v1851 = vld [vmem:[#allocation2 + $0x88] sm:$0xff]
      %v1852 = vld [vmem:[#allocation2 + $0x90] sm:$0xff]
      %v1853 = vld [vmem:[#allocation2 + $0x98] sm:$0xff]
      %v1854 = vld [vmem:[#allocation2 + $0xa0] sm:$0xff]
      %v1855 = vld [vmem:[#allocation2 + $0xa8] sm:$0xff]
      %v1856 = vld [vmem:[#allocation2 + $0xb0] sm:$0xff]
      %v1857 = vld [vmem:[#allocation2 + $0xb8] sm:$0xff]
      %v1858 = vld [vmem:[#allocation2 + $0xc0] sm:$0xff]
      %v1859 = vld [vmem:[#allocation2 + $0xc8] sm:$0xff]
      %v1860 = vld [vmem:[#allocation2 + $0xd0] sm:$0xff]
      %v1861 = vld [vmem:[#allocation2 + $0xd8] sm:$0xff]
      %v1862 = vld [vmem:[#allocation2 + $0xe0] sm:$0xff]
      %v1863 = vld [vmem:[#allocation2 + $0xe8] sm:$0xff]
      %v1864 = vld [vmem:[#allocation2 + $0xf0] sm:$0xff]
      %v1865 = vld [vmem:[#allocation2 + $0xf8] sm:$0xff]
      %v1866 = vadd.f32 %v1834, %v1676
      %v1867 = vadd.f32 %v1835, %v1681
      %v1868 = vadd.f32 %v1836, %v1686
      %v1869 = vadd.f32 %v1837, %v1691
      %v1870 = vadd.f32 %v1838, %v1696
      %v1871 = vadd.f32 %v1839, %v1701
      %v1872 = vadd.f32 %v1840, %v1706
      %v1873 = vadd.f32 %v1841, %v1711
      %v1874 = vadd.f32 %v1842, %v1716
      %v1875 = vadd.f32 %v1843, %v1721
      %v1876 = vadd.f32 %v1844, %v1726
      %v1877 = vadd.f32 %v1845, %v1731
      %v1878 = vadd.f32 %v1846, %v1736
      %v1879 = vadd.f32 %v1847, %v1741
      %v1880 = vadd.f32 %v1848, %v1746
      %v1881 = vadd.f32 %v1849, %v1751
      %v1882 = vadd.f32 %v1850, %v1756
      %v1883 = vadd.f32 %v1851, %v1761
      %v1884 = vadd.f32 %v1852, %v1766
      %v1885 = vadd.f32 %v1853, %v1771
      %v1886 = vadd.f32 %v1854, %v1776
      %v1887 = vadd.f32 %v1855, %v1781
      %v1888 = vadd.f32 %v1856, %v1786
      %v1889 = vadd.f32 %v1857, %v1791
      %v1890 = vadd.f32 %v1858, %v1796
      %v1891 = vadd.f32 %v1859, %v1801
      %v1892 = vadd.f32 %v1860, %v1806
      %v1893 = vadd.f32 %v1861, %v1811
      %v1894 = vadd.f32 %v1862, %v1816
      %v1895 = vadd.f32 %v1863, %v1821
      %v1896 = vadd.f32 %v1864, %v1826
      %v1897 = vadd.f32 %v1865, %v1831
      %1898 = vst.msk [vmem:[#allocation2] sm:$0xff] %vm1085, %v1866
      %1899 = vst.msk [vmem:[#allocation2 + $0x8] sm:$0xff] %vm1085, %v1867
      %1900 = vst.msk [vmem:[#allocation2 + $0x10] sm:$0xff] %vm1085, %v1868
      %1901 = vst.msk [vmem:[#allocation2 + $0x18] sm:$0xff] %vm1085, %v1869
      %1902 = vst.msk [vmem:[#allocation2 + $0x20] sm:$0xff] %vm1085, %v1870
      %1903 = vst.msk [vmem:[#allocation2 + $0x28] sm:$0xff] %vm1085, %v1871
      %1904 = vst.msk [vmem:[#allocation2 + $0x30] sm:$0xff] %vm1085, %v1872
      %1905 = vst.msk [vmem:[#allocation2 + $0x38] sm:$0xff] %vm1085, %v1873
      %1906 = vst.msk [vmem:[#allocation2 + $0x40] sm:$0xff] %vm1085, %v1874
      %1907 = vst.msk [vmem:[#allocation2 + $0x48] sm:$0xff] %vm1085, %v1875
      %1908 = vst.msk [vmem:[#allocation2 + $0x50] sm:$0xff] %vm1085, %v1876
      %1909 = vst.msk [vmem:[#allocation2 + $0x58] sm:$0xff] %vm1085, %v1877
      %1910 = vst.msk [vmem:[#allocation2 + $0x60] sm:$0xff] %vm1085, %v1878
      %1911 = vst.msk [vmem:[#allocation2 + $0x68] sm:$0xff] %vm1085, %v1879
      %1912 = vst.msk [vmem:[#allocation2 + $0x70] sm:$0xff] %vm1085, %v1880
      %1913 = vst.msk [vmem:[#allocation2 + $0x78] sm:$0xff] %vm1085, %v1881
      %1914 = vst.msk [vmem:[#allocation2 + $0x80] sm:$0xff] %vm1085, %v1882
      %1915 = vst.msk [vmem:[#allocation2 + $0x88] sm:$0xff] %vm1085, %v1883
      %1916 = vst.msk [vmem:[#allocation2 + $0x90] sm:$0xff] %vm1085, %v1884
      %1917 = vst.msk [vmem:[#allocation2 + $0x98] sm:$0xff] %vm1085, %v1885
      %1918 = vst.msk [vmem:[#allocation2 + $0xa0] sm:$0xff] %vm1085, %v1886
      %1919 = vst.msk [vmem:[#allocation2 + $0xa8] sm:$0xff] %vm1085, %v1887
      %1920 = vst.msk [vmem:[#allocation2 + $0xb0] sm:$0xff] %vm1085, %v1888
      %1921 = vst.msk [vmem:[#allocation2 + $0xb8] sm:$0xff] %vm1085, %v1889
      %1922 = vst.msk [vmem:[#allocation2 + $0xc0] sm:$0xff] %vm1085, %v1890
      %1923 = vst.msk [vmem:[#allocation2 + $0xc8] sm:$0xff] %vm1085, %v1891
      %1924 = vst.msk [vmem:[#allocation2 + $0xd0] sm:$0xff] %vm1085, %v1892
      %1925 = vst.msk [vmem:[#allocation2 + $0xd8] sm:$0xff] %vm1085, %v1893
      %1926 = vst.msk [vmem:[#allocation2 + $0xe0] sm:$0xff] %vm1085, %v1894
      %1927 = vst.msk [vmem:[#allocation2 + $0xe8] sm:$0xff] %vm1085, %v1895
      %1928 = vst.msk [vmem:[#allocation2 + $0xf0] sm:$0xff] %vm1085, %v1896
      %1929 = vst.msk [vmem:[#allocation2 + $0xf8] sm:$0xff] %vm1085, %v1897
      %s1930 = scalar_lea.vmem %s3, 12
      %v1931 = vld [vmem:[%s1930] sm:$0xf]
      %v1933 = vsel %vm759, %v602, 0
      %v1936 = vsel %vm759, %v603, 0
      %v1939 = vsel %vm856, %v1931, 0
      %1941 = vmatprep.subr.mxu0 0.0
      %1942 = vmatpush1.msra.mxu0 0.0
      %1943 = vmatprep.subr.mxu0 0.0
      %1944 = vmatpush1.msra.mxu0 0.0
      %1945 = vmatprep.subr.mxu0 0.0
      %1946 = vmatpush1.msra.mxu0 0.0
      %1947 = vmatprep.subr.mxu0 0.0
      %1948 = vmatpush1.msra.mxu0 0.0
      %1949 = vmatprep.subr.mxu0 0.0
      %1950 = vmatpush1.msra.mxu0 0.0
      %1951 = vmatprep.subr.mxu0 0.0
      %1952 = vmatpush1.msra.mxu0 0.0
      %1953 = vmatprep.subr.mxu0 0.0
      %1954 = vmatpush1.msra.mxu0 0.0
      %1955 = vmatprep.subr.mxu0 0.0
      %1956 = vmatpush1.msra.mxu0 0.0
      %1957 = vmatprep.subr.mxu0 0.0
      %1958 = vmatpush1.msra.mxu0 0.0
      %1959 = vmatprep.subr.mxu0 0.0
      %1960 = vmatpush1.msra.mxu0 0.0
      %1961 = vmatprep.subr.mxu0 0.0
      %1962 = vmatpush1.msra.mxu0 0.0
      %1963 = vmatprep.subr.mxu0 0.0
      %1964 = vmatpush1.msra.mxu0 0.0
      %1965 = vmatprep.subr.mxu0 0.0
      %1966 = vmatpush1.msra.mxu0 0.0
      %1967 = vmatprep.subr.mxu0 0.0
      %1968 = vmatpush1.msra.mxu0 0.0
      %1969 = vmatprep.subr.mxu0 0.0
      %1970 = vmatpush1.msra.mxu0 0.0
      %1971 = vmatprep.subr.mxu0 0.0
      %1972 = vmatpush1.msra.mxu0 %v1939
      %1973 = vmatprep.subr.mxu0 0.0
      %1974 = vmatpush2.msra.mxu0 0.0
      %1975 = vmatprep.subr.mxu0 0.0
      %1976 = vmatpush2.msra.mxu0 0.0
      %1977 = vmatprep.subr.mxu0 0.0
      %1978 = vmatpush2.msra.mxu0 0.0
      %1979 = vmatprep.subr.mxu0 0.0
      %1980 = vmatpush2.msra.mxu0 0.0
      %1981 = vmatprep.subr.mxu0 0.0
      %1982 = vmatpush2.msra.mxu0 0.0
      %1983 = vmatprep.subr.mxu0 0.0
      %1984 = vmatpush2.msra.mxu0 0.0
      %1985 = vmatprep.subr.mxu0 0.0
      %1986 = vmatpush2.msra.mxu0 0.0
      %1987 = vmatprep.subr.mxu0 0.0
      %1988 = vmatpush2.msra.mxu0 0.0
      %1989 = vmatprep.subr.mxu0 0.0
      %1990 = vmatpush2.msra.mxu0 0.0
      %1991 = vmatprep.subr.mxu0 0.0
      %1992 = vmatpush2.msra.mxu0 0.0
      %1993 = vmatprep.subr.mxu0 0.0
      %1994 = vmatpush2.msra.mxu0 0.0
      %1995 = vmatprep.subr.mxu0 0.0
      %1996 = vmatpush2.msra.mxu0 0.0
      %1997 = vmatprep.subr.mxu0 0.0
      %1998 = vmatpush2.msra.mxu0 0.0
      %1999 = vmatprep.subr.mxu0 0.0
      %2000 = vmatpush2.msra.mxu0 0.0
      %2001 = vmatprep.subr.mxu0 0.0
      %2002 = vmatpush2.msra.mxu0 0.0
      %2003 = vmatprep.subr.mxu0 0.0
      %2004 = vmatpush2.msra.mxu0 0.0
      %2005 = vmatprep.mubr.f32.mxu0 0.0
      %2006 = vmatmul.mubr.f32.gmra.mxu0 %v767
      %v2007 = vpop.f32.mrf.mxu0
      %v2008 = vadd.f32 0.0, %v2007
      %v2009 = vpop.f32.mrf.mxu0
      %2010 = vmatprep.mubr.f32.mxu0 0.0
      %2011 = vmatmul.mubr.f32.gmra.mxu0 %v770
      %v2012 = vpop.f32.mrf.mxu0
      %v2013 = vadd.f32 0.0, %v2012
      %v2014 = vpop.f32.mrf.mxu0
      %2015 = vmatprep.mubr.f32.mxu0 0.0
      %2016 = vmatmul.mubr.f32.gmra.mxu0 %v773
      %v2017 = vpop.f32.mrf.mxu0
      %v2018 = vadd.f32 0.0, %v2017
      %v2019 = vpop.f32.mrf.mxu0
      %2020 = vmatprep.mubr.f32.mxu0 0.0
      %2021 = vmatmul.mubr.f32.gmra.mxu0 %v776
      %v2022 = vpop.f32.mrf.mxu0
      %v2023 = vadd.f32 0.0, %v2022
      %v2024 = vpop.f32.mrf.mxu0
      %2025 = vmatprep.mubr.f32.mxu0 0.0
      %2026 = vmatmul.mubr.f32.gmra.mxu0 %v779
      %v2027 = vpop.f32.mrf.mxu0
      %v2028 = vadd.f32 0.0, %v2027
      %v2029 = vpop.f32.mrf.mxu0
      %2030 = vmatprep.mubr.f32.mxu0 0.0
      %2031 = vmatmul.mubr.f32.gmra.mxu0 %v782
      %v2032 = vpop.f32.mrf.mxu0
      %v2033 = vadd.f32 0.0, %v2032
      %v2034 = vpop.f32.mrf.mxu0
      %2035 = vmatprep.mubr.f32.mxu0 0.0
      %2036 = vmatmul.mubr.f32.gmra.mxu0 %v785
      %v2037 = vpop.f32.mrf.mxu0
      %v2038 = vadd.f32 0.0, %v2037
      %v2039 = vpop.f32.mrf.mxu0
      %2040 = vmatprep.mubr.f32.mxu0 0.0
      %2041 = vmatmul.mubr.f32.gmra.mxu0 %v788
      %v2042 = vpop.f32.mrf.mxu0
      %v2043 = vadd.f32 0.0, %v2042
      %v2044 = vpop.f32.mrf.mxu0
      %2045 = vmatprep.mubr.f32.mxu0 0.0
      %2046 = vmatmul.mubr.f32.gmra.mxu0 %v791
      %v2047 = vpop.f32.mrf.mxu0
      %v2048 = vadd.f32 0.0, %v2047
      %v2049 = vpop.f32.mrf.mxu0
      %2050 = vmatprep.mubr.f32.mxu0 0.0
      %2051 = vmatmul.mubr.f32.gmra.mxu0 %v794
      %v2052 = vpop.f32.mrf.mxu0
      %v2053 = vadd.f32 0.0, %v2052
      %v2054 = vpop.f32.mrf.mxu0
      %2055 = vmatprep.mubr.f32.mxu0 0.0
      %2056 = vmatmul.mubr.f32.gmra.mxu0 %v797
      %v2057 = vpop.f32.mrf.mxu0
      %v2058 = vadd.f32 0.0, %v2057
      %v2059 = vpop.f32.mrf.mxu0
      %2060 = vmatprep.mubr.f32.mxu0 0.0
      %2061 = vmatmul.mubr.f32.gmra.mxu0 %v800
      %v2062 = vpop.f32.mrf.mxu0
      %v2063 = vadd.f32 0.0, %v2062
      %v2064 = vpop.f32.mrf.mxu0
      %2065 = vmatprep.mubr.f32.mxu0 0.0
      %2066 = vmatmul.mubr.f32.gmra.mxu0 %v803
      %v2067 = vpop.f32.mrf.mxu0
      %v2068 = vadd.f32 0.0, %v2067
      %v2069 = vpop.f32.mrf.mxu0
      %2070 = vmatprep.mubr.f32.mxu0 0.0
      %2071 = vmatmul.mubr.f32.gmra.mxu0 %v806
      %v2072 = vpop.f32.mrf.mxu0
      %v2073 = vadd.f32 0.0, %v2072
      %v2074 = vpop.f32.mrf.mxu0
      %2075 = vmatprep.mubr.f32.mxu0 0.0
      %2076 = vmatmul.mubr.f32.gmra.mxu0 %v809
      %v2077 = vpop.f32.mrf.mxu0
      %v2078 = vadd.f32 0.0, %v2077
      %v2079 = vpop.f32.mrf.mxu0
      %2080 = vmatprep.mubr.f32.mxu0 0.0
      %2081 = vmatmul.mubr.f32.gmra.mxu0 %v812
      %v2082 = vpop.f32.mrf.mxu0
      %v2083 = vadd.f32 0.0, %v2082
      %v2084 = vpop.f32.mrf.mxu0
      %2085 = vmatprep.mubr.f32.mxu0 0.0
      %2086 = vmatmul.mubr.f32.gmra.mxu0 %v815
      %v2087 = vpop.f32.mrf.mxu0
      %v2088 = vadd.f32 0.0, %v2087
      %v2089 = vpop.f32.mrf.mxu0
      %2090 = vmatprep.mubr.f32.mxu0 0.0
      %2091 = vmatmul.mubr.f32.gmra.mxu0 %v818
      %v2092 = vpop.f32.mrf.mxu0
      %v2093 = vadd.f32 0.0, %v2092
      %v2094 = vpop.f32.mrf.mxu0
      %2095 = vmatprep.mubr.f32.mxu0 0.0
      %2096 = vmatmul.mubr.f32.gmra.mxu0 %v821
      %v2097 = vpop.f32.mrf.mxu0
      %v2098 = vadd.f32 0.0, %v2097
      %v2099 = vpop.f32.mrf.mxu0
      %2100 = vmatprep.mubr.f32.mxu0 0.0
      %2101 = vmatmul.mubr.f32.gmra.mxu0 %v824
      %v2102 = vpop.f32.mrf.mxu0
      %v2103 = vadd.f32 0.0, %v2102
      %v2104 = vpop.f32.mrf.mxu0
      %2105 = vmatprep.mubr.f32.mxu0 0.0
      %2106 = vmatmul.mubr.f32.gmra.mxu0 %v827
      %v2107 = vpop.f32.mrf.mxu0
      %v2108 = vadd.f32 0.0, %v2107
      %v2109 = vpop.f32.mrf.mxu0
      %2110 = vmatprep.mubr.f32.mxu0 0.0
      %2111 = vmatmul.mubr.f32.gmra.mxu0 %v830
      %v2112 = vpop.f32.mrf.mxu0
      %v2113 = vadd.f32 0.0, %v2112
      %v2114 = vpop.f32.mrf.mxu0
      %2115 = vmatprep.mubr.f32.mxu0 0.0
      %2116 = vmatmul.mubr.f32.gmra.mxu0 %v833
      %v2117 = vpop.f32.mrf.mxu0
      %v2118 = vadd.f32 0.0, %v2117
      %v2119 = vpop.f32.mrf.mxu0
      %2120 = vmatprep.mubr.f32.mxu0 0.0
      %2121 = vmatmul.mubr.f32.gmra.mxu0 %v836
      %v2122 = vpop.f32.mrf.mxu0
      %v2123 = vadd.f32 0.0, %v2122
      %v2124 = vpop.f32.mrf.mxu0
      %2125 = vmatprep.mubr.f32.mxu0 0.0
      %2126 = vmatmul.mubr.f32.gmra.mxu0 %v839
      %v2127 = vpop.f32.mrf.mxu0
      %v2128 = vadd.f32 0.0, %v2127
      %v2129 = vpop.f32.mrf.mxu0
      %2130 = vmatprep.mubr.f32.mxu0 0.0
      %2131 = vmatmul.mubr.f32.gmra.mxu0 %v842
      %v2132 = vpop.f32.mrf.mxu0
      %v2133 = vadd.f32 0.0, %v2132
      %v2134 = vpop.f32.mrf.mxu0
      %2135 = vmatprep.mubr.f32.mxu0 0.0
      %2136 = vmatmul.mubr.f32.gmra.mxu0 %v845
      %v2137 = vpop.f32.mrf.mxu0
      %v2138 = vadd.f32 0.0, %v2137
      %v2139 = vpop.f32.mrf.mxu0
      %2140 = vmatprep.mubr.f32.mxu0 0.0
      %2141 = vmatmul.mubr.f32.gmra.mxu0 %v848
      %v2142 = vpop.f32.mrf.mxu0
      %v2143 = vadd.f32 0.0, %v2142
      %v2144 = vpop.f32.mrf.mxu0
      %2145 = vmatprep.mubr.f32.mxu0 0.0
      %2146 = vmatmul.mubr.f32.gmra.mxu0 %v851
      %v2147 = vpop.f32.mrf.mxu0
      %v2148 = vadd.f32 0.0, %v2147
      %v2149 = vpop.f32.mrf.mxu0
      %2150 = vmatprep.mubr.f32.mxu0 0.0
      %2151 = vmatmul.mubr.f32.gmra.mxu0 %v854
      %v2152 = vpop.f32.mrf.mxu0
      %v2153 = vadd.f32 0.0, %v2152
      %v2154 = vpop.f32.mrf.mxu0
      %2155 = vmatprep.mubr.f32.mxu0 0.0
      %2156 = vmatmul.mubr.f32.gmra.mxu0 %v1933
      %v2157 = vpop.f32.mrf.mxu0
      %v2158 = vadd.f32 0.0, %v2157
      %v2159 = vpop.f32.mrf.mxu0
      %2160 = vmatprep.mubr.f32.mxu0 0.0
      %2161 = vmatmul.mubr.f32.gmra.mxu0 %v1936
      %v2162 = vpop.f32.mrf.mxu0
      %v2163 = vadd.f32 0.0, %v2162
      %v2164 = vpop.f32.mrf.mxu0
      %2165 = vdwg.mxu0
      %v2166 = vld [vmem:[#allocation2] sm:$0xff]
      %v2167 = vld [vmem:[#allocation2 + $0x8] sm:$0xff]
      %v2168 = vld [vmem:[#allocation2 + $0x10] sm:$0xff]
      %v2169 = vld [vmem:[#allocation2 + $0x18] sm:$0xff]
      %v2170 = vld [vmem:[#allocation2 + $0x20] sm:$0xff]
      %v2171 = vld [vmem:[#allocation2 + $0x28] sm:$0xff]
      %v2172 = vld [vmem:[#allocation2 + $0x30] sm:$0xff]
      %v2173 = vld [vmem:[#allocation2 + $0x38] sm:$0xff]
      %v2174 = vld [vmem:[#allocation2 + $0x40] sm:$0xff]
      %v2175 = vld [vmem:[#allocation2 + $0x48] sm:$0xff]
      %v2176 = vld [vmem:[#allocation2 + $0x50] sm:$0xff]
      %v2177 = vld [vmem:[#allocation2 + $0x58] sm:$0xff]
      %v2178 = vld [vmem:[#allocation2 + $0x60] sm:$0xff]
      %v2179 = vld [vmem:[#allocation2 + $0x68] sm:$0xff]
      %v2180 = vld [vmem:[#allocation2 + $0x70] sm:$0xff]
      %v2181 = vld [vmem:[#allocation2 + $0x78] sm:$0xff]
      %v2182 = vld [vmem:[#allocation2 + $0x80] sm:$0xff]
      %v2183 = vld [vmem:[#allocation2 + $0x88] sm:$0xff]
      %v2184 = vld [vmem:[#allocation2 + $0x90] sm:$0xff]
      %v2185 = vld [vmem:[#allocation2 + $0x98] sm:$0xff]
      %v2186 = vld [vmem:[#allocation2 + $0xa0] sm:$0xff]
      %v2187 = vld [vmem:[#allocation2 + $0xa8] sm:$0xff]
      %v2188 = vld [vmem:[#allocation2 + $0xb0] sm:$0xff]
      %v2189 = vld [vmem:[#allocation2 + $0xb8] sm:$0xff]
      %v2190 = vld [vmem:[#allocation2 + $0xc0] sm:$0xff]
      %v2191 = vld [vmem:[#allocation2 + $0xc8] sm:$0xff]
      %v2192 = vld [vmem:[#allocation2 + $0xd0] sm:$0xff]
      %v2193 = vld [vmem:[#allocation2 + $0xd8] sm:$0xff]
      %v2194 = vld [vmem:[#allocation2 + $0xe0] sm:$0xff]
      %v2195 = vld [vmem:[#allocation2 + $0xe8] sm:$0xff]
      %v2196 = vld [vmem:[#allocation2 + $0xf0] sm:$0xff]
      %v2197 = vld [vmem:[#allocation2 + $0xf8] sm:$0xff]
      %v2198 = vadd.f32 %v2166, %v2008
      %v2199 = vadd.f32 %v2167, %v2013
      %v2200 = vadd.f32 %v2168, %v2018
      %v2201 = vadd.f32 %v2169, %v2023
      %v2202 = vadd.f32 %v2170, %v2028
      %v2203 = vadd.f32 %v2171, %v2033
      %v2204 = vadd.f32 %v2172, %v2038
      %v2205 = vadd.f32 %v2173, %v2043
      %v2206 = vadd.f32 %v2174, %v2048
      %v2207 = vadd.f32 %v2175, %v2053
      %v2208 = vadd.f32 %v2176, %v2058
      %v2209 = vadd.f32 %v2177, %v2063
      %v2210 = vadd.f32 %v2178, %v2068
      %v2211 = vadd.f32 %v2179, %v2073
      %v2212 = vadd.f32 %v2180, %v2078
      %v2213 = vadd.f32 %v2181, %v2083
      %v2214 = vadd.f32 %v2182, %v2088
      %v2215 = vadd.f32 %v2183, %v2093
      %v2216 = vadd.f32 %v2184, %v2098
      %v2217 = vadd.f32 %v2185, %v2103
      %v2218 = vadd.f32 %v2186, %v2108
      %v2219 = vadd.f32 %v2187, %v2113
      %v2220 = vadd.f32 %v2188, %v2118
      %v2221 = vadd.f32 %v2189, %v2123
      %v2222 = vadd.f32 %v2190, %v2128
      %v2223 = vadd.f32 %v2191, %v2133
      %v2224 = vadd.f32 %v2192, %v2138
      %v2225 = vadd.f32 %v2193, %v2143
      %v2226 = vadd.f32 %v2194, %v2148
      %v2227 = vadd.f32 %v2195, %v2153
      %v2228 = vadd.f32 %v2196, %v2158
      %v2229 = vadd.f32 %v2197, %v2163
      %2230 = vst.msk [vmem:[#allocation2] sm:$0xff] %vm1085, %v2198
      %2231 = vst.msk [vmem:[#allocation2 + $0x8] sm:$0xff] %vm1085, %v2199
      %2232 = vst.msk [vmem:[#allocation2 + $0x10] sm:$0xff] %vm1085, %v2200
      %2233 = vst.msk [vmem:[#allocation2 + $0x18] sm:$0xff] %vm1085, %v2201
      %2234 = vst.msk [vmem:[#allocation2 + $0x20] sm:$0xff] %vm1085, %v2202
      %2235 = vst.msk [vmem:[#allocation2 + $0x28] sm:$0xff] %vm1085, %v2203
      %2236 = vst.msk [vmem:[#allocation2 + $0x30] sm:$0xff] %vm1085, %v2204
      %2237 = vst.msk [vmem:[#allocation2 + $0x38] sm:$0xff] %vm1085, %v2205
      %2238 = vst.msk [vmem:[#allocation2 + $0x40] sm:$0xff] %vm1085, %v2206
      %2239 = vst.msk [vmem:[#allocation2 + $0x48] sm:$0xff] %vm1085, %v2207
      %2240 = vst.msk [vmem:[#allocation2 + $0x50] sm:$0xff] %vm1085, %v2208
      %2241 = vst.msk [vmem:[#allocation2 + $0x58] sm:$0xff] %vm1085, %v2209
      %2242 = vst.msk [vmem:[#allocation2 + $0x60] sm:$0xff] %vm1085, %v2210
      %2243 = vst.msk [vmem:[#allocation2 + $0x68] sm:$0xff] %vm1085, %v2211
      %2244 = vst.msk [vmem:[#allocation2 + $0x70] sm:$0xff] %vm1085, %v2212
      %2245 = vst.msk [vmem:[#allocation2 + $0x78] sm:$0xff] %vm1085, %v2213
      %2246 = vst.msk [vmem:[#allocation2 + $0x80] sm:$0xff] %vm1085, %v2214
      %2247 = vst.msk [vmem:[#allocation2 + $0x88] sm:$0xff] %vm1085, %v2215
      %2248 = vst.msk [vmem:[#allocation2 + $0x90] sm:$0xff] %vm1085, %v2216
      %2249 = vst.msk [vmem:[#allocation2 + $0x98] sm:$0xff] %vm1085, %v2217
      %2250 = vst.msk [vmem:[#allocation2 + $0xa0] sm:$0xff] %vm1085, %v2218
      %2251 = vst.msk [vmem:[#allocation2 + $0xa8] sm:$0xff] %vm1085, %v2219
      %2252 = vst.msk [vmem:[#allocation2 + $0xb0] sm:$0xff] %vm1085, %v2220
      %2253 = vst.msk [vmem:[#allocation2 + $0xb8] sm:$0xff] %vm1085, %v2221
      %2254 = vst.msk [vmem:[#allocation2 + $0xc0] sm:$0xff] %vm1085, %v2222
      %2255 = vst.msk [vmem:[#allocation2 + $0xc8] sm:$0xff] %vm1085, %v2223
      %2256 = vst.msk [vmem:[#allocation2 + $0xd0] sm:$0xff] %vm1085, %v2224
      %2257 = vst.msk [vmem:[#allocation2 + $0xd8] sm:$0xff] %vm1085, %v2225
      %2258 = vst.msk [vmem:[#allocation2 + $0xe0] sm:$0xff] %vm1085, %v2226
      %2259 = vst.msk [vmem:[#allocation2 + $0xe8] sm:$0xff] %vm1085, %v2227
      %2260 = vst.msk [vmem:[#allocation2 + $0xf0] sm:$0xff] %vm1085, %v2228
      %2261 = vst.msk [vmem:[#allocation2 + $0xf8] sm:$0xff] %vm1085, %v2229
      %s2262 = scalar_lea.vmem %s3, 16
      %v2263 = vld [vmem:[%s2262] sm:$0xf]
      %v2264 = vsel %vm759, %v396, 0
      %v2266 = vsel %vm759, %v397, 0
      %v2269 = vsel %vm856, %v2263, 0
      %2271 = vmatprep.subr.mxu0 0.0
      %2272 = vmatpush1.msra.mxu0 0.0
      %2273 = vmatprep.subr.mxu0 0.0
      %2274 = vmatpush1.msra.mxu0 0.0
      %2275 = vmatprep.subr.mxu0 0.0
      %2276 = vmatpush1.msra.mxu0 0.0
      %2277 = vmatprep.subr.mxu0 0.0
      %2278 = vmatpush1.msra.mxu0 0.0
      %2279 = vmatprep.subr.mxu0 0.0
      %2280 = vmatpush1.msra.mxu0 0.0
      %2281 = vmatprep.subr.mxu0 0.0
      %2282 = vmatpush1.msra.mxu0 0.0
      %2283 = vmatprep.subr.mxu0 0.0
      %2284 = vmatpush1.msra.mxu0 0.0
      %2285 = vmatprep.subr.mxu0 0.0
      %2286 = vmatpush1.msra.mxu0 0.0
      %2287 = vmatprep.subr.mxu0 0.0
      %2288 = vmatpush1.msra.mxu0 0.0
      %2289 = vmatprep.subr.mxu0 0.0
      %2290 = vmatpush1.msra.mxu0 0.0
      %2291 = vmatprep.subr.mxu0 0.0
      %2292 = vmatpush1.msra.mxu0 0.0
      %2293 = vmatprep.subr.mxu0 0.0
      %2294 = vmatpush1.msra.mxu0 0.0
      %2295 = vmatprep.subr.mxu0 0.0
      %2296 = vmatpush1.msra.mxu0 0.0
      %2297 = vmatprep.subr.mxu0 0.0
      %2298 = vmatpush1.msra.mxu0 0.0
      %2299 = vmatprep.subr.mxu0 0.0
      %2300 = vmatpush1.msra.mxu0 0.0
      %2301 = vmatprep.subr.mxu0 0.0
      %2302 = vmatpush1.msra.mxu0 %v2269
      %2303 = vmatprep.subr.mxu0 0.0
      %2304 = vmatpush2.msra.mxu0 0.0
      %2305 = vmatprep.subr.mxu0 0.0
      %2306 = vmatpush2.msra.mxu0 0.0
      %2307 = vmatprep.subr.mxu0 0.0
      %2308 = vmatpush2.msra.mxu0 0.0
      %2309 = vmatprep.subr.mxu0 0.0
      %2310 = vmatpush2.msra.mxu0 0.0
      %2311 = vmatprep.subr.mxu0 0.0
      %2312 = vmatpush2.msra.mxu0 0.0
      %2313 = vmatprep.subr.mxu0 0.0
      %2314 = vmatpush2.msra.mxu0 0.0
      %2315 = vmatprep.subr.mxu0 0.0
      %2316 = vmatpush2.msra.mxu0 0.0
      %2317 = vmatprep.subr.mxu0 0.0
      %2318 = vmatpush2.msra.mxu0 0.0
      %2319 = vmatprep.subr.mxu0 0.0
      %2320 = vmatpush2.msra.mxu0 0.0
      %2321 = vmatprep.subr.mxu0 0.0
      %2322 = vmatpush2.msra.mxu0 0.0
      %2323 = vmatprep.subr.mxu0 0.0
      %2324 = vmatpush2.msra.mxu0 0.0
      %2325 = vmatprep.subr.mxu0 0.0
      %2326 = vmatpush2.msra.mxu0 0.0
      %2327 = vmatprep.subr.mxu0 0.0
      %2328 = vmatpush2.msra.mxu0 0.0
      %2329 = vmatprep.subr.mxu0 0.0
      %2330 = vmatpush2.msra.mxu0 0.0
      %2331 = vmatprep.subr.mxu0 0.0
      %2332 = vmatpush2.msra.mxu0 0.0
      %2333 = vmatprep.subr.mxu0 0.0
      %2334 = vmatpush2.msra.mxu0 0.0
      %2335 = vmatprep.mubr.f32.mxu0 0.0
      %2336 = vmatmul.mubr.f32.gmra.mxu0 %v1124
      %v2337 = vpop.f32.mrf.mxu0
      %v2338 = vadd.f32 0.0, %v2337
      %v2339 = vpop.f32.mrf.mxu0
      %2340 = vmatprep.mubr.f32.mxu0 0.0
      %2341 = vmatmul.mubr.f32.gmra.mxu0 %v1126
      %v2342 = vpop.f32.mrf.mxu0
      %v2343 = vadd.f32 0.0, %v2342
      %v2344 = vpop.f32.mrf.mxu0
      %2345 = vmatprep.mubr.f32.mxu0 0.0
      %2346 = vmatmul.mubr.f32.gmra.mxu0 %v1128
      %v2347 = vpop.f32.mrf.mxu0
      %v2348 = vadd.f32 0.0, %v2347
      %v2349 = vpop.f32.mrf.mxu0
      %2350 = vmatprep.mubr.f32.mxu0 0.0
      %2351 = vmatmul.mubr.f32.gmra.mxu0 %v1130
      %v2352 = vpop.f32.mrf.mxu0
      %v2353 = vadd.f32 0.0, %v2352
      %v2354 = vpop.f32.mrf.mxu0
      %2355 = vmatprep.mubr.f32.mxu0 0.0
      %2356 = vmatmul.mubr.f32.gmra.mxu0 %v1132
      %v2357 = vpop.f32.mrf.mxu0
      %v2358 = vadd.f32 0.0, %v2357
      %v2359 = vpop.f32.mrf.mxu0
      %2360 = vmatprep.mubr.f32.mxu0 0.0
      %2361 = vmatmul.mubr.f32.gmra.mxu0 %v1134
      %v2362 = vpop.f32.mrf.mxu0
      %v2363 = vadd.f32 0.0, %v2362
      %v2364 = vpop.f32.mrf.mxu0
      %2365 = vmatprep.mubr.f32.mxu0 0.0
      %2366 = vmatmul.mubr.f32.gmra.mxu0 %v1136
      %v2367 = vpop.f32.mrf.mxu0
      %v2368 = vadd.f32 0.0, %v2367
      %v2369 = vpop.f32.mrf.mxu0
      %2370 = vmatprep.mubr.f32.mxu0 0.0
      %2371 = vmatmul.mubr.f32.gmra.mxu0 %v1138
      %v2372 = vpop.f32.mrf.mxu0
      %v2373 = vadd.f32 0.0, %v2372
      %v2374 = vpop.f32.mrf.mxu0
      %2375 = vmatprep.mubr.f32.mxu0 0.0
      %2376 = vmatmul.mubr.f32.gmra.mxu0 %v1140
      %v2377 = vpop.f32.mrf.mxu0
      %v2378 = vadd.f32 0.0, %v2377
      %v2379 = vpop.f32.mrf.mxu0
      %2380 = vmatprep.mubr.f32.mxu0 0.0
      %2381 = vmatmul.mubr.f32.gmra.mxu0 %v1142
      %v2382 = vpop.f32.mrf.mxu0
      %v2383 = vadd.f32 0.0, %v2382
      %v2384 = vpop.f32.mrf.mxu0
      %2385 = vmatprep.mubr.f32.mxu0 0.0
      %2386 = vmatmul.mubr.f32.gmra.mxu0 %v1144
      %v2387 = vpop.f32.mrf.mxu0
      %v2388 = vadd.f32 0.0, %v2387
      %v2389 = vpop.f32.mrf.mxu0
      %2390 = vmatprep.mubr.f32.mxu0 0.0
      %2391 = vmatmul.mubr.f32.gmra.mxu0 %v1146
      %v2392 = vpop.f32.mrf.mxu0
      %v2393 = vadd.f32 0.0, %v2392
      %v2394 = vpop.f32.mrf.mxu0
      %2395 = vmatprep.mubr.f32.mxu0 0.0
      %2396 = vmatmul.mubr.f32.gmra.mxu0 %v1148
      %v2397 = vpop.f32.mrf.mxu0
      %v2398 = vadd.f32 0.0, %v2397
      %v2399 = vpop.f32.mrf.mxu0
      %2400 = vmatprep.mubr.f32.mxu0 0.0
      %2401 = vmatmul.mubr.f32.gmra.mxu0 %v1150
      %v2402 = vpop.f32.mrf.mxu0
      %v2403 = vadd.f32 0.0, %v2402
      %v2404 = vpop.f32.mrf.mxu0
      %2405 = vmatprep.mubr.f32.mxu0 0.0
      %2406 = vmatmul.mubr.f32.gmra.mxu0 %v1152
      %v2407 = vpop.f32.mrf.mxu0
      %v2408 = vadd.f32 0.0, %v2407
      %v2409 = vpop.f32.mrf.mxu0
      %2410 = vmatprep.mubr.f32.mxu0 0.0
      %2411 = vmatmul.mubr.f32.gmra.mxu0 %v1154
      %v2412 = vpop.f32.mrf.mxu0
      %v2413 = vadd.f32 0.0, %v2412
      %v2414 = vpop.f32.mrf.mxu0
      %2415 = vmatprep.mubr.f32.mxu0 0.0
      %2416 = vmatmul.mubr.f32.gmra.mxu0 %v1156
      %v2417 = vpop.f32.mrf.mxu0
      %v2418 = vadd.f32 0.0, %v2417
      %v2419 = vpop.f32.mrf.mxu0
      %2420 = vmatprep.mubr.f32.mxu0 0.0
      %2421 = vmatmul.mubr.f32.gmra.mxu0 %v1158
      %v2422 = vpop.f32.mrf.mxu0
      %v2423 = vadd.f32 0.0, %v2422
      %v2424 = vpop.f32.mrf.mxu0
      %2425 = vmatprep.mubr.f32.mxu0 0.0
      %2426 = vmatmul.mubr.f32.gmra.mxu0 %v1160
      %v2427 = vpop.f32.mrf.mxu0
      %v2428 = vadd.f32 0.0, %v2427
      %v2429 = vpop.f32.mrf.mxu0
      %2430 = vmatprep.mubr.f32.mxu0 0.0
      %2431 = vmatmul.mubr.f32.gmra.mxu0 %v1162
      %v2432 = vpop.f32.mrf.mxu0
      %v2433 = vadd.f32 0.0, %v2432
      %v2434 = vpop.f32.mrf.mxu0
      %2435 = vmatprep.mubr.f32.mxu0 0.0
      %2436 = vmatmul.mubr.f32.gmra.mxu0 %v1164
      %v2437 = vpop.f32.mrf.mxu0
      %v2438 = vadd.f32 0.0, %v2437
      %v2439 = vpop.f32.mrf.mxu0
      %2440 = vmatprep.mubr.f32.mxu0 0.0
      %2441 = vmatmul.mubr.f32.gmra.mxu0 %v1166
      %v2442 = vpop.f32.mrf.mxu0
      %v2443 = vadd.f32 0.0, %v2442
      %v2444 = vpop.f32.mrf.mxu0
      %2445 = vmatprep.mubr.f32.mxu0 0.0
      %2446 = vmatmul.mubr.f32.gmra.mxu0 %v1168
      %v2447 = vpop.f32.mrf.mxu0
      %v2448 = vadd.f32 0.0, %v2447
      %v2449 = vpop.f32.mrf.mxu0
      %2450 = vmatprep.mubr.f32.mxu0 0.0
      %2451 = vmatmul.mubr.f32.gmra.mxu0 %v1170
      %v2452 = vpop.f32.mrf.mxu0
      %v2453 = vadd.f32 0.0, %v2452
      %v2454 = vpop.f32.mrf.mxu0
      %2455 = vmatprep.mubr.f32.mxu0 0.0
      %2456 = vmatmul.mubr.f32.gmra.mxu0 %v1172
      %v2457 = vpop.f32.mrf.mxu0
      %v2458 = vadd.f32 0.0, %v2457
      %v2459 = vpop.f32.mrf.mxu0
      %2460 = vmatprep.mubr.f32.mxu0 0.0
      %2461 = vmatmul.mubr.f32.gmra.mxu0 %v1174
      %v2462 = vpop.f32.mrf.mxu0
      %v2463 = vadd.f32 0.0, %v2462
      %v2464 = vpop.f32.mrf.mxu0
      %2465 = vmatprep.mubr.f32.mxu0 0.0
      %2466 = vmatmul.mubr.f32.gmra.mxu0 %v1176
      %v2467 = vpop.f32.mrf.mxu0
      %v2468 = vadd.f32 0.0, %v2467
      %v2469 = vpop.f32.mrf.mxu0
      %2470 = vmatprep.mubr.f32.mxu0 0.0
      %2471 = vmatmul.mubr.f32.gmra.mxu0 %v1178
      %v2472 = vpop.f32.mrf.mxu0
      %v2473 = vadd.f32 0.0, %v2472
      %v2474 = vpop.f32.mrf.mxu0
      %2475 = vmatprep.mubr.f32.mxu0 0.0
      %2476 = vmatmul.mubr.f32.gmra.mxu0 %v1180
      %v2477 = vpop.f32.mrf.mxu0
      %v2478 = vadd.f32 0.0, %v2477
      %v2479 = vpop.f32.mrf.mxu0
      %2480 = vmatprep.mubr.f32.mxu0 0.0
      %2481 = vmatmul.mubr.f32.gmra.mxu0 %v1182
      %v2482 = vpop.f32.mrf.mxu0
      %v2483 = vadd.f32 0.0, %v2482
      %v2484 = vpop.f32.mrf.mxu0
      %2485 = vmatprep.mubr.f32.mxu0 0.0
      %2486 = vmatmul.mubr.f32.gmra.mxu0 %v2264
      %v2487 = vpop.f32.mrf.mxu0
      %v2488 = vadd.f32 0.0, %v2487
      %v2489 = vpop.f32.mrf.mxu0
      %2490 = vmatprep.mubr.f32.mxu0 0.0
      %2491 = vmatmul.mubr.f32.gmra.mxu0 %v2266
      %v2492 = vpop.f32.mrf.mxu0
      %v2493 = vadd.f32 0.0, %v2492
      %v2494 = vpop.f32.mrf.mxu0
      %2495 = vdwg.mxu0
      %v2496 = vld [vmem:[#allocation2] sm:$0xff]
      %v2497 = vld [vmem:[#allocation2 + $0x8] sm:$0xff]
      %v2498 = vld [vmem:[#allocation2 + $0x10] sm:$0xff]
      %v2499 = vld [vmem:[#allocation2 + $0x18] sm:$0xff]
      %v2500 = vld [vmem:[#allocation2 + $0x20] sm:$0xff]
      %v2501 = vld [vmem:[#allocation2 + $0x28] sm:$0xff]
      %v2502 = vld [vmem:[#allocation2 + $0x30] sm:$0xff]
      %v2503 = vld [vmem:[#allocation2 + $0x38] sm:$0xff]
      %v2504 = vld [vmem:[#allocation2 + $0x40] sm:$0xff]
      %v2505 = vld [vmem:[#allocation2 + $0x48] sm:$0xff]
      %v2506 = vld [vmem:[#allocation2 + $0x50] sm:$0xff]
      %v2507 = vld [vmem:[#allocation2 + $0x58] sm:$0xff]
      %v2508 = vld [vmem:[#allocation2 + $0x60] sm:$0xff]
      %v2509 = vld [vmem:[#allocation2 + $0x68] sm:$0xff]
      %v2510 = vld [vmem:[#allocation2 + $0x70] sm:$0xff]
      %v2511 = vld [vmem:[#allocation2 + $0x78] sm:$0xff]
      %v2512 = vld [vmem:[#allocation2 + $0x80] sm:$0xff]
      %v2513 = vld [vmem:[#allocation2 + $0x88] sm:$0xff]
      %v2514 = vld [vmem:[#allocation2 + $0x90] sm:$0xff]
      %v2515 = vld [vmem:[#allocation2 + $0x98] sm:$0xff]
      %v2516 = vld [vmem:[#allocation2 + $0xa0] sm:$0xff]
      %v2517 = vld [vmem:[#allocation2 + $0xa8] sm:$0xff]
      %v2518 = vld [vmem:[#allocation2 + $0xb0] sm:$0xff]
      %v2519 = vld [vmem:[#allocation2 + $0xb8] sm:$0xff]
      %v2520 = vld [vmem:[#allocation2 + $0xc0] sm:$0xff]
      %v2521 = vld [vmem:[#allocation2 + $0xc8] sm:$0xff]
      %v2522 = vld [vmem:[#allocation2 + $0xd0] sm:$0xff]
      %v2523 = vld [vmem:[#allocation2 + $0xd8] sm:$0xff]
      %v2524 = vld [vmem:[#allocation2 + $0xe0] sm:$0xff]
      %v2525 = vld [vmem:[#allocation2 + $0xe8] sm:$0xff]
      %v2526 = vld [vmem:[#allocation2 + $0xf0] sm:$0xff]
      %v2527 = vld [vmem:[#allocation2 + $0xf8] sm:$0xff]
      %v2528 = vadd.f32 %v2496, %v2338
      %v2529 = vadd.f32 %v2497, %v2343
      %v2530 = vadd.f32 %v2498, %v2348
      %v2531 = vadd.f32 %v2499, %v2353
      %v2532 = vadd.f32 %v2500, %v2358
      %v2533 = vadd.f32 %v2501, %v2363
      %v2534 = vadd.f32 %v2502, %v2368
      %v2535 = vadd.f32 %v2503, %v2373
      %v2536 = vadd.f32 %v2504, %v2378
      %v2537 = vadd.f32 %v2505, %v2383
      %v2538 = vadd.f32 %v2506, %v2388
      %v2539 = vadd.f32 %v2507, %v2393
      %v2540 = vadd.f32 %v2508, %v2398
      %v2541 = vadd.f32 %v2509, %v2403
      %v2542 = vadd.f32 %v2510, %v2408
      %v2543 = vadd.f32 %v2511, %v2413
      %v2544 = vadd.f32 %v2512, %v2418
      %v2545 = vadd.f32 %v2513, %v2423
      %v2546 = vadd.f32 %v2514, %v2428
      %v2547 = vadd.f32 %v2515, %v2433
      %v2548 = vadd.f32 %v2516, %v2438
      %v2549 = vadd.f32 %v2517, %v2443
      %v2550 = vadd.f32 %v2518, %v2448
      %v2551 = vadd.f32 %v2519, %v2453
      %v2552 = vadd.f32 %v2520, %v2458
      %v2553 = vadd.f32 %v2521, %v2463
      %v2554 = vadd.f32 %v2522, %v2468
      %v2555 = vadd.f32 %v2523, %v2473
      %v2556 = vadd.f32 %v2524, %v2478
      %v2557 = vadd.f32 %v2525, %v2483
      %v2558 = vadd.f32 %v2526, %v2488
      %v2559 = vadd.f32 %v2527, %v2493
      %2560 = vst.msk [vmem:[#allocation2] sm:$0xff] %vm1085, %v2528
      %2561 = vst.msk [vmem:[#allocation2 + $0x8] sm:$0xff] %vm1085, %v2529
      %2562 = vst.msk [vmem:[#allocation2 + $0x10] sm:$0xff] %vm1085, %v2530
      %2563 = vst.msk [vmem:[#allocation2 + $0x18] sm:$0xff] %vm1085, %v2531
      %2564 = vst.msk [vmem:[#allocation2 + $0x20] sm:$0xff] %vm1085, %v2532
      %2565 = vst.msk [vmem:[#allocation2 + $0x28] sm:$0xff] %vm1085, %v2533
      %2566 = vst.msk [vmem:[#allocation2 + $0x30] sm:$0xff] %vm1085, %v2534
      %2567 = vst.msk [vmem:[#allocation2 + $0x38] sm:$0xff] %vm1085, %v2535
      %2568 = vst.msk [vmem:[#allocation2 + $0x40] sm:$0xff] %vm1085, %v2536
      %2569 = vst.msk [vmem:[#allocation2 + $0x48] sm:$0xff] %vm1085, %v2537
      %2570 = vst.msk [vmem:[#allocation2 + $0x50] sm:$0xff] %vm1085, %v2538
      %2571 = vst.msk [vmem:[#allocation2 + $0x58] sm:$0xff] %vm1085, %v2539
      %2572 = vst.msk [vmem:[#allocation2 + $0x60] sm:$0xff] %vm1085, %v2540
      %2573 = vst.msk [vmem:[#allocation2 + $0x68] sm:$0xff] %vm1085, %v2541
      %2574 = vst.msk [vmem:[#allocation2 + $0x70] sm:$0xff] %vm1085, %v2542
      %2575 = vst.msk [vmem:[#allocation2 + $0x78] sm:$0xff] %vm1085, %v2543
      %2576 = vst.msk [vmem:[#allocation2 + $0x80] sm:$0xff] %vm1085, %v2544
      %2577 = vst.msk [vmem:[#allocation2 + $0x88] sm:$0xff] %vm1085, %v2545
      %2578 = vst.msk [vmem:[#allocation2 + $0x90] sm:$0xff] %vm1085, %v2546
      %2579 = vst.msk [vmem:[#allocation2 + $0x98] sm:$0xff] %vm1085, %v2547
      %2580 = vst.msk [vmem:[#allocation2 + $0xa0] sm:$0xff] %vm1085, %v2548
      %2581 = vst.msk [vmem:[#allocation2 + $0xa8] sm:$0xff] %vm1085, %v2549
      %2582 = vst.msk [vmem:[#allocation2 + $0xb0] sm:$0xff] %vm1085, %v2550
      %2583 = vst.msk [vmem:[#allocation2 + $0xb8] sm:$0xff] %vm1085, %v2551
      %2584 = vst.msk [vmem:[#allocation2 + $0xc0] sm:$0xff] %vm1085, %v2552
      %2585 = vst.msk [vmem:[#allocation2 + $0xc8] sm:$0xff] %vm1085, %v2553
      %2586 = vst.msk [vmem:[#allocation2 + $0xd0] sm:$0xff] %vm1085, %v2554
      %2587 = vst.msk [vmem:[#allocation2 + $0xd8] sm:$0xff] %vm1085, %v2555
      %2588 = vst.msk [vmem:[#allocation2 + $0xe0] sm:$0xff] %vm1085, %v2556
      %2589 = vst.msk [vmem:[#allocation2 + $0xe8] sm:$0xff] %vm1085, %v2557
      %2590 = vst.msk [vmem:[#allocation2 + $0xf0] sm:$0xff] %vm1085, %v2558
      %2591 = vst.msk [vmem:[#allocation2 + $0xf8] sm:$0xff] %vm1085, %v2559
      %s2592 = scalar_lea.vmem %s3, 20
      %v2593 = vld [vmem:[%s2592] sm:$0xf]
      %v2595 = vsel %vm759, %v754, 0
      %v2598 = vsel %vm759, %v755, 0
      %v2601 = vsel %vm856, %v2593, 0
      %2603 = vmatprep.subr.mxu0 0.0
      %2604 = vmatpush1.msra.mxu0 0.0
      %2605 = vmatprep.subr.mxu0 0.0
      %2606 = vmatpush1.msra.mxu0 0.0
      %2607 = vmatprep.subr.mxu0 0.0
      %2608 = vmatpush1.msra.mxu0 0.0
      %2609 = vmatprep.subr.mxu0 0.0
      %2610 = vmatpush1.msra.mxu0 0.0
      %2611 = vmatprep.subr.mxu0 0.0
      %2612 = vmatpush1.msra.mxu0 0.0
      %2613 = vmatprep.subr.mxu0 0.0
      %2614 = vmatpush1.msra.mxu0 0.0
      %2615 = vmatprep.subr.mxu0 0.0
      %2616 = vmatpush1.msra.mxu0 0.0
      %2617 = vmatprep.subr.mxu0 0.0
      %2618 = vmatpush1.msra.mxu0 0.0
      %2619 = vmatprep.subr.mxu0 0.0
      %2620 = vmatpush1.msra.mxu0 0.0
      %2621 = vmatprep.subr.mxu0 0.0
      %2622 = vmatpush1.msra.mxu0 0.0
      %2623 = vmatprep.subr.mxu0 0.0
      %2624 = vmatpush1.msra.mxu0 0.0
      %2625 = vmatprep.subr.mxu0 0.0
      %2626 = vmatpush1.msra.mxu0 0.0
      %2627 = vmatprep.subr.mxu0 0.0
      %2628 = vmatpush1.msra.mxu0 0.0
      %2629 = vmatprep.subr.mxu0 0.0
      %2630 = vmatpush1.msra.mxu0 0.0
      %2631 = vmatprep.subr.mxu0 0.0
      %2632 = vmatpush1.msra.mxu0 0.0
      %2633 = vmatprep.subr.mxu0 0.0
      %2634 = vmatpush1.msra.mxu0 %v2601
      %2635 = vmatprep.subr.mxu0 0.0
      %2636 = vmatpush2.msra.mxu0 0.0
      %2637 = vmatprep.subr.mxu0 0.0
      %2638 = vmatpush2.msra.mxu0 0.0
      %2639 = vmatprep.subr.mxu0 0.0
      %2640 = vmatpush2.msra.mxu0 0.0
      %2641 = vmatprep.subr.mxu0 0.0
      %2642 = vmatpush2.msra.mxu0 0.0
      %2643 = vmatprep.subr.mxu0 0.0
      %2644 = vmatpush2.msra.mxu0 0.0
      %2645 = vmatprep.subr.mxu0 0.0
      %2646 = vmatpush2.msra.mxu0 0.0
      %2647 = vmatprep.subr.mxu0 0.0
      %2648 = vmatpush2.msra.mxu0 0.0
      %2649 = vmatprep.subr.mxu0 0.0
      %2650 = vmatpush2.msra.mxu0 0.0
      %2651 = vmatprep.subr.mxu0 0.0
      %2652 = vmatpush2.msra.mxu0 0.0
      %2653 = vmatprep.subr.mxu0 0.0
      %2654 = vmatpush2.msra.mxu0 0.0
      %2655 = vmatprep.subr.mxu0 0.0
      %2656 = vmatpush2.msra.mxu0 0.0
      %2657 = vmatprep.subr.mxu0 0.0
      %2658 = vmatpush2.msra.mxu0 0.0
      %2659 = vmatprep.subr.mxu0 0.0
      %2660 = vmatpush2.msra.mxu0 0.0
      %2661 = vmatprep.subr.mxu0 0.0
      %2662 = vmatpush2.msra.mxu0 0.0
      %2663 = vmatprep.subr.mxu0 0.0
      %2664 = vmatpush2.msra.mxu0 0.0
      %2665 = vmatprep.subr.mxu0 0.0
      %2666 = vmatpush2.msra.mxu0 0.0
      %2667 = vmatprep.mubr.f32.mxu0 0.0
      %2668 = vmatmul.mubr.f32.gmra.mxu0 %v1517
      %v2669 = vpop.f32.mrf.mxu0
      %v2670 = vadd.f32 0.0, %v2669
      %v2671 = vpop.f32.mrf.mxu0
      %2672 = vmatprep.mubr.f32.mxu0 0.0
      %2673 = vmatmul.mubr.f32.gmra.mxu0 %v1520
      %v2674 = vpop.f32.mrf.mxu0
      %v2675 = vadd.f32 0.0, %v2674
      %v2676 = vpop.f32.mrf.mxu0
      %2677 = vmatprep.mubr.f32.mxu0 0.0
      %2678 = vmatmul.mubr.f32.gmra.mxu0 %v1523
      %v2679 = vpop.f32.mrf.mxu0
      %v2680 = vadd.f32 0.0, %v2679
      %v2681 = vpop.f32.mrf.mxu0
      %2682 = vmatprep.mubr.f32.mxu0 0.0
      %2683 = vmatmul.mubr.f32.gmra.mxu0 %v1526
      %v2684 = vpop.f32.mrf.mxu0
      %v2685 = vadd.f32 0.0, %v2684
      %v2686 = vpop.f32.mrf.mxu0
      %2687 = vmatprep.mubr.f32.mxu0 0.0
      %2688 = vmatmul.mubr.f32.gmra.mxu0 %v1529
      %v2689 = vpop.f32.mrf.mxu0
      %v2690 = vadd.f32 0.0, %v2689
      %v2691 = vpop.f32.mrf.mxu0
      %2692 = vmatprep.mubr.f32.mxu0 0.0
      %2693 = vmatmul.mubr.f32.gmra.mxu0 %v1532
      %v2694 = vpop.f32.mrf.mxu0
      %v2695 = vadd.f32 0.0, %v2694
      %v2696 = vpop.f32.mrf.mxu0
      %2697 = vmatprep.mubr.f32.mxu0 0.0
      %2698 = vmatmul.mubr.f32.gmra.mxu0 %v1535
      %v2699 = vpop.f32.mrf.mxu0
      %v2700 = vadd.f32 0.0, %v2699
      %v2701 = vpop.f32.mrf.mxu0
      %2702 = vmatprep.mubr.f32.mxu0 0.0
      %2703 = vmatmul.mubr.f32.gmra.mxu0 %v1538
      %v2704 = vpop.f32.mrf.mxu0
      %v2705 = vadd.f32 0.0, %v2704
      %v2706 = vpop.f32.mrf.mxu0
      %2707 = vmatprep.mubr.f32.mxu0 0.0
      %2708 = vmatmul.mubr.f32.gmra.mxu0 %v1541
      %v2709 = vpop.f32.mrf.mxu0
      %v2710 = vadd.f32 0.0, %v2709
      %v2711 = vpop.f32.mrf.mxu0
      %2712 = vmatprep.mubr.f32.mxu0 0.0
      %2713 = vmatmul.mubr.f32.gmra.mxu0 %v1544
      %v2714 = vpop.f32.mrf.mxu0
      %v2715 = vadd.f32 0.0, %v2714
      %v2716 = vpop.f32.mrf.mxu0
      %2717 = vmatprep.mubr.f32.mxu0 0.0
      %2718 = vmatmul.mubr.f32.gmra.mxu0 %v1547
      %v2719 = vpop.f32.mrf.mxu0
      %v2720 = vadd.f32 0.0, %v2719
      %v2721 = vpop.f32.mrf.mxu0
      %2722 = vmatprep.mubr.f32.mxu0 0.0
      %2723 = vmatmul.mubr.f32.gmra.mxu0 %v1550
      %v2724 = vpop.f32.mrf.mxu0
      %v2725 = vadd.f32 0.0, %v2724
      %v2726 = vpop.f32.mrf.mxu0
      %2727 = vmatprep.mubr.f32.mxu0 0.0
      %2728 = vmatmul.mubr.f32.gmra.mxu0 %v1553
      %v2729 = vpop.f32.mrf.mxu0
      %v2730 = vadd.f32 0.0, %v2729
      %v2731 = vpop.f32.mrf.mxu0
      %2732 = vmatprep.mubr.f32.mxu0 0.0
      %2733 = vmatmul.mubr.f32.gmra.mxu0 %v1556
      %v2734 = vpop.f32.mrf.mxu0
      %v2735 = vadd.f32 0.0, %v2734
      %v2736 = vpop.f32.mrf.mxu0
      %2737 = vmatprep.mubr.f32.mxu0 0.0
      %2738 = vmatmul.mubr.f32.gmra.mxu0 %v1559
      %v2739 = vpop.f32.mrf.mxu0
      %v2740 = vadd.f32 0.0, %v2739
      %v2741 = vpop.f32.mrf.mxu0
      %2742 = vmatprep.mubr.f32.mxu0 0.0
      %2743 = vmatmul.mubr.f32.gmra.mxu0 %v1562
      %v2744 = vpop.f32.mrf.mxu0
      %v2745 = vadd.f32 0.0, %v2744
      %v2746 = vpop.f32.mrf.mxu0
      %2747 = vmatprep.mubr.f32.mxu0 0.0
      %2748 = vmatmul.mubr.f32.gmra.mxu0 %v1565
      %v2749 = vpop.f32.mrf.mxu0
      %v2750 = vadd.f32 0.0, %v2749
      %v2751 = vpop.f32.mrf.mxu0
      %2752 = vmatprep.mubr.f32.mxu0 0.0
      %2753 = vmatmul.mubr.f32.gmra.mxu0 %v1568
      %v2754 = vpop.f32.mrf.mxu0
      %v2755 = vadd.f32 0.0, %v2754
      %v2756 = vpop.f32.mrf.mxu0
      %2757 = vmatprep.mubr.f32.mxu0 0.0
      %2758 = vmatmul.mubr.f32.gmra.mxu0 %v1571
      %v2759 = vpop.f32.mrf.mxu0
      %v2760 = vadd.f32 0.0, %v2759
      %v2761 = vpop.f32.mrf.mxu0
      %2762 = vmatprep.mubr.f32.mxu0 0.0
      %2763 = vmatmul.mubr.f32.gmra.mxu0 %v1574
      %v2764 = vpop.f32.mrf.mxu0
      %v2765 = vadd.f32 0.0, %v2764
      %v2766 = vpop.f32.mrf.mxu0
      %2767 = vmatprep.mubr.f32.mxu0 0.0
      %2768 = vmatmul.mubr.f32.gmra.mxu0 %v1577
      %v2769 = vpop.f32.mrf.mxu0
      %v2770 = vadd.f32 0.0, %v2769
      %v2771 = vpop.f32.mrf.mxu0
      %2772 = vmatprep.mubr.f32.mxu0 0.0
      %2773 = vmatmul.mubr.f32.gmra.mxu0 %v1580
      %v2774 = vpop.f32.mrf.mxu0
      %v2775 = vadd.f32 0.0, %v2774
      %v2776 = vpop.f32.mrf.mxu0
      %2777 = vmatprep.mubr.f32.mxu0 0.0
      %2778 = vmatmul.mubr.f32.gmra.mxu0 %v1583
      %v2779 = vpop.f32.mrf.mxu0
      %v2780 = vadd.f32 0.0, %v2779
      %v2781 = vpop.f32.mrf.mxu0
      %2782 = vmatprep.mubr.f32.mxu0 0.0
      %2783 = vmatmul.mubr.f32.gmra.mxu0 %v1586
      %v2784 = vpop.f32.mrf.mxu0
      %v2785 = vadd.f32 0.0, %v2784
      %v2786 = vpop.f32.mrf.mxu0
      %2787 = vmatprep.mubr.f32.mxu0 0.0
      %2788 = vmatmul.mubr.f32.gmra.mxu0 %v1589
      %v2789 = vpop.f32.mrf.mxu0
      %v2790 = vadd.f32 0.0, %v2789
      %v2791 = vpop.f32.mrf.mxu0
      %2792 = vmatprep.mubr.f32.mxu0 0.0
      %2793 = vmatmul.mubr.f32.gmra.mxu0 %v1592
      %v2794 = vpop.f32.mrf.mxu0
      %v2795 = vadd.f32 0.0, %v2794
      %v2796 = vpop.f32.mrf.mxu0
      %2797 = vmatprep.mubr.f32.mxu0 0.0
      %2798 = vmatmul.mubr.f32.gmra.mxu0 %v1595
      %v2799 = vpop.f32.mrf.mxu0
      %v2800 = vadd.f32 0.0, %v2799
      %v2801 = vpop.f32.mrf.mxu0
      %2802 = vmatprep.mubr.f32.mxu0 0.0
      %2803 = vmatmul.mubr.f32.gmra.mxu0 %v1598
      %v2804 = vpop.f32.mrf.mxu0
      %v2805 = vadd.f32 0.0, %v2804
      %v2806 = vpop.f32.mrf.mxu0
      %2807 = vmatprep.mubr.f32.mxu0 0.0
      %2808 = vmatmul.mubr.f32.gmra.mxu0 %v1601
      %v2809 = vpop.f32.mrf.mxu0
      %v2810 = vadd.f32 0.0, %v2809
      %v2811 = vpop.f32.mrf.mxu0
      %2812 = vmatprep.mubr.f32.mxu0 0.0
      %2813 = vmatmul.mubr.f32.gmra.mxu0 %v1604
      %v2814 = vpop.f32.mrf.mxu0
      %v2815 = vadd.f32 0.0, %v2814
      %v2816 = vpop.f32.mrf.mxu0
      %2817 = vmatprep.mubr.f32.mxu0 0.0
      %2818 = vmatmul.mubr.f32.gmra.mxu0 %v2595
      %v2819 = vpop.f32.mrf.mxu0
      %v2820 = vadd.f32 0.0, %v2819
      %v2821 = vpop.f32.mrf.mxu0
      %2822 = vmatprep.mubr.f32.mxu0 0.0
      %2823 = vmatmul.mubr.f32.gmra.mxu0 %v2598
      %v2824 = vpop.f32.mrf.mxu0
      %v2825 = vadd.f32 0.0, %v2824
      %v2826 = vpop.f32.mrf.mxu0
      %2827 = vdwg.mxu0
      %v2828 = vld [vmem:[#allocation2] sm:$0xff]
      %v2829 = vld [vmem:[#allocation2 + $0x8] sm:$0xff]
      %v2830 = vld [vmem:[#allocation2 + $0x10] sm:$0xff]
      %v2831 = vld [vmem:[#allocation2 + $0x18] sm:$0xff]
      %v2832 = vld [vmem:[#allocation2 + $0x20] sm:$0xff]
      %v2833 = vld [vmem:[#allocation2 + $0x28] sm:$0xff]
      %v2834 = vld [vmem:[#allocation2 + $0x30] sm:$0xff]
      %v2835 = vld [vmem:[#allocation2 + $0x38] sm:$0xff]
      %v2836 = vld [vmem:[#allocation2 + $0x40] sm:$0xff]
      %v2837 = vld [vmem:[#allocation2 + $0x48] sm:$0xff]
      %v2838 = vld [vmem:[#allocation2 + $0x50] sm:$0xff]
      %v2839 = vld [vmem:[#allocation2 + $0x58] sm:$0xff]
      %v2840 = vld [vmem:[#allocation2 + $0x60] sm:$0xff]
      %v2841 = vld [vmem:[#allocation2 + $0x68] sm:$0xff]
      %v2842 = vld [vmem:[#allocation2 + $0x70] sm:$0xff]
      %v2843 = vld [vmem:[#allocation2 + $0x78] sm:$0xff]
      %v2844 = vld [vmem:[#allocation2 + $0x80] sm:$0xff]
      %v2845 = vld [vmem:[#allocation2 + $0x88] sm:$0xff]
      %v2846 = vld [vmem:[#allocation2 + $0x90] sm:$0xff]
      %v2847 = vld [vmem:[#allocation2 + $0x98] sm:$0xff]
      %v2848 = vld [vmem:[#allocation2 + $0xa0] sm:$0xff]
      %v2849 = vld [vmem:[#allocation2 + $0xa8] sm:$0xff]
      %v2850 = vld [vmem:[#allocation2 + $0xb0] sm:$0xff]
      %v2851 = vld [vmem:[#allocation2 + $0xb8] sm:$0xff]
      %v2852 = vld [vmem:[#allocation2 + $0xc0] sm:$0xff]
      %v2853 = vld [vmem:[#allocation2 + $0xc8] sm:$0xff]
      %v2854 = vld [vmem:[#allocation2 + $0xd0] sm:$0xff]
      %v2855 = vld [vmem:[#allocation2 + $0xd8] sm:$0xff]
      %v2856 = vld [vmem:[#allocation2 + $0xe0] sm:$0xff]
      %v2857 = vld [vmem:[#allocation2 + $0xe8] sm:$0xff]
      %v2858 = vld [vmem:[#allocation2 + $0xf0] sm:$0xff]
      %v2859 = vld [vmem:[#allocation2 + $0xf8] sm:$0xff]
      %v2860 = vadd.f32 %v2828, %v2670
      %v2861 = vadd.f32 %v2829, %v2675
      %v2862 = vadd.f32 %v2830, %v2680
      %v2863 = vadd.f32 %v2831, %v2685
      %v2864 = vadd.f32 %v2832, %v2690
      %v2865 = vadd.f32 %v2833, %v2695
      %v2866 = vadd.f32 %v2834, %v2700
      %v2867 = vadd.f32 %v2835, %v2705
      %v2868 = vadd.f32 %v2836, %v2710
      %v2869 = vadd.f32 %v2837, %v2715
      %v2870 = vadd.f32 %v2838, %v2720
      %v2871 = vadd.f32 %v2839, %v2725
      %v2872 = vadd.f32 %v2840, %v2730
      %v2873 = vadd.f32 %v2841, %v2735
      %v2874 = vadd.f32 %v2842, %v2740
      %v2875 = vadd.f32 %v2843, %v2745
      %v2876 = vadd.f32 %v2844, %v2750
      %v2877 = vadd.f32 %v2845, %v2755
      %v2878 = vadd.f32 %v2846, %v2760
      %v2879 = vadd.f32 %v2847, %v2765
      %v2880 = vadd.f32 %v2848, %v2770
      %v2881 = vadd.f32 %v2849, %v2775
      %v2882 = vadd.f32 %v2850, %v2780
      %v2883 = vadd.f32 %v2851, %v2785
      %v2884 = vadd.f32 %v2852, %v2790
      %v2885 = vadd.f32 %v2853, %v2795
      %v2886 = vadd.f32 %v2854, %v2800
      %v2887 = vadd.f32 %v2855, %v2805
      %v2888 = vadd.f32 %v2856, %v2810
      %v2889 = vadd.f32 %v2857, %v2815
      %v2890 = vadd.f32 %v2858, %v2820
      %v2891 = vadd.f32 %v2859, %v2825
      %2892 = vst.msk [vmem:[#allocation2] sm:$0xff] %vm1085, %v2860
      %2893 = vst.msk [vmem:[#allocation2 + $0x8] sm:$0xff] %vm1085, %v2861
      %2894 = vst.msk [vmem:[#allocation2 + $0x10] sm:$0xff] %vm1085, %v2862
      %2895 = vst.msk [vmem:[#allocation2 + $0x18] sm:$0xff] %vm1085, %v2863
      %2896 = vst.msk [vmem:[#allocation2 + $0x20] sm:$0xff] %vm1085, %v2864
      %2897 = vst.msk [vmem:[#allocation2 + $0x28] sm:$0xff] %vm1085, %v2865
      %2898 = vst.msk [vmem:[#allocation2 + $0x30] sm:$0xff] %vm1085, %v2866
      %2899 = vst.msk [vmem:[#allocation2 + $0x38] sm:$0xff] %vm1085, %v2867
      %2900 = vst.msk [vmem:[#allocation2 + $0x40] sm:$0xff] %vm1085, %v2868
      %2901 = vst.msk [vmem:[#allocation2 + $0x48] sm:$0xff] %vm1085, %v2869
      %2902 = vst.msk [vmem:[#allocation2 + $0x50] sm:$0xff] %vm1085, %v2870
      %2903 = vst.msk [vmem:[#allocation2 + $0x58] sm:$0xff] %vm1085, %v2871
      %2904 = vst.msk [vmem:[#allocation2 + $0x60] sm:$0xff] %vm1085, %v2872
      %2905 = vst.msk [vmem:[#allocation2 + $0x68] sm:$0xff] %vm1085, %v2873
      %2906 = vst.msk [vmem:[#allocation2 + $0x70] sm:$0xff] %vm1085, %v2874
      %2907 = vst.msk [vmem:[#allocation2 + $0x78] sm:$0xff] %vm1085, %v2875
      %2908 = vst.msk [vmem:[#allocation2 + $0x80] sm:$0xff] %vm1085, %v2876
      %2909 = vst.msk [vmem:[#allocation2 + $0x88] sm:$0xff] %vm1085, %v2877
      %2910 = vst.msk [vmem:[#allocation2 + $0x90] sm:$0xff] %vm1085, %v2878
      %2911 = vst.msk [vmem:[#allocation2 + $0x98] sm:$0xff] %vm1085, %v2879
      %2912 = vst.msk [vmem:[#allocation2 + $0xa0] sm:$0xff] %vm1085, %v2880
      %2913 = vst.msk [vmem:[#allocation2 + $0xa8] sm:$0xff] %vm1085, %v2881
      %2914 = vst.msk [vmem:[#allocation2 + $0xb0] sm:$0xff] %vm1085, %v2882
      %2915 = vst.msk [vmem:[#allocation2 + $0xb8] sm:$0xff] %vm1085, %v2883
      %2916 = vst.msk [vmem:[#allocation2 + $0xc0] sm:$0xff] %vm1085, %v2884
      %2917 = vst.msk [vmem:[#allocation2 + $0xc8] sm:$0xff] %vm1085, %v2885
      %2918 = vst.msk [vmem:[#allocation2 + $0xd0] sm:$0xff] %vm1085, %v2886
      %2919 = vst.msk [vmem:[#allocation2 + $0xd8] sm:$0xff] %vm1085, %v2887
      %2920 = vst.msk [vmem:[#allocation2 + $0xe0] sm:$0xff] %vm1085, %v2888
      %2921 = vst.msk [vmem:[#allocation2 + $0xe8] sm:$0xff] %vm1085, %v2889
      %2922 = vst.msk [vmem:[#allocation2 + $0xf0] sm:$0xff] %vm1085, %v2890
      %2923 = vst.msk [vmem:[#allocation2 + $0xf8] sm:$0xff] %vm1085, %v2891
      %s2924 = scalar_lea.vmem %s3, 24
      %v2925 = vld [vmem:[%s2924] sm:$0xf]
      %v2927 = vsel %vm759, %v604, 0
      %v2930 = vsel %vm759, %v605, 0
      %v2933 = vsel %vm856, %v2925, 0
      %2935 = vmatprep.subr.mxu0 0.0
      %2936 = vmatpush1.msra.mxu0 0.0
      %2937 = vmatprep.subr.mxu0 0.0
      %2938 = vmatpush1.msra.mxu0 0.0
      %2939 = vmatprep.subr.mxu0 0.0
      %2940 = vmatpush1.msra.mxu0 0.0
      %2941 = vmatprep.subr.mxu0 0.0
      %2942 = vmatpush1.msra.mxu0 0.0
      %2943 = vmatprep.subr.mxu0 0.0
      %2944 = vmatpush1.msra.mxu0 0.0
      %2945 = vmatprep.subr.mxu0 0.0
      %2946 = vmatpush1.msra.mxu0 0.0
      %2947 = vmatprep.subr.mxu0 0.0
      %2948 = vmatpush1.msra.mxu0 0.0
      %2949 = vmatprep.subr.mxu0 0.0
      %2950 = vmatpush1.msra.mxu0 0.0
      %2951 = vmatprep.subr.mxu0 0.0
      %2952 = vmatpush1.msra.mxu0 0.0
      %2953 = vmatprep.subr.mxu0 0.0
      %2954 = vmatpush1.msra.mxu0 0.0
      %2955 = vmatprep.subr.mxu0 0.0
      %2956 = vmatpush1.msra.mxu0 0.0
      %2957 = vmatprep.subr.mxu0 0.0
      %2958 = vmatpush1.msra.mxu0 0.0
      %2959 = vmatprep.subr.mxu0 0.0
      %2960 = vmatpush1.msra.mxu0 0.0
      %2961 = vmatprep.subr.mxu0 0.0
      %2962 = vmatpush1.msra.mxu0 0.0
      %2963 = vmatprep.subr.mxu0 0.0
      %2964 = vmatpush1.msra.mxu0 0.0
      %2965 = vmatprep.subr.mxu0 0.0
      %2966 = vmatpush1.msra.mxu0 %v2933
      %2967 = vmatprep.subr.mxu0 0.0
      %2968 = vmatpush2.msra.mxu0 0.0
      %2969 = vmatprep.subr.mxu0 0.0
      %2970 = vmatpush2.msra.mxu0 0.0
      %2971 = vmatprep.subr.mxu0 0.0
      %2972 = vmatpush2.msra.mxu0 0.0
      %2973 = vmatprep.subr.mxu0 0.0
      %2974 = vmatpush2.msra.mxu0 0.0
      %2975 = vmatprep.subr.mxu0 0.0
      %2976 = vmatpush2.msra.mxu0 0.0
      %2977 = vmatprep.subr.mxu0 0.0
      %2978 = vmatpush2.msra.mxu0 0.0
      %2979 = vmatprep.subr.mxu0 0.0
      %2980 = vmatpush2.msra.mxu0 0.0
      %2981 = vmatprep.subr.mxu0 0.0
      %2982 = vmatpush2.msra.mxu0 0.0
      %2983 = vmatprep.subr.mxu0 0.0
      %2984 = vmatpush2.msra.mxu0 0.0
      %2985 = vmatprep.subr.mxu0 0.0
      %2986 = vmatpush2.msra.mxu0 0.0
      %2987 = vmatprep.subr.mxu0 0.0
      %2988 = vmatpush2.msra.mxu0 0.0
      %2989 = vmatprep.subr.mxu0 0.0
      %2990 = vmatpush2.msra.mxu0 0.0
      %2991 = vmatprep.subr.mxu0 0.0
      %2992 = vmatpush2.msra.mxu0 0.0
      %2993 = vmatprep.subr.mxu0 0.0
      %2994 = vmatpush2.msra.mxu0 0.0
      %2995 = vmatprep.subr.mxu0 0.0
      %2996 = vmatpush2.msra.mxu0 0.0
      %2997 = vmatprep.subr.mxu0 0.0
      %2998 = vmatpush2.msra.mxu0 0.0
      %2999 = vmatprep.mubr.f32.mxu0 0.0
      %3000 = vmatmul.mubr.f32.gmra.mxu0 %v773
      %v3001 = vpop.f32.mrf.mxu0
      %v3002 = vadd.f32 0.0, %v3001
      %v3003 = vpop.f32.mrf.mxu0
      %3004 = vmatprep.mubr.f32.mxu0 0.0
      %3005 = vmatmul.mubr.f32.gmra.mxu0 %v776
      %v3006 = vpop.f32.mrf.mxu0
      %v3007 = vadd.f32 0.0, %v3006
      %v3008 = vpop.f32.mrf.mxu0
      %3009 = vmatprep.mubr.f32.mxu0 0.0
      %3010 = vmatmul.mubr.f32.gmra.mxu0 %v779
      %v3011 = vpop.f32.mrf.mxu0
      %v3012 = vadd.f32 0.0, %v3011
      %v3013 = vpop.f32.mrf.mxu0
      %3014 = vmatprep.mubr.f32.mxu0 0.0
      %3015 = vmatmul.mubr.f32.gmra.mxu0 %v782
      %v3016 = vpop.f32.mrf.mxu0
      %v3017 = vadd.f32 0.0, %v3016
      %v3018 = vpop.f32.mrf.mxu0
      %3019 = vmatprep.mubr.f32.mxu0 0.0
      %3020 = vmatmul.mubr.f32.gmra.mxu0 %v785
      %v3021 = vpop.f32.mrf.mxu0
      %v3022 = vadd.f32 0.0, %v3021
      %v3023 = vpop.f32.mrf.mxu0
      %3024 = vmatprep.mubr.f32.mxu0 0.0
      %3025 = vmatmul.mubr.f32.gmra.mxu0 %v788
      %v3026 = vpop.f32.mrf.mxu0
      %v3027 = vadd.f32 0.0, %v3026
      %v3028 = vpop.f32.mrf.mxu0
      %3029 = vmatprep.mubr.f32.mxu0 0.0
      %3030 = vmatmul.mubr.f32.gmra.mxu0 %v791
      %v3031 = vpop.f32.mrf.mxu0
      %v3032 = vadd.f32 0.0, %v3031
      %v3033 = vpop.f32.mrf.mxu0
      %3034 = vmatprep.mubr.f32.mxu0 0.0
      %3035 = vmatmul.mubr.f32.gmra.mxu0 %v794
      %v3036 = vpop.f32.mrf.mxu0
      %v3037 = vadd.f32 0.0, %v3036
      %v3038 = vpop.f32.mrf.mxu0
      %3039 = vmatprep.mubr.f32.mxu0 0.0
      %3040 = vmatmul.mubr.f32.gmra.mxu0 %v797
      %v3041 = vpop.f32.mrf.mxu0
      %v3042 = vadd.f32 0.0, %v3041
      %v3043 = vpop.f32.mrf.mxu0
      %3044 = vmatprep.mubr.f32.mxu0 0.0
      %3045 = vmatmul.mubr.f32.gmra.mxu0 %v800
      %v3046 = vpop.f32.mrf.mxu0
      %v3047 = vadd.f32 0.0, %v3046
      %v3048 = vpop.f32.mrf.mxu0
      %3049 = vmatprep.mubr.f32.mxu0 0.0
      %3050 = vmatmul.mubr.f32.gmra.mxu0 %v803
      %v3051 = vpop.f32.mrf.mxu0
      %v3052 = vadd.f32 0.0, %v3051
      %v3053 = vpop.f32.mrf.mxu0
      %3054 = vmatprep.mubr.f32.mxu0 0.0
      %3055 = vmatmul.mubr.f32.gmra.mxu0 %v806
      %v3056 = vpop.f32.mrf.mxu0
      %v3057 = vadd.f32 0.0, %v3056
      %v3058 = vpop.f32.mrf.mxu0
      %3059 = vmatprep.mubr.f32.mxu0 0.0
      %3060 = vmatmul.mubr.f32.gmra.mxu0 %v809
      %v3061 = vpop.f32.mrf.mxu0
      %v3062 = vadd.f32 0.0, %v3061
      %v3063 = vpop.f32.mrf.mxu0
      %3064 = vmatprep.mubr.f32.mxu0 0.0
      %3065 = vmatmul.mubr.f32.gmra.mxu0 %v812
      %v3066 = vpop.f32.mrf.mxu0
      %v3067 = vadd.f32 0.0, %v3066
      %v3068 = vpop.f32.mrf.mxu0
      %3069 = vmatprep.mubr.f32.mxu0 0.0
      %3070 = vmatmul.mubr.f32.gmra.mxu0 %v815
      %v3071 = vpop.f32.mrf.mxu0
      %v3072 = vadd.f32 0.0, %v3071
      %v3073 = vpop.f32.mrf.mxu0
      %3074 = vmatprep.mubr.f32.mxu0 0.0
      %3075 = vmatmul.mubr.f32.gmra.mxu0 %v818
      %v3076 = vpop.f32.mrf.mxu0
      %v3077 = vadd.f32 0.0, %v3076
      %v3078 = vpop.f32.mrf.mxu0
      %3079 = vmatprep.mubr.f32.mxu0 0.0
      %3080 = vmatmul.mubr.f32.gmra.mxu0 %v821
      %v3081 = vpop.f32.mrf.mxu0
      %v3082 = vadd.f32 0.0, %v3081
      %v3083 = vpop.f32.mrf.mxu0
      %3084 = vmatprep.mubr.f32.mxu0 0.0
      %3085 = vmatmul.mubr.f32.gmra.mxu0 %v824
      %v3086 = vpop.f32.mrf.mxu0
      %v3087 = vadd.f32 0.0, %v3086
      %v3088 = vpop.f32.mrf.mxu0
      %3089 = vmatprep.mubr.f32.mxu0 0.0
      %3090 = vmatmul.mubr.f32.gmra.mxu0 %v827
      %v3091 = vpop.f32.mrf.mxu0
      %v3092 = vadd.f32 0.0, %v3091
      %v3093 = vpop.f32.mrf.mxu0
      %3094 = vmatprep.mubr.f32.mxu0 0.0
      %3095 = vmatmul.mubr.f32.gmra.mxu0 %v830
      %v3096 = vpop.f32.mrf.mxu0
      %v3097 = vadd.f32 0.0, %v3096
      %v3098 = vpop.f32.mrf.mxu0
      %3099 = vmatprep.mubr.f32.mxu0 0.0
      %3100 = vmatmul.mubr.f32.gmra.mxu0 %v833
      %v3101 = vpop.f32.mrf.mxu0
      %v3102 = vadd.f32 0.0, %v3101
      %v3103 = vpop.f32.mrf.mxu0
      %3104 = vmatprep.mubr.f32.mxu0 0.0
      %3105 = vmatmul.mubr.f32.gmra.mxu0 %v836
      %v3106 = vpop.f32.mrf.mxu0
      %v3107 = vadd.f32 0.0, %v3106
      %v3108 = vpop.f32.mrf.mxu0
      %3109 = vmatprep.mubr.f32.mxu0 0.0
      %3110 = vmatmul.mubr.f32.gmra.mxu0 %v839
      %v3111 = vpop.f32.mrf.mxu0
      %v3112 = vadd.f32 0.0, %v3111
      %v3113 = vpop.f32.mrf.mxu0
      %3114 = vmatprep.mubr.f32.mxu0 0.0
      %3115 = vmatmul.mubr.f32.gmra.mxu0 %v842
      %v3116 = vpop.f32.mrf.mxu0
      %v3117 = vadd.f32 0.0, %v3116
      %v3118 = vpop.f32.mrf.mxu0
      %3119 = vmatprep.mubr.f32.mxu0 0.0
      %3120 = vmatmul.mubr.f32.gmra.mxu0 %v845
      %v3121 = vpop.f32.mrf.mxu0
      %v3122 = vadd.f32 0.0, %v3121
      %v3123 = vpop.f32.mrf.mxu0
      %3124 = vmatprep.mubr.f32.mxu0 0.0
      %3125 = vmatmul.mubr.f32.gmra.mxu0 %v848
      %v3126 = vpop.f32.mrf.mxu0
      %v3127 = vadd.f32 0.0, %v3126
      %v3128 = vpop.f32.mrf.mxu0
      %3129 = vmatprep.mubr.f32.mxu0 0.0
      %3130 = vmatmul.mubr.f32.gmra.mxu0 %v851
      %v3131 = vpop.f32.mrf.mxu0
      %v3132 = vadd.f32 0.0, %v3131
      %v3133 = vpop.f32.mrf.mxu0
      %3134 = vmatprep.mubr.f32.mxu0 0.0
      %3135 = vmatmul.mubr.f32.gmra.mxu0 %v854
      %v3136 = vpop.f32.mrf.mxu0
      %v3137 = vadd.f32 0.0, %v3136
      %v3138 = vpop.f32.mrf.mxu0
      %3139 = vmatprep.mubr.f32.mxu0 0.0
      %3140 = vmatmul.mubr.f32.gmra.mxu0 %v1933
      %v3141 = vpop.f32.mrf.mxu0
      %v3142 = vadd.f32 0.0, %v3141
      %v3143 = vpop.f32.mrf.mxu0
      %3144 = vmatprep.mubr.f32.mxu0 0.0
      %3145 = vmatmul.mubr.f32.gmra.mxu0 %v1936
      %v3146 = vpop.f32.mrf.mxu0
      %v3147 = vadd.f32 0.0, %v3146
      %v3148 = vpop.f32.mrf.mxu0
      %3149 = vmatprep.mubr.f32.mxu0 0.0
      %3150 = vmatmul.mubr.f32.gmra.mxu0 %v2927
      %v3151 = vpop.f32.mrf.mxu0
      %v3152 = vadd.f32 0.0, %v3151
      %v3153 = vpop.f32.mrf.mxu0
      %3154 = vmatprep.mubr.f32.mxu0 0.0
      %3155 = vmatmul.mubr.f32.gmra.mxu0 %v2930
      %v3156 = vpop.f32.mrf.mxu0
      %v3157 = vadd.f32 0.0, %v3156
      %v3158 = vpop.f32.mrf.mxu0
      %3159 = vdwg.mxu0
      %v3160 = vld [vmem:[#allocation2] sm:$0xff]
      %v3161 = vld [vmem:[#allocation2 + $0x8] sm:$0xff]
      %v3162 = vld [vmem:[#allocation2 + $0x10] sm:$0xff]
      %v3163 = vld [vmem:[#allocation2 + $0x18] sm:$0xff]
      %v3164 = vld [vmem:[#allocation2 + $0x20] sm:$0xff]
      %v3165 = vld [vmem:[#allocation2 + $0x28] sm:$0xff]
      %v3166 = vld [vmem:[#allocation2 + $0x30] sm:$0xff]
      %v3167 = vld [vmem:[#allocation2 + $0x38] sm:$0xff]
      %v3168 = vld [vmem:[#allocation2 + $0x40] sm:$0xff]
      %v3169 = vld [vmem:[#allocation2 + $0x48] sm:$0xff]
      %v3170 = vld [vmem:[#allocation2 + $0x50] sm:$0xff]
      %v3171 = vld [vmem:[#allocation2 + $0x58] sm:$0xff]
      %v3172 = vld [vmem:[#allocation2 + $0x60] sm:$0xff]
      %v3173 = vld [vmem:[#allocation2 + $0x68] sm:$0xff]
      %v3174 = vld [vmem:[#allocation2 + $0x70] sm:$0xff]
      %v3175 = vld [vmem:[#allocation2 + $0x78] sm:$0xff]
      %v3176 = vld [vmem:[#allocation2 + $0x80] sm:$0xff]
      %v3177 = vld [vmem:[#allocation2 + $0x88] sm:$0xff]
      %v3178 = vld [vmem:[#allocation2 + $0x90] sm:$0xff]
      %v3179 = vld [vmem:[#allocation2 + $0x98] sm:$0xff]
      %v3180 = vld [vmem:[#allocation2 + $0xa0] sm:$0xff]
      %v3181 = vld [vmem:[#allocation2 + $0xa8] sm:$0xff]
      %v3182 = vld [vmem:[#allocation2 + $0xb0] sm:$0xff]
      %v3183 = vld [vmem:[#allocation2 + $0xb8] sm:$0xff]
      %v3184 = vld [vmem:[#allocation2 + $0xc0] sm:$0xff]
      %v3185 = vld [vmem:[#allocation2 + $0xc8] sm:$0xff]
      %v3186 = vld [vmem:[#allocation2 + $0xd0] sm:$0xff]
      %v3187 = vld [vmem:[#allocation2 + $0xd8] sm:$0xff]
      %v3188 = vld [vmem:[#allocation2 + $0xe0] sm:$0xff]
      %v3189 = vld [vmem:[#allocation2 + $0xe8] sm:$0xff]
      %v3190 = vld [vmem:[#allocation2 + $0xf0] sm:$0xff]
      %v3191 = vld [vmem:[#allocation2 + $0xf8] sm:$0xff]
      %v3192 = vadd.f32 %v3160, %v3002
      %v3193 = vadd.f32 %v3161, %v3007
      %v3194 = vadd.f32 %v3162, %v3012
      %v3195 = vadd.f32 %v3163, %v3017
      %v3196 = vadd.f32 %v3164, %v3022
      %v3197 = vadd.f32 %v3165, %v3027
      %v3198 = vadd.f32 %v3166, %v3032
      %v3199 = vadd.f32 %v3167, %v3037
      %v3200 = vadd.f32 %v3168, %v3042
      %v3201 = vadd.f32 %v3169, %v3047
      %v3202 = vadd.f32 %v3170, %v3052
      %v3203 = vadd.f32 %v3171, %v3057
      %v3204 = vadd.f32 %v3172, %v3062
      %v3205 = vadd.f32 %v3173, %v3067
      %v3206 = vadd.f32 %v3174, %v3072
      %v3207 = vadd.f32 %v3175, %v3077
      %v3208 = vadd.f32 %v3176, %v3082
      %v3209 = vadd.f32 %v3177, %v3087
      %v3210 = vadd.f32 %v3178, %v3092
      %v3211 = vadd.f32 %v3179, %v3097
      %v3212 = vadd.f32 %v3180, %v3102
      %v3213 = vadd.f32 %v3181, %v3107
      %v3214 = vadd.f32 %v3182, %v3112
      %v3215 = vadd.f32 %v3183, %v3117
      %v3216 = vadd.f32 %v3184, %v3122
      %v3217 = vadd.f32 %v3185, %v3127
      %v3218 = vadd.f32 %v3186, %v3132
      %v3219 = vadd.f32 %v3187, %v3137
      %v3220 = vadd.f32 %v3188, %v3142
      %v3221 = vadd.f32 %v3189, %v3147
      %v3222 = vadd.f32 %v3190, %v3152
      %v3223 = vadd.f32 %v3191, %v3157
      %3224 = vst.msk [vmem:[#allocation2] sm:$0xff] %vm1085, %v3192
      %3225 = vst.msk [vmem:[#allocation2 + $0x8] sm:$0xff] %vm1085, %v3193
      %3226 = vst.msk [vmem:[#allocation2 + $0x10] sm:$0xff] %vm1085, %v3194
      %3227 = vst.msk [vmem:[#allocation2 + $0x18] sm:$0xff] %vm1085, %v3195
      %3228 = vst.msk [vmem:[#allocation2 + $0x20] sm:$0xff] %vm1085, %v3196
      %3229 = vst.msk [vmem:[#allocation2 + $0x28] sm:$0xff] %vm1085, %v3197
      %3230 = vst.msk [vmem:[#allocation2 + $0x30] sm:$0xff] %vm1085, %v3198
      %3231 = vst.msk [vmem:[#allocation2 + $0x38] sm:$0xff] %vm1085, %v3199
      %3232 = vst.msk [vmem:[#allocation2 + $0x40] sm:$0xff] %vm1085, %v3200
      %3233 = vst.msk [vmem:[#allocation2 + $0x48] sm:$0xff] %vm1085, %v3201
      %3234 = vst.msk [vmem:[#allocation2 + $0x50] sm:$0xff] %vm1085, %v3202
      %3235 = vst.msk [vmem:[#allocation2 + $0x58] sm:$0xff] %vm1085, %v3203
      %3236 = vst.msk [vmem:[#allocation2 + $0x60] sm:$0xff] %vm1085, %v3204
      %3237 = vst.msk [vmem:[#allocation2 + $0x68] sm:$0xff] %vm1085, %v3205
      %3238 = vst.msk [vmem:[#allocation2 + $0x70] sm:$0xff] %vm1085, %v3206
      %3239 = vst.msk [vmem:[#allocation2 + $0x78] sm:$0xff] %vm1085, %v3207
      %3240 = vst.msk [vmem:[#allocation2 + $0x80] sm:$0xff] %vm1085, %v3208
      %3241 = vst.msk [vmem:[#allocation2 + $0x88] sm:$0xff] %vm1085, %v3209
      %3242 = vst.msk [vmem:[#allocation2 + $0x90] sm:$0xff] %vm1085, %v3210
      %3243 = vst.msk [vmem:[#allocation2 + $0x98] sm:$0xff] %vm1085, %v3211
      %3244 = vst.msk [vmem:[#allocation2 + $0xa0] sm:$0xff] %vm1085, %v3212
      %3245 = vst.msk [vmem:[#allocation2 + $0xa8] sm:$0xff] %vm1085, %v3213
      %3246 = vst.msk [vmem:[#allocation2 + $0xb0] sm:$0xff] %vm1085, %v3214
      %3247 = vst.msk [vmem:[#allocation2 + $0xb8] sm:$0xff] %vm1085, %v3215
      %3248 = vst.msk [vmem:[#allocation2 + $0xc0] sm:$0xff] %vm1085, %v3216
      %3249 = vst.msk [vmem:[#allocation2 + $0xc8] sm:$0xff] %vm1085, %v3217
      %3250 = vst.msk [vmem:[#allocation2 + $0xd0] sm:$0xff] %vm1085, %v3218
      %3251 = vst.msk [vmem:[#allocation2 + $0xd8] sm:$0xff] %vm1085, %v3219
      %3252 = vst.msk [vmem:[#allocation2 + $0xe0] sm:$0xff] %vm1085, %v3220
      %3253 = vst.msk [vmem:[#allocation2 + $0xe8] sm:$0xff] %vm1085, %v3221
      %3254 = vst.msk [vmem:[#allocation2 + $0xf0] sm:$0xff] %vm1085, %v3222
      %3255 = vst.msk [vmem:[#allocation2 + $0xf8] sm:$0xff] %vm1085, %v3223
      %s3256 = scalar_lea.vmem %s3, 28
      %v3257 = vld [vmem:[%s3256] sm:$0xf]
      %v3258 = vsel %vm759, %v412, 0
      %v3260 = vsel %vm759, %v413, 0
      %v3263 = vsel %vm856, %v3257, 0
      %3265 = vmatprep.subr.mxu0 0.0
      %3266 = vmatpush1.msra.mxu0 0.0
      %3267 = vmatprep.subr.mxu0 0.0
      %3268 = vmatpush1.msra.mxu0 0.0
      %3269 = vmatprep.subr.mxu0 0.0
      %3270 = vmatpush1.msra.mxu0 0.0
      %3271 = vmatprep.subr.mxu0 0.0
      %3272 = vmatpush1.msra.mxu0 0.0
      %3273 = vmatprep.subr.mxu0 0.0
      %3274 = vmatpush1.msra.mxu0 0.0
      %3275 = vmatprep.subr.mxu0 0.0
      %3276 = vmatpush1.msra.mxu0 0.0
      %3277 = vmatprep.subr.mxu0 0.0
      %3278 = vmatpush1.msra.mxu0 0.0
      %3279 = vmatprep.subr.mxu0 0.0
      %3280 = vmatpush1.msra.mxu0 0.0
      %3281 = vmatprep.subr.mxu0 0.0
      %3282 = vmatpush1.msra.mxu0 0.0
      %3283 = vmatprep.subr.mxu0 0.0
      %3284 = vmatpush1.msra.mxu0 0.0
      %3285 = vmatprep.subr.mxu0 0.0
      %3286 = vmatpush1.msra.mxu0 0.0
      %3287 = vmatprep.subr.mxu0 0.0
      %3288 = vmatpush1.msra.mxu0 0.0
      %3289 = vmatprep.subr.mxu0 0.0
      %3290 = vmatpush1.msra.mxu0 0.0
      %3291 = vmatprep.subr.mxu0 0.0
      %3292 = vmatpush1.msra.mxu0 0.0
      %3293 = vmatprep.subr.mxu0 0.0
      %3294 = vmatpush1.msra.mxu0 0.0
      %3295 = vmatprep.subr.mxu0 0.0
      %3296 = vmatpush1.msra.mxu0 %v3263
      %3297 = vmatprep.subr.mxu0 0.0
      %3298 = vmatpush2.msra.mxu0 0.0
      %3299 = vmatprep.subr.mxu0 0.0
      %3300 = vmatpush2.msra.mxu0 0.0
      %3301 = vmatprep.subr.mxu0 0.0
      %3302 = vmatpush2.msra.mxu0 0.0
      %3303 = vmatprep.subr.mxu0 0.0
      %3304 = vmatpush2.msra.mxu0 0.0
      %3305 = vmatprep.subr.mxu0 0.0
      %3306 = vmatpush2.msra.mxu0 0.0
      %3307 = vmatprep.subr.mxu0 0.0
      %3308 = vmatpush2.msra.mxu0 0.0
      %3309 = vmatprep.subr.mxu0 0.0
      %3310 = vmatpush2.msra.mxu0 0.0
      %3311 = vmatprep.subr.mxu0 0.0
      %3312 = vmatpush2.msra.mxu0 0.0
      %3313 = vmatprep.subr.mxu0 0.0
      %3314 = vmatpush2.msra.mxu0 0.0
      %3315 = vmatprep.subr.mxu0 0.0
      %3316 = vmatpush2.msra.mxu0 0.0
      %3317 = vmatprep.subr.mxu0 0.0
      %3318 = vmatpush2.msra.mxu0 0.0
      %3319 = vmatprep.subr.mxu0 0.0
      %3320 = vmatpush2.msra.mxu0 0.0
      %3321 = vmatprep.subr.mxu0 0.0
      %3322 = vmatpush2.msra.mxu0 0.0
      %3323 = vmatprep.subr.mxu0 0.0
      %3324 = vmatpush2.msra.mxu0 0.0
      %3325 = vmatprep.subr.mxu0 0.0
      %3326 = vmatpush2.msra.mxu0 0.0
      %3327 = vmatprep.subr.mxu0 0.0
      %3328 = vmatpush2.msra.mxu0 0.0
      %3329 = vmatprep.mubr.f32.mxu0 0.0
      %3330 = vmatmul.mubr.f32.gmra.mxu0 %v1128
      %v3331 = vpop.f32.mrf.mxu0
      %v3332 = vadd.f32 0.0, %v3331
      %v3333 = vpop.f32.mrf.mxu0
      %3334 = vmatprep.mubr.f32.mxu0 0.0
      %3335 = vmatmul.mubr.f32.gmra.mxu0 %v1130
      %v3336 = vpop.f32.mrf.mxu0
      %v3337 = vadd.f32 0.0, %v3336
      %v3338 = vpop.f32.mrf.mxu0
      %3339 = vmatprep.mubr.f32.mxu0 0.0
      %3340 = vmatmul.mubr.f32.gmra.mxu0 %v1132
      %v3341 = vpop.f32.mrf.mxu0
      %v3342 = vadd.f32 0.0, %v3341
      %v3343 = vpop.f32.mrf.mxu0
      %3344 = vmatprep.mubr.f32.mxu0 0.0
      %3345 = vmatmul.mubr.f32.gmra.mxu0 %v1134
      %v3346 = vpop.f32.mrf.mxu0
      %v3347 = vadd.f32 0.0, %v3346
      %v3348 = vpop.f32.mrf.mxu0
      %3349 = vmatprep.mubr.f32.mxu0 0.0
      %3350 = vmatmul.mubr.f32.gmra.mxu0 %v1136
      %v3351 = vpop.f32.mrf.mxu0
      %v3352 = vadd.f32 0.0, %v3351
      %v3353 = vpop.f32.mrf.mxu0
      %3354 = vmatprep.mubr.f32.mxu0 0.0
      %3355 = vmatmul.mubr.f32.gmra.mxu0 %v1138
      %v3356 = vpop.f32.mrf.mxu0
      %v3357 = vadd.f32 0.0, %v3356
      %v3358 = vpop.f32.mrf.mxu0
      %3359 = vmatprep.mubr.f32.mxu0 0.0
      %3360 = vmatmul.mubr.f32.gmra.mxu0 %v1140
      %v3361 = vpop.f32.mrf.mxu0
      %v3362 = vadd.f32 0.0, %v3361
      %v3363 = vpop.f32.mrf.mxu0
      %3364 = vmatprep.mubr.f32.mxu0 0.0
      %3365 = vmatmul.mubr.f32.gmra.mxu0 %v1142
      %v3366 = vpop.f32.mrf.mxu0
      %v3367 = vadd.f32 0.0, %v3366
      %v3368 = vpop.f32.mrf.mxu0
      %3369 = vmatprep.mubr.f32.mxu0 0.0
      %3370 = vmatmul.mubr.f32.gmra.mxu0 %v1144
      %v3371 = vpop.f32.mrf.mxu0
      %v3372 = vadd.f32 0.0, %v3371
      %v3373 = vpop.f32.mrf.mxu0
      %3374 = vmatprep.mubr.f32.mxu0 0.0
      %3375 = vmatmul.mubr.f32.gmra.mxu0 %v1146
      %v3376 = vpop.f32.mrf.mxu0
      %v3377 = vadd.f32 0.0, %v3376
      %v3378 = vpop.f32.mrf.mxu0
      %3379 = vmatprep.mubr.f32.mxu0 0.0
      %3380 = vmatmul.mubr.f32.gmra.mxu0 %v1148
      %v3381 = vpop.f32.mrf.mxu0
      %v3382 = vadd.f32 0.0, %v3381
      %v3383 = vpop.f32.mrf.mxu0
      %3384 = vmatprep.mubr.f32.mxu0 0.0
      %3385 = vmatmul.mubr.f32.gmra.mxu0 %v1150
      %v3386 = vpop.f32.mrf.mxu0
      %v3387 = vadd.f32 0.0, %v3386
      %v3388 = vpop.f32.mrf.mxu0
      %3389 = vmatprep.mubr.f32.mxu0 0.0
      %3390 = vmatmul.mubr.f32.gmra.mxu0 %v1152
      %v3391 = vpop.f32.mrf.mxu0
      %v3392 = vadd.f32 0.0, %v3391
      %v3393 = vpop.f32.mrf.mxu0
      %3394 = vmatprep.mubr.f32.mxu0 0.0
      %3395 = vmatmul.mubr.f32.gmra.mxu0 %v1154
      %v3396 = vpop.f32.mrf.mxu0
      %v3397 = vadd.f32 0.0, %v3396
      %v3398 = vpop.f32.mrf.mxu0
      %3399 = vmatprep.mubr.f32.mxu0 0.0
      %3400 = vmatmul.mubr.f32.gmra.mxu0 %v1156
      %v3401 = vpop.f32.mrf.mxu0
      %v3402 = vadd.f32 0.0, %v3401
      %v3403 = vpop.f32.mrf.mxu0
      %3404 = vmatprep.mubr.f32.mxu0 0.0
      %3405 = vmatmul.mubr.f32.gmra.mxu0 %v1158
      %v3406 = vpop.f32.mrf.mxu0
      %v3407 = vadd.f32 0.0, %v3406
      %v3408 = vpop.f32.mrf.mxu0
      %3409 = vmatprep.mubr.f32.mxu0 0.0
      %3410 = vmatmul.mubr.f32.gmra.mxu0 %v1160
      %v3411 = vpop.f32.mrf.mxu0
      %v3412 = vadd.f32 0.0, %v3411
      %v3413 = vpop.f32.mrf.mxu0
      %3414 = vmatprep.mubr.f32.mxu0 0.0
      %3415 = vmatmul.mubr.f32.gmra.mxu0 %v1162
      %v3416 = vpop.f32.mrf.mxu0
      %v3417 = vadd.f32 0.0, %v3416
      %v3418 = vpop.f32.mrf.mxu0
      %3419 = vmatprep.mubr.f32.mxu0 0.0
      %3420 = vmatmul.mubr.f32.gmra.mxu0 %v1164
      %v3421 = vpop.f32.mrf.mxu0
      %v3422 = vadd.f32 0.0, %v3421
      %v3423 = vpop.f32.mrf.mxu0
      %3424 = vmatprep.mubr.f32.mxu0 0.0
      %3425 = vmatmul.mubr.f32.gmra.mxu0 %v1166
      %v3426 = vpop.f32.mrf.mxu0
      %v3427 = vadd.f32 0.0, %v3426
      %v3428 = vpop.f32.mrf.mxu0
      %3429 = vmatprep.mubr.f32.mxu0 0.0
      %3430 = vmatmul.mubr.f32.gmra.mxu0 %v1168
      %v3431 = vpop.f32.mrf.mxu0
      %v3432 = vadd.f32 0.0, %v3431
      %v3433 = vpop.f32.mrf.mxu0
      %3434 = vmatprep.mubr.f32.mxu0 0.0
      %3435 = vmatmul.mubr.f32.gmra.mxu0 %v1170
      %v3436 = vpop.f32.mrf.mxu0
      %v3437 = vadd.f32 0.0, %v3436
      %v3438 = vpop.f32.mrf.mxu0
      %3439 = vmatprep.mubr.f32.mxu0 0.0
      %3440 = vmatmul.mubr.f32.gmra.mxu0 %v1172
      %v3441 = vpop.f32.mrf.mxu0
      %v3442 = vadd.f32 0.0, %v3441
      %v3443 = vpop.f32.mrf.mxu0
      %3444 = vmatprep.mubr.f32.mxu0 0.0
      %3445 = vmatmul.mubr.f32.gmra.mxu0 %v1174
      %v3446 = vpop.f32.mrf.mxu0
      %v3447 = vadd.f32 0.0, %v3446
      %v3448 = vpop.f32.mrf.mxu0
      %3449 = vmatprep.mubr.f32.mxu0 0.0
      %3450 = vmatmul.mubr.f32.gmra.mxu0 %v1176
      %v3451 = vpop.f32.mrf.mxu0
      %v3452 = vadd.f32 0.0, %v3451
      %v3453 = vpop.f32.mrf.mxu0
      %3454 = vmatprep.mubr.f32.mxu0 0.0
      %3455 = vmatmul.mubr.f32.gmra.mxu0 %v1178
      %v3456 = vpop.f32.mrf.mxu0
      %v3457 = vadd.f32 0.0, %v3456
      %v3458 = vpop.f32.mrf.mxu0
      %3459 = vmatprep.mubr.f32.mxu0 0.0
      %3460 = vmatmul.mubr.f32.gmra.mxu0 %v1180
      %v3461 = vpop.f32.mrf.mxu0
      %v3462 = vadd.f32 0.0, %v3461
      %v3463 = vpop.f32.mrf.mxu0
      %3464 = vmatprep.mubr.f32.mxu0 0.0
      %3465 = vmatmul.mubr.f32.gmra.mxu0 %v1182
      %v3466 = vpop.f32.mrf.mxu0
      %v3467 = vadd.f32 0.0, %v3466
      %v3468 = vpop.f32.mrf.mxu0
      %3469 = vmatprep.mubr.f32.mxu0 0.0
      %3470 = vmatmul.mubr.f32.gmra.mxu0 %v2264
      %v3471 = vpop.f32.mrf.mxu0
      %v3472 = vadd.f32 0.0, %v3471
      %v3473 = vpop.f32.mrf.mxu0
      %3474 = vmatprep.mubr.f32.mxu0 0.0
      %3475 = vmatmul.mubr.f32.gmra.mxu0 %v2266
      %v3476 = vpop.f32.mrf.mxu0
      %v3477 = vadd.f32 0.0, %v3476
      %v3478 = vpop.f32.mrf.mxu0
      %3479 = vmatprep.mubr.f32.mxu0 0.0
      %3480 = vmatmul.mubr.f32.gmra.mxu0 %v3258
      %v3481 = vpop.f32.mrf.mxu0
      %v3482 = vadd.f32 0.0, %v3481
      %v3483 = vpop.f32.mrf.mxu0
      %3484 = vmatprep.mubr.f32.mxu0 0.0
      %3485 = vmatmul.mubr.f32.gmra.mxu0 %v3260
      %v3486 = vpop.f32.mrf.mxu0
      %v3487 = vadd.f32 0.0, %v3486
      %v3488 = vpop.f32.mrf.mxu0
      %3489 = vdwg.mxu0
      %v3490 = vld [vmem:[#allocation2] sm:$0xff]
      %v3491 = vld [vmem:[#allocation2 + $0x8] sm:$0xff]
      %v3492 = vld [vmem:[#allocation2 + $0x10] sm:$0xff]
      %v3493 = vld [vmem:[#allocation2 + $0x18] sm:$0xff]
      %v3494 = vld [vmem:[#allocation2 + $0x20] sm:$0xff]
      %v3495 = vld [vmem:[#allocation2 + $0x28] sm:$0xff]
      %v3496 = vld [vmem:[#allocation2 + $0x30] sm:$0xff]
      %v3497 = vld [vmem:[#allocation2 + $0x38] sm:$0xff]
      %v3498 = vld [vmem:[#allocation2 + $0x40] sm:$0xff]
      %v3499 = vld [vmem:[#allocation2 + $0x48] sm:$0xff]
      %v3500 = vld [vmem:[#allocation2 + $0x50] sm:$0xff]
      %v3501 = vld [vmem:[#allocation2 + $0x58] sm:$0xff]
      %v3502 = vld [vmem:[#allocation2 + $0x60] sm:$0xff]
      %v3503 = vld [vmem:[#allocation2 + $0x68] sm:$0xff]
      %v3504 = vld [vmem:[#allocation2 + $0x70] sm:$0xff]
      %v3505 = vld [vmem:[#allocation2 + $0x78] sm:$0xff]
      %v3506 = vld [vmem:[#allocation2 + $0x80] sm:$0xff]
      %v3507 = vld [vmem:[#allocation2 + $0x88] sm:$0xff]
      %v3508 = vld [vmem:[#allocation2 + $0x90] sm:$0xff]
      %v3509 = vld [vmem:[#allocation2 + $0x98] sm:$0xff]
      %v3510 = vld [vmem:[#allocation2 + $0xa0] sm:$0xff]
      %v3511 = vld [vmem:[#allocation2 + $0xa8] sm:$0xff]
      %v3512 = vld [vmem:[#allocation2 + $0xb0] sm:$0xff]
      %v3513 = vld [vmem:[#allocation2 + $0xb8] sm:$0xff]
      %v3514 = vld [vmem:[#allocation2 + $0xc0] sm:$0xff]
      %v3515 = vld [vmem:[#allocation2 + $0xc8] sm:$0xff]
      %v3516 = vld [vmem:[#allocation2 + $0xd0] sm:$0xff]
      %v3517 = vld [vmem:[#allocation2 + $0xd8] sm:$0xff]
      %v3518 = vld [vmem:[#allocation2 + $0xe0] sm:$0xff]
      %v3519 = vld [vmem:[#allocation2 + $0xe8] sm:$0xff]
      %v3520 = vld [vmem:[#allocation2 + $0xf0] sm:$0xff]
      %v3521 = vld [vmem:[#allocation2 + $0xf8] sm:$0xff]
      %v3522 = vadd.f32 %v3490, %v3332
      %v3523 = vadd.f32 %v3491, %v3337
      %v3524 = vadd.f32 %v3492, %v3342
      %v3525 = vadd.f32 %v3493, %v3347
      %v3526 = vadd.f32 %v3494, %v3352
      %v3527 = vadd.f32 %v3495, %v3357
      %v3528 = vadd.f32 %v3496, %v3362
      %v3529 = vadd.f32 %v3497, %v3367
      %v3530 = vadd.f32 %v3498, %v3372
      %v3531 = vadd.f32 %v3499, %v3377
      %v3532 = vadd.f32 %v3500, %v3382
      %v3533 = vadd.f32 %v3501, %v3387
      %v3534 = vadd.f32 %v3502, %v3392
      %v3535 = vadd.f32 %v3503, %v3397
      %v3536 = vadd.f32 %v3504, %v3402
      %v3537 = vadd.f32 %v3505, %v3407
      %v3538 = vadd.f32 %v3506, %v3412
      %v3539 = vadd.f32 %v3507, %v3417
      %v3540 = vadd.f32 %v3508, %v3422
      %v3541 = vadd.f32 %v3509, %v3427
      %v3542 = vadd.f32 %v3510, %v3432
      %v3543 = vadd.f32 %v3511, %v3437
      %v3544 = vadd.f32 %v3512, %v3442
      %v3545 = vadd.f32 %v3513, %v3447
      %v3546 = vadd.f32 %v3514, %v3452
      %v3547 = vadd.f32 %v3515, %v3457
      %v3548 = vadd.f32 %v3516, %v3462
      %v3549 = vadd.f32 %v3517, %v3467
      %v3550 = vadd.f32 %v3518, %v3472
      %v3551 = vadd.f32 %v3519, %v3477
      %v3552 = vadd.f32 %v3520, %v3482
      %v3553 = vadd.f32 %v3521, %v3487
      %3554 = vst.msk [vmem:[#allocation2] sm:$0xff] %vm1085, %v3522
      %3555 = vst.msk [vmem:[#allocation2 + $0x8] sm:$0xff] %vm1085, %v3523
      %3556 = vst.msk [vmem:[#allocation2 + $0x10] sm:$0xff] %vm1085, %v3524
      %3557 = vst.msk [vmem:[#allocation2 + $0x18] sm:$0xff] %vm1085, %v3525
      %3558 = vst.msk [vmem:[#allocation2 + $0x20] sm:$0xff] %vm1085, %v3526
      %3559 = vst.msk [vmem:[#allocation2 + $0x28] sm:$0xff] %vm1085, %v3527
      %3560 = vst.msk [vmem:[#allocation2 + $0x30] sm:$0xff] %vm1085, %v3528
      %3561 = vst.msk [vmem:[#allocation2 + $0x38] sm:$0xff] %vm1085, %v3529
      %3562 = vst.msk [vmem:[#allocation2 + $0x40] sm:$0xff] %vm1085, %v3530
      %3563 = vst.msk [vmem:[#allocation2 + $0x48] sm:$0xff] %vm1085, %v3531
      %3564 = vst.msk [vmem:[#allocation2 + $0x50] sm:$0xff] %vm1085, %v3532
      %3565 = vst.msk [vmem:[#allocation2 + $0x58] sm:$0xff] %vm1085, %v3533
      %3566 = vst.msk [vmem:[#allocation2 + $0x60] sm:$0xff] %vm1085, %v3534
      %3567 = vst.msk [vmem:[#allocation2 + $0x68] sm:$0xff] %vm1085, %v3535
      %3568 = vst.msk [vmem:[#allocation2 + $0x70] sm:$0xff] %vm1085, %v3536
      %3569 = vst.msk [vmem:[#allocation2 + $0x78] sm:$0xff] %vm1085, %v3537
      %3570 = vst.msk [vmem:[#allocation2 + $0x80] sm:$0xff] %vm1085, %v3538
      %3571 = vst.msk [vmem:[#allocation2 + $0x88] sm:$0xff] %vm1085, %v3539
      %3572 = vst.msk [vmem:[#allocation2 + $0x90] sm:$0xff] %vm1085, %v3540
      %3573 = vst.msk [vmem:[#allocation2 + $0x98] sm:$0xff] %vm1085, %v3541
      %3574 = vst.msk [vmem:[#allocation2 + $0xa0] sm:$0xff] %vm1085, %v3542
      %3575 = vst.msk [vmem:[#allocation2 + $0xa8] sm:$0xff] %vm1085, %v3543
      %3576 = vst.msk [vmem:[#allocation2 + $0xb0] sm:$0xff] %vm1085, %v3544
      %3577 = vst.msk [vmem:[#allocation2 + $0xb8] sm:$0xff] %vm1085, %v3545
      %3578 = vst.msk [vmem:[#allocation2 + $0xc0] sm:$0xff] %vm1085, %v3546
      %3579 = vst.msk [vmem:[#allocation2 + $0xc8] sm:$0xff] %vm1085, %v3547
      %3580 = vst.msk [vmem:[#allocation2 + $0xd0] sm:$0xff] %vm1085, %v3548
      %3581 = vst.msk [vmem:[#allocation2 + $0xd8] sm:$0xff] %vm1085, %v3549
      %3582 = vst.msk [vmem:[#allocation2 + $0xe0] sm:$0xff] %vm1085, %v3550
      %3583 = vst.msk [vmem:[#allocation2 + $0xe8] sm:$0xff] %vm1085, %v3551
      %3584 = vst.msk [vmem:[#allocation2 + $0xf0] sm:$0xff] %vm1085, %v3552
      %3585 = vst.msk [vmem:[#allocation2 + $0xf8] sm:$0xff] %vm1085, %v3553
      %s3586 = scalar_lea.vmem %s3, 32
      %v3587 = vld [vmem:[%s3586] sm:$0xf]
      %v3589 = vsel %vm759, %v756, 0
      %v3592 = vsel %vm759, %v757, 0
      %v3595 = vsel %vm856, %v3587, 0
      %3597 = vmatprep.subr.mxu0 0.0
      %3598 = vmatpush1.msra.mxu0 0.0
      %3599 = vmatprep.subr.mxu0 0.0
      %3600 = vmatpush1.msra.mxu0 0.0
      %3601 = vmatprep.subr.mxu0 0.0
      %3602 = vmatpush1.msra.mxu0 0.0
      %3603 = vmatprep.subr.mxu0 0.0
      %3604 = vmatpush1.msra.mxu0 0.0
      %3605 = vmatprep.subr.mxu0 0.0
      %3606 = vmatpush1.msra.mxu0 0.0
      %3607 = vmatprep.subr.mxu0 0.0
      %3608 = vmatpush1.msra.mxu0 0.0
      %3609 = vmatprep.subr.mxu0 0.0
      %3610 = vmatpush1.msra.mxu0 0.0
      %3611 = vmatprep.subr.mxu0 0.0
      %3612 = vmatpush1.msra.mxu0 0.0
      %3613 = vmatprep.subr.mxu0 0.0
      %3614 = vmatpush1.msra.mxu0 0.0
      %3615 = vmatprep.subr.mxu0 0.0
      %3616 = vmatpush1.msra.mxu0 0.0
      %3617 = vmatprep.subr.mxu0 0.0
      %3618 = vmatpush1.msra.mxu0 0.0
      %3619 = vmatprep.subr.mxu0 0.0
      %3620 = vmatpush1.msra.mxu0 0.0
      %3621 = vmatprep.subr.mxu0 0.0
      %3622 = vmatpush1.msra.mxu0 0.0
      %3623 = vmatprep.subr.mxu0 0.0
      %3624 = vmatpush1.msra.mxu0 0.0
      %3625 = vmatprep.subr.mxu0 0.0
      %3626 = vmatpush1.msra.mxu0 0.0
      %3627 = vmatprep.subr.mxu0 0.0
      %3628 = vmatpush1.msra.mxu0 %v3595
      %3629 = vmatprep.subr.mxu0 0.0
      %3630 = vmatpush2.msra.mxu0 0.0
      %3631 = vmatprep.subr.mxu0 0.0
      %3632 = vmatpush2.msra.mxu0 0.0
      %3633 = vmatprep.subr.mxu0 0.0
      %3634 = vmatpush2.msra.mxu0 0.0
      %3635 = vmatprep.subr.mxu0 0.0
      %3636 = vmatpush2.msra.mxu0 0.0
      %3637 = vmatprep.subr.mxu0 0.0
      %3638 = vmatpush2.msra.mxu0 0.0
      %3639 = vmatprep.subr.mxu0 0.0
      %3640 = vmatpush2.msra.mxu0 0.0
      %3641 = vmatprep.subr.mxu0 0.0
      %3642 = vmatpush2.msra.mxu0 0.0
      %3643 = vmatprep.subr.mxu0 0.0
      %3644 = vmatpush2.msra.mxu0 0.0
      %3645 = vmatprep.subr.mxu0 0.0
      %3646 = vmatpush2.msra.mxu0 0.0
      %3647 = vmatprep.subr.mxu0 0.0
      %3648 = vmatpush2.msra.mxu0 0.0
      %3649 = vmatprep.subr.mxu0 0.0
      %3650 = vmatpush2.msra.mxu0 0.0
      %3651 = vmatprep.subr.mxu0 0.0
      %3652 = vmatpush2.msra.mxu0 0.0
      %3653 = vmatprep.subr.mxu0 0.0
      %3654 = vmatpush2.msra.mxu0 0.0
      %3655 = vmatprep.subr.mxu0 0.0
      %3656 = vmatpush2.msra.mxu0 0.0
      %3657 = vmatprep.subr.mxu0 0.0
      %3658 = vmatpush2.msra.mxu0 0.0
      %3659 = vmatprep.subr.mxu0 0.0
      %3660 = vmatpush2.msra.mxu0 0.0
      %3661 = vmatprep.mubr.f32.mxu0 0.0
      %3662 = vmatmul.mubr.f32.gmra.mxu0 %v1523
      %v3663 = vpop.f32.mrf.mxu0
      %v3664 = vadd.f32 0.0, %v3663
      %v3665 = vpop.f32.mrf.mxu0
      %3666 = vmatprep.mubr.f32.mxu0 0.0
      %3667 = vmatmul.mubr.f32.gmra.mxu0 %v1526
      %v3668 = vpop.f32.mrf.mxu0
      %v3669 = vadd.f32 0.0, %v3668
      %v3670 = vpop.f32.mrf.mxu0
      %3671 = vmatprep.mubr.f32.mxu0 0.0
      %3672 = vmatmul.mubr.f32.gmra.mxu0 %v1529
      %v3673 = vpop.f32.mrf.mxu0
      %v3674 = vadd.f32 0.0, %v3673
      %v3675 = vpop.f32.mrf.mxu0
      %3676 = vmatprep.mubr.f32.mxu0 0.0
      %3677 = vmatmul.mubr.f32.gmra.mxu0 %v1532
      %v3678 = vpop.f32.mrf.mxu0
      %v3679 = vadd.f32 0.0, %v3678
      %v3680 = vpop.f32.mrf.mxu0
      %3681 = vmatprep.mubr.f32.mxu0 0.0
      %3682 = vmatmul.mubr.f32.gmra.mxu0 %v1535
      %v3683 = vpop.f32.mrf.mxu0
      %v3684 = vadd.f32 0.0, %v3683
      %v3685 = vpop.f32.mrf.mxu0
      %3686 = vmatprep.mubr.f32.mxu0 0.0
      %3687 = vmatmul.mubr.f32.gmra.mxu0 %v1538
      %v3688 = vpop.f32.mrf.mxu0
      %v3689 = vadd.f32 0.0, %v3688
      %v3690 = vpop.f32.mrf.mxu0
      %3691 = vmatprep.mubr.f32.mxu0 0.0
      %3692 = vmatmul.mubr.f32.gmra.mxu0 %v1541
      %v3693 = vpop.f32.mrf.mxu0
      %v3694 = vadd.f32 0.0, %v3693
      %v3695 = vpop.f32.mrf.mxu0
      %3696 = vmatprep.mubr.f32.mxu0 0.0
      %3697 = vmatmul.mubr.f32.gmra.mxu0 %v1544
      %v3698 = vpop.f32.mrf.mxu0
      %v3699 = vadd.f32 0.0, %v3698
      %v3700 = vpop.f32.mrf.mxu0
      %3701 = vmatprep.mubr.f32.mxu0 0.0
      %3702 = vmatmul.mubr.f32.gmra.mxu0 %v1547
      %v3703 = vpop.f32.mrf.mxu0
      %v3704 = vadd.f32 0.0, %v3703
      %v3705 = vpop.f32.mrf.mxu0
      %3706 = vmatprep.mubr.f32.mxu0 0.0
      %3707 = vmatmul.mubr.f32.gmra.mxu0 %v1550
      %v3708 = vpop.f32.mrf.mxu0
      %v3709 = vadd.f32 0.0, %v3708
      %v3710 = vpop.f32.mrf.mxu0
      %3711 = vmatprep.mubr.f32.mxu0 0.0
      %3712 = vmatmul.mubr.f32.gmra.mxu0 %v1553
      %v3713 = vpop.f32.mrf.mxu0
      %v3714 = vadd.f32 0.0, %v3713
      %v3715 = vpop.f32.mrf.mxu0
      %3716 = vmatprep.mubr.f32.mxu0 0.0
      %3717 = vmatmul.mubr.f32.gmra.mxu0 %v1556
      %v3718 = vpop.f32.mrf.mxu0
      %v3719 = vadd.f32 0.0, %v3718
      %v3720 = vpop.f32.mrf.mxu0
      %3721 = vmatprep.mubr.f32.mxu0 0.0
      %3722 = vmatmul.mubr.f32.gmra.mxu0 %v1559
      %v3723 = vpop.f32.mrf.mxu0
      %v3724 = vadd.f32 0.0, %v3723
      %v3725 = vpop.f32.mrf.mxu0
      %3726 = vmatprep.mubr.f32.mxu0 0.0
      %3727 = vmatmul.mubr.f32.gmra.mxu0 %v1562
      %v3728 = vpop.f32.mrf.mxu0
      %v3729 = vadd.f32 0.0, %v3728
      %v3730 = vpop.f32.mrf.mxu0
      %3731 = vmatprep.mubr.f32.mxu0 0.0
      %3732 = vmatmul.mubr.f32.gmra.mxu0 %v1565
      %v3733 = vpop.f32.mrf.mxu0
      %v3734 = vadd.f32 0.0, %v3733
      %v3735 = vpop.f32.mrf.mxu0
      %3736 = vmatprep.mubr.f32.mxu0 0.0
      %3737 = vmatmul.mubr.f32.gmra.mxu0 %v1568
      %v3738 = vpop.f32.mrf.mxu0
      %v3739 = vadd.f32 0.0, %v3738
      %v3740 = vpop.f32.mrf.mxu0
      %3741 = vmatprep.mubr.f32.mxu0 0.0
      %3742 = vmatmul.mubr.f32.gmra.mxu0 %v1571
      %v3743 = vpop.f32.mrf.mxu0
      %v3744 = vadd.f32 0.0, %v3743
      %v3745 = vpop.f32.mrf.mxu0
      %3746 = vmatprep.mubr.f32.mxu0 0.0
      %3747 = vmatmul.mubr.f32.gmra.mxu0 %v1574
      %v3748 = vpop.f32.mrf.mxu0
      %v3749 = vadd.f32 0.0, %v3748
      %v3750 = vpop.f32.mrf.mxu0
      %3751 = vmatprep.mubr.f32.mxu0 0.0
      %3752 = vmatmul.mubr.f32.gmra.mxu0 %v1577
      %v3753 = vpop.f32.mrf.mxu0
      %v3754 = vadd.f32 0.0, %v3753
      %v3755 = vpop.f32.mrf.mxu0
      %3756 = vmatprep.mubr.f32.mxu0 0.0
      %3757 = vmatmul.mubr.f32.gmra.mxu0 %v1580
      %v3758 = vpop.f32.mrf.mxu0
      %v3759 = vadd.f32 0.0, %v3758
      %v3760 = vpop.f32.mrf.mxu0
      %3761 = vmatprep.mubr.f32.mxu0 0.0
      %3762 = vmatmul.mubr.f32.gmra.mxu0 %v1583
      %v3763 = vpop.f32.mrf.mxu0
      %v3764 = vadd.f32 0.0, %v3763
      %v3765 = vpop.f32.mrf.mxu0
      %3766 = vmatprep.mubr.f32.mxu0 0.0
      %3767 = vmatmul.mubr.f32.gmra.mxu0 %v1586
      %v3768 = vpop.f32.mrf.mxu0
      %v3769 = vadd.f32 0.0, %v3768
      %v3770 = vpop.f32.mrf.mxu0
      %3771 = vmatprep.mubr.f32.mxu0 0.0
      %3772 = vmatmul.mubr.f32.gmra.mxu0 %v1589
      %v3773 = vpop.f32.mrf.mxu0
      %v3774 = vadd.f32 0.0, %v3773
      %v3775 = vpop.f32.mrf.mxu0
      %3776 = vmatprep.mubr.f32.mxu0 0.0
      %3777 = vmatmul.mubr.f32.gmra.mxu0 %v1592
      %v3778 = vpop.f32.mrf.mxu0
      %v3779 = vadd.f32 0.0, %v3778
      %v3780 = vpop.f32.mrf.mxu0
      %3781 = vmatprep.mubr.f32.mxu0 0.0
      %3782 = vmatmul.mubr.f32.gmra.mxu0 %v1595
      %v3783 = vpop.f32.mrf.mxu0
      %v3784 = vadd.f32 0.0, %v3783
      %v3785 = vpop.f32.mrf.mxu0
      %3786 = vmatprep.mubr.f32.mxu0 0.0
      %3787 = vmatmul.mubr.f32.gmra.mxu0 %v1598
      %v3788 = vpop.f32.mrf.mxu0
      %v3789 = vadd.f32 0.0, %v3788
      %v3790 = vpop.f32.mrf.mxu0
      %3791 = vmatprep.mubr.f32.mxu0 0.0
      %3792 = vmatmul.mubr.f32.gmra.mxu0 %v1601
      %v3793 = vpop.f32.mrf.mxu0
      %v3794 = vadd.f32 0.0, %v3793
      %v3795 = vpop.f32.mrf.mxu0
      %3796 = vmatprep.mubr.f32.mxu0 0.0
      %3797 = vmatmul.mubr.f32.gmra.mxu0 %v1604
      %v3798 = vpop.f32.mrf.mxu0
      %v3799 = vadd.f32 0.0, %v3798
      %v3800 = vpop.f32.mrf.mxu0
      %3801 = vmatprep.mubr.f32.mxu0 0.0
      %3802 = vmatmul.mubr.f32.gmra.mxu0 %v2595
      %v3803 = vpop.f32.mrf.mxu0
      %v3804 = vadd.f32 0.0, %v3803
      %v3805 = vpop.f32.mrf.mxu0
      %3806 = vmatprep.mubr.f32.mxu0 0.0
      %3807 = vmatmul.mubr.f32.gmra.mxu0 %v2598
      %v3808 = vpop.f32.mrf.mxu0
      %v3809 = vadd.f32 0.0, %v3808
      %v3810 = vpop.f32.mrf.mxu0
      %3811 = vmatprep.mubr.f32.mxu0 0.0
      %3812 = vmatmul.mubr.f32.gmra.mxu0 %v3589
      %v3813 = vpop.f32.mrf.mxu0
      %v3814 = vadd.f32 0.0, %v3813
      %v3815 = vpop.f32.mrf.mxu0
      %3816 = vmatprep.mubr.f32.mxu0 0.0
      %3817 = vmatmul.mubr.f32.gmra.mxu0 %v3592
      %v3818 = vpop.f32.mrf.mxu0
      %v3819 = vadd.f32 0.0, %v3818
      %v3820 = vpop.f32.mrf.mxu0
      %3821 = vdwg.mxu0
      %v3822 = vld [vmem:[#allocation2] sm:$0xff]
      %v3823 = vld [vmem:[#allocation2 + $0x8] sm:$0xff]
      %v3824 = vld [vmem:[#allocation2 + $0x10] sm:$0xff]
      %v3825 = vld [vmem:[#allocation2 + $0x18] sm:$0xff]
      %v3826 = vld [vmem:[#allocation2 + $0x20] sm:$0xff]
      %v3827 = vld [vmem:[#allocation2 + $0x28] sm:$0xff]
      %v3828 = vld [vmem:[#allocation2 + $0x30] sm:$0xff]
      %v3829 = vld [vmem:[#allocation2 + $0x38] sm:$0xff]
      %v3830 = vld [vmem:[#allocation2 + $0x40] sm:$0xff]
      %v3831 = vld [vmem:[#allocation2 + $0x48] sm:$0xff]
      %v3832 = vld [vmem:[#allocation2 + $0x50] sm:$0xff]
      %v3833 = vld [vmem:[#allocation2 + $0x58] sm:$0xff]
      %v3834 = vld [vmem:[#allocation2 + $0x60] sm:$0xff]
      %v3835 = vld [vmem:[#allocation2 + $0x68] sm:$0xff]
      %v3836 = vld [vmem:[#allocation2 + $0x70] sm:$0xff]
      %v3837 = vld [vmem:[#allocation2 + $0x78] sm:$0xff]
      %v3838 = vld [vmem:[#allocation2 + $0x80] sm:$0xff]
      %v3839 = vld [vmem:[#allocation2 + $0x88] sm:$0xff]
      %v3840 = vld [vmem:[#allocation2 + $0x90] sm:$0xff]
      %v3841 = vld [vmem:[#allocation2 + $0x98] sm:$0xff]
      %v3842 = vld [vmem:[#allocation2 + $0xa0] sm:$0xff]
      %v3843 = vld [vmem:[#allocation2 + $0xa8] sm:$0xff]
      %v3844 = vld [vmem:[#allocation2 + $0xb0] sm:$0xff]
      %v3845 = vld [vmem:[#allocation2 + $0xb8] sm:$0xff]
      %v3846 = vld [vmem:[#allocation2 + $0xc0] sm:$0xff]
      %v3847 = vld [vmem:[#allocation2 + $0xc8] sm:$0xff]
      %v3848 = vld [vmem:[#allocation2 + $0xd0] sm:$0xff]
      %v3849 = vld [vmem:[#allocation2 + $0xd8] sm:$0xff]
      %v3850 = vld [vmem:[#allocation2 + $0xe0] sm:$0xff]
      %v3851 = vld [vmem:[#allocation2 + $0xe8] sm:$0xff]
      %v3852 = vld [vmem:[#allocation2 + $0xf0] sm:$0xff]
      %v3853 = vld [vmem:[#allocation2 + $0xf8] sm:$0xff]
      %v3854 = vadd.f32 %v3822, %v3664
      %v3855 = vadd.f32 %v3823, %v3669
      %v3856 = vadd.f32 %v3824, %v3674
      %v3857 = vadd.f32 %v3825, %v3679
      %v3858 = vadd.f32 %v3826, %v3684
      %v3859 = vadd.f32 %v3827, %v3689
      %v3860 = vadd.f32 %v3828, %v3694
      %v3861 = vadd.f32 %v3829, %v3699
      %v3862 = vadd.f32 %v3830, %v3704
      %v3863 = vadd.f32 %v3831, %v3709
      %v3864 = vadd.f32 %v3832, %v3714
      %v3865 = vadd.f32 %v3833, %v3719
      %v3866 = vadd.f32 %v3834, %v3724
      %v3867 = vadd.f32 %v3835, %v3729
      %v3868 = vadd.f32 %v3836, %v3734
      %v3869 = vadd.f32 %v3837, %v3739
      %v3870 = vadd.f32 %v3838, %v3744
      %v3871 = vadd.f32 %v3839, %v3749
      %v3872 = vadd.f32 %v3840, %v3754
      %v3873 = vadd.f32 %v3841, %v3759
      %v3874 = vadd.f32 %v3842, %v3764
      %v3875 = vadd.f32 %v3843, %v3769
      %v3876 = vadd.f32 %v3844, %v3774
      %v3877 = vadd.f32 %v3845, %v3779
      %v3878 = vadd.f32 %v3846, %v3784
      %v3879 = vadd.f32 %v3847, %v3789
      %v3880 = vadd.f32 %v3848, %v3794
      %v3881 = vadd.f32 %v3849, %v3799
      %v3882 = vadd.f32 %v3850, %v3804
      %v3883 = vadd.f32 %v3851, %v3809
      %v3884 = vadd.f32 %v3852, %v3814
      %v3885 = vadd.f32 %v3853, %v3819
      %3886 = vst.msk [vmem:[#allocation2] sm:$0xff] %vm1085, %v3854
      %3887 = vst.msk [vmem:[#allocation2 + $0x8] sm:$0xff] %vm1085, %v3855
      %3888 = vst.msk [vmem:[#allocation2 + $0x10] sm:$0xff] %vm1085, %v3856
      %3889 = vst.msk [vmem:[#allocation2 + $0x18] sm:$0xff] %vm1085, %v3857
      %3890 = vst.msk [vmem:[#allocation2 + $0x20] sm:$0xff] %vm1085, %v3858
      %3891 = vst.msk [vmem:[#allocation2 + $0x28] sm:$0xff] %vm1085, %v3859
      %3892 = vst.msk [vmem:[#allocation2 + $0x30] sm:$0xff] %vm1085, %v3860
      %3893 = vst.msk [vmem:[#allocation2 + $0x38] sm:$0xff] %vm1085, %v3861
      %3894 = vst.msk [vmem:[#allocation2 + $0x40] sm:$0xff] %vm1085, %v3862
      %3895 = vst.msk [vmem:[#allocation2 + $0x48] sm:$0xff] %vm1085, %v3863
      %3896 = vst.msk [vmem:[#allocation2 + $0x50] sm:$0xff] %vm1085, %v3864
      %3897 = vst.msk [vmem:[#allocation2 + $0x58] sm:$0xff] %vm1085, %v3865
      %3898 = vst.msk [vmem:[#allocation2 + $0x60] sm:$0xff] %vm1085, %v3866
      %3899 = vst.msk [vmem:[#allocation2 + $0x68] sm:$0xff] %vm1085, %v3867
      %3900 = vst.msk [vmem:[#allocation2 + $0x70] sm:$0xff] %vm1085, %v3868
      %3901 = vst.msk [vmem:[#allocation2 + $0x78] sm:$0xff] %vm1085, %v3869
      %3902 = vst.msk [vmem:[#allocation2 + $0x80] sm:$0xff] %vm1085, %v3870
      %3903 = vst.msk [vmem:[#allocation2 + $0x88] sm:$0xff] %vm1085, %v3871
      %3904 = vst.msk [vmem:[#allocation2 + $0x90] sm:$0xff] %vm1085, %v3872
      %3905 = vst.msk [vmem:[#allocation2 + $0x98] sm:$0xff] %vm1085, %v3873
      %3906 = vst.msk [vmem:[#allocation2 + $0xa0] sm:$0xff] %vm1085, %v3874
      %3907 = vst.msk [vmem:[#allocation2 + $0xa8] sm:$0xff] %vm1085, %v3875
      %3908 = vst.msk [vmem:[#allocation2 + $0xb0] sm:$0xff] %vm1085, %v3876
      %3909 = vst.msk [vmem:[#allocation2 + $0xb8] sm:$0xff] %vm1085, %v3877
      %3910 = vst.msk [vmem:[#allocation2 + $0xc0] sm:$0xff] %vm1085, %v3878
      %3911 = vst.msk [vmem:[#allocation2 + $0xc8] sm:$0xff] %vm1085, %v3879
      %3912 = vst.msk [vmem:[#allocation2 + $0xd0] sm:$0xff] %vm1085, %v3880
      %3913 = vst.msk [vmem:[#allocation2 + $0xd8] sm:$0xff] %vm1085, %v3881
      %3914 = vst.msk [vmem:[#allocation2 + $0xe0] sm:$0xff] %vm1085, %v3882
      %3915 = vst.msk [vmem:[#allocation2 + $0xe8] sm:$0xff] %vm1085, %v3883
      %3916 = vst.msk [vmem:[#allocation2 + $0xf0] sm:$0xff] %vm1085, %v3884
      %3917 = vst.msk [vmem:[#allocation2 + $0xf8] sm:$0xff] %vm1085, %v3885
      %v3918 = vld [vmem:[#allocation2] sm:$0xff]
      %v3919 = vld [vmem:[#allocation2 + $0x8] sm:$0xff]
      %v3920 = vld [vmem:[#allocation2 + $0x10] sm:$0xff]
      %v3921 = vld [vmem:[#allocation2 + $0x18] sm:$0xff]
      %v3922 = vld [vmem:[#allocation2 + $0x20] sm:$0xff]
      %v3923 = vld [vmem:[#allocation2 + $0x28] sm:$0xff]
      %v3924 = vld [vmem:[#allocation2 + $0x30] sm:$0xff]
      %v3925 = vld [vmem:[#allocation2 + $0x38] sm:$0xff]
      %v3926 = vld [vmem:[#allocation2 + $0x40] sm:$0xff]
      %v3927 = vld [vmem:[#allocation2 + $0x48] sm:$0xff]
      %v3928 = vld [vmem:[#allocation2 + $0x50] sm:$0xff]
      %v3929 = vld [vmem:[#allocation2 + $0x58] sm:$0xff]
      %v3930 = vld [vmem:[#allocation2 + $0x60] sm:$0xff]
      %v3931 = vld [vmem:[#allocation2 + $0x68] sm:$0xff]
      %v3932 = vld [vmem:[#allocation2 + $0x70] sm:$0xff]
      %v3933 = vld [vmem:[#allocation2 + $0x78] sm:$0xff]
      %v3934 = vld [vmem:[#allocation2 + $0x80] sm:$0xff]
      %v3935 = vld [vmem:[#allocation2 + $0x88] sm:$0xff]
      %v3936 = vld [vmem:[#allocation2 + $0x90] sm:$0xff]
      %v3937 = vld [vmem:[#allocation2 + $0x98] sm:$0xff]
      %v3938 = vld [vmem:[#allocation2 + $0xa0] sm:$0xff]
      %v3939 = vld [vmem:[#allocation2 + $0xa8] sm:$0xff]
      %v3940 = vld [vmem:[#allocation2 + $0xb0] sm:$0xff]
      %v3941 = vld [vmem:[#allocation2 + $0xb8] sm:$0xff]
      %v3942 = vld [vmem:[#allocation2 + $0xc0] sm:$0xff]
      %v3943 = vld [vmem:[#allocation2 + $0xc8] sm:$0xff]
      %v3944 = vld [vmem:[#allocation2 + $0xd0] sm:$0xff]
      %v3945 = vld [vmem:[#allocation2 + $0xd8] sm:$0xff]
      %v3946 = vld [vmem:[#allocation2 + $0xe0] sm:$0xff]
      %v3947 = vld [vmem:[#allocation2 + $0xe8] sm:$0xff]
      %v3948 = vld [vmem:[#allocation2 + $0xf0] sm:$0xff]
      %v3949 = vld [vmem:[#allocation2 + $0xf8] sm:$0xff]
      %3950 = vst.msk [vmem:[%s364] sm:$0xff] %vm1085, %v3918
      %3951 = vst.msk [vmem:[%s364 + $0x8] sm:$0xff] %vm1085, %v3919
      %3952 = vst.msk [vmem:[%s364 + $0x10] sm:$0xff] %vm1085, %v3920
      %3953 = vst.msk [vmem:[%s364 + $0x18] sm:$0xff] %vm1085, %v3921
      %3954 = vst.msk [vmem:[%s364 + $0x20] sm:$0xff] %vm1085, %v3922
      %3955 = vst.msk [vmem:[%s364 + $0x28] sm:$0xff] %vm1085, %v3923
      %3956 = vst.msk [vmem:[%s364 + $0x30] sm:$0xff] %vm1085, %v3924
      %3957 = vst.msk [vmem:[%s364 + $0x38] sm:$0xff] %vm1085, %v3925
      %3958 = vst.msk [vmem:[%s364 + $0x40] sm:$0xff] %vm1085, %v3926
      %3959 = vst.msk [vmem:[%s364 + $0x48] sm:$0xff] %vm1085, %v3927
      %3960 = vst.msk [vmem:[%s364 + $0x50] sm:$0xff] %vm1085, %v3928
      %3961 = vst.msk [vmem:[%s364 + $0x58] sm:$0xff] %vm1085, %v3929
      %3962 = vst.msk [vmem:[%s364 + $0x60] sm:$0xff] %vm1085, %v3930
      %3963 = vst.msk [vmem:[%s364 + $0x68] sm:$0xff] %vm1085, %v3931
      %3964 = vst.msk [vmem:[%s364 + $0x70] sm:$0xff] %vm1085, %v3932
      %3965 = vst.msk [vmem:[%s364 + $0x78] sm:$0xff] %vm1085, %v3933
      %3966 = vst.msk [vmem:[%s364 + $0x80] sm:$0xff] %vm1085, %v3934
      %3967 = vst.msk [vmem:[%s364 + $0x88] sm:$0xff] %vm1085, %v3935
      %3968 = vst.msk [vmem:[%s364 + $0x90] sm:$0xff] %vm1085, %v3936
      %3969 = vst.msk [vmem:[%s364 + $0x98] sm:$0xff] %vm1085, %v3937
      %3970 = vst.msk [vmem:[%s364 + $0xa0] sm:$0xff] %vm1085, %v3938
      %3971 = vst.msk [vmem:[%s364 + $0xa8] sm:$0xff] %vm1085, %v3939
      %3972 = vst.msk [vmem:[%s364 + $0xb0] sm:$0xff] %vm1085, %v3940
      %3973 = vst.msk [vmem:[%s364 + $0xb8] sm:$0xff] %vm1085, %v3941
      %3974 = vst.msk [vmem:[%s364 + $0xc0] sm:$0xff] %vm1085, %v3942
      %3975 = vst.msk [vmem:[%s364 + $0xc8] sm:$0xff] %vm1085, %v3943
      %3976 = vst.msk [vmem:[%s364 + $0xd0] sm:$0xff] %vm1085, %v3944
      %3977 = vst.msk [vmem:[%s364 + $0xd8] sm:$0xff] %vm1085, %v3945
      %3978 = vst.msk [vmem:[%s364 + $0xe0] sm:$0xff] %vm1085, %v3946
      %3979 = vst.msk [vmem:[%s364 + $0xe8] sm:$0xff] %vm1085, %v3947
      %3980 = vst.msk [vmem:[%s364 + $0xf0] sm:$0xff] %vm1085, %v3948
      %3981 = vst.msk [vmem:[%s364 + $0xf8] sm:$0xff] %vm1085, %v3949
      %s3982 = smul.u32 16, %s20
      %p3983 = scmp.lt.s32.totalorder %s19, 1
      %s3984 = scalar_select %p3983, %s19, 1
      %p3985 = scmp.lt.s32.totalorder %s3982, 15
      %s3986 = scalar_select %p3985, %s3982, 15
      %s3987 = smul.addr %s3986, 2
      %s3988 = smul.addr %s3984, 32
      %s3989 = sadd.s32 %s3987, %s3988
      %s3990 = smul.addr %s3989, 8
      %s3991 = scalar_lea.vmem %s4, %s3990
      // Predicated region
      $region37: #{tpu_custom_call.1} parent=35 // pred_check
        %p3992 = pneg %p168
      $region38: #{tpu_custom_call.1} parent=35 // pred_check_branch
        %3994 = sbr.rel (%p3992) target = $region40
      $region39: #{tpu_custom_call.1} parent=35 // pred_region
        %s3995 = smul.u32 16, %s20
      $region40: #{tpu_custom_call.1} parent=35 // pred_fallthru
        _
    $region36: #{tpu_custom_call.1} parent=5 // pred_fallthru
      _
    %p3996 = scmp.le.s32.totalorder 2, %s10
    // Predicated region
    $region41: #{tpu_custom_call.1} parent=5 // pred_check
      %p3997 = pneg %p3996
    $region42: #{tpu_custom_call.1} parent=5 // pred_check_branch
      %3999 = sbr.rel (%p3997) target = $region44
    $region43: #{tpu_custom_call.1} parent=5 // pred_region
      %s4000 = ssub.s32 %s10, 2
      // Predicated region
      $region45: #{tpu_custom_call.1} parent=43 // pred_check
        %p4001 = pneg %p174
      $region46: #{tpu_custom_call.1} parent=43 // pred_check_branch
        %4003 = sbr.rel (%p4001) target = $region48
      $region47: #{tpu_custom_call.1} parent=43 // pred_region
        %s4004 = smul.u32 16, %s22
        %p4005 = scmp.lt.s32.totalorder %s21, 1
        %s4006 = scalar_select %p4005, %s21, 1
        %p4007 = scmp.lt.s32.totalorder %s4004, 15
        %s4008 = scalar_select %p4007, %s4004, 15
        %s4009 = smul.addr %s4008, 2
        %s4010 = smul.addr %s4006, 32
        %s4011 = sadd.s32 %s4009, %s4010
        %s4012 = smul.addr %s4011, 8
        %s4013 = scalar_lea.vmem %s4, %s4012
      $region48: #{tpu_custom_call.1} parent=43 // pred_fallthru
        _
    $region44: #{tpu_custom_call.1} parent=5 // pred_fallthru
      _
  $region6: #{tpu_custom_call.1} parent=0 // loop_footer
    %s14 = sadd.s32 1, %s10
  $region7: #{tpu_custom_call.1} parent=0 // loop_footer_branch
    %9 = sbr.rel target = $region3
  $region8: #{tpu_custom_call.1} parent=0 // loop_exit
    _

</llo_original>
